<compile_context>
chip_gen: v7x
topology: tpu7x:2x2x1
jax: 0.10.0
libtpu: 0.0.40
codegen_flags: <defaults>
</compile_context>

<pallas_src>
import math
import functools

import jax
import jax.numpy as jnp
from jax import lax
from jax.experimental import pallas as pl
from jax.experimental.pallas import tpu as pltpu


MATMUL_DTYPE = jnp.bfloat16            # MXU operand dtype (accumulation is f32)
VMEM_LIMIT_BYTES = 48 * 1024 * 1024    # explicit scoped-VMEM budget

# Set by _probe_buffered_one(); pl.Buffered(1) single-buffers grid-invariant
# weight blocks (halves their VMEM footprint; matters most on v7x 64 MiB VMEM).
_INVARIANT_PIPELINE_MODE = None


# ------------------------------ small helpers --------------------------------

def _round_up(n, m):
    return ((n + m - 1) // m) * m


def _pick_tile(n, target):
    """Largest tile <= target that divides n and is a multiple of 8, else n.

    Falling back to n keeps the block equal to the full dim (always satisfies
    the (8, 128) block constraint) and yields an exact grid.
    """
    if n <= target:
        return n
    for t in range(target, 7, -1):
        if n % t == 0 and t % 8 == 0:
            return t
    return n


def _vocab_tile_and_pad(vocab):
    tv = 512 if vocab >= 512 else _round_up(vocab, 128)
    return tv, _round_up(vocab, tv)


def _heads_per_group(num_heads, head_size, hidden):
    """Heads processed per attention grid step.

    The resulting group width hg*hd is a multiple of 128 (or the full hidden
    size), so the ctx output block is lane-dense (unmasked vst stores).
    """
    if head_size >= 128:
        return 1
    hg = max(1, min(num_heads, 128 // head_size))
    while hg > 1 and num_heads % hg:
        hg -= 1
    gw = hg * head_size
    if gw % 128 != 0 and gw != hidden:
        hg = num_heads                       # fall back: all heads, width == H
    return hg


def _layernorm(x, g, b, eps):
    mu = jnp.mean(x, axis=-1, keepdims=True)
    var = jnp.mean((x - mu) ** 2, axis=-1, keepdims=True)
    return (x - mu) * lax.rsqrt(var + eps) * g + b


def _gelu_new(x):
    # NewGELU (tanh approximation), matches the PyTorch module exactly.
    return 0.5 * x * (1.0 + jnp.tanh(math.sqrt(2.0 / math.pi)
                                     * (x + 0.044715 * x ** 3)))


def _mosaic_params(**kwargs):
    cls = getattr(pltpu, "CompilerParams", None) or getattr(
        pltpu, "TPUCompilerParams", None)
    if cls is None:
        return None
    try:
        return cls(**kwargs)
    except TypeError:
        kwargs.pop("vmem_limit_bytes", None)
        return cls(**kwargs)


def _probe_kernel(x_ref, o_ref):
    o_ref[...] = x_ref[...] + 1.0


def _probe_buffered_one():
    """Enable single-buffering of invariant blocks iff this JAX supports it."""
    global _INVARIANT_PIPELINE_MODE
    try:
        spec = pl.BlockSpec((8, 128), lambda i: (0, 0),
                            pipeline_mode=pl.Buffered(1))
        out = pl.pallas_call(
            _probe_kernel,
            out_shape=jax.ShapeDtypeStruct((8, 128), jnp.float32),
            grid=(2,),
            in_specs=[spec],
            out_specs=pl.BlockSpec((8, 128), lambda i: (0, 0)),
        )(jnp.zeros((8, 128), jnp.float32))
        jax.block_until_ready(out)
        _INVARIANT_PIPELINE_MODE = pl.Buffered(1)
    except Exception:
        _INVARIANT_PIPELINE_MODE = None


def _inv_spec(block_shape, index_map):
    """BlockSpec for a grid-invariant block (single-buffered when supported)."""
    if _INVARIANT_PIPELINE_MODE is None:
        return pl.BlockSpec(block_shape, index_map)
    return pl.BlockSpec(block_shape, index_map,
                        pipeline_mode=_INVARIANT_PIPELINE_MODE)


# --------------------- kernel 1: ln1 + fused QKV projection -------------------

def qkv_kernel(x_ref, g_ref, b_ref, w_ref, q_ref, k_ref, v_ref, *,
               eps, num_heads, head_size):
    H = num_heads * head_size
    # LayerNorm in f32, then one wide (tq, H) @ (H, 3H) MXU matmul.
    h = _layernorm(x_ref[0], g_ref[...], b_ref[...], eps).astype(w_ref.dtype)
    y = jnp.dot(h, w_ref[...], preferred_element_type=jnp.float32)   # (tq, 3H)
    # Scatter into head-blocked (nh, tq, hd) outputs with static lane slices.
    for hi in range(num_heads):
        lo = hi * head_size
        q_ref[0, hi] = y[:, lo:lo + head_size].astype(q_ref.dtype)
        k_ref[0, hi] = y[:, H + lo:H + lo + head_size].astype(k_ref.dtype)
        v_ref[0, hi] = y[:, 2 * H + lo:2 * H + lo + head_size].astype(v_ref.dtype)


def run_qkv(x, blk, *, num_heads, head_size, eps, tq):
    B, S, H = x.shape
    nt = S // tq
    kernel = functools.partial(qkv_kernel, eps=eps, num_heads=num_heads,
                               head_size=head_size)
    out_sd = jax.ShapeDtypeStruct((B, num_heads, S, head_size), MATMUL_DTYPE)
    out_spec = pl.BlockSpec((1, num_heads, tq, head_size),
                            lambda b, t: (b, 0, t, 0))
    return pl.pallas_call(
        kernel,
        out_shape=(out_sd, out_sd, out_sd),
        grid=(B, nt),
        in_specs=[
            pl.BlockSpec((1, tq, H), lambda b, t: (b, t, 0)),
            _inv_spec((1, H), lambda b, t: (0, 0)),
            _inv_spec((1, H), lambda b, t: (0, 0)),
            _inv_spec((H, 3 * H), lambda b, t: (0, 0)),       # fused QKV weight
        ],
        out_specs=(out_spec, out_spec, out_spec),
        compiler_params=_mosaic_params(
            dimension_semantics=("parallel", "parallel"),
            vmem_limit_bytes=VMEM_LIMIT_BYTES),
    )(x, blk["ln1_g"], blk["ln1_b"], blk["wqkv"])


# ------------------ kernel 2: flash attention (head groups) -------------------

def flash_attn_kernel(q_ref, k_ref, v_ref, o_ref, m_ref, l_ref, acc_ref, *,
                      heads_per_group):
    ki = pl.program_id(3)

    @pl.when(ki == 0)
    def _():
        m_ref[...] = jnp.full_like(m_ref, -jnp.inf)
        l_ref[...] = jnp.zeros_like(l_ref)
        acc_ref[...] = jnp.zeros_like(acc_ref)

    q = q_ref[0]                                  # (hg, tq, hd) bf16, pre-scaled
    k = k_ref[0]                                  # (hg, tk, hd) bf16
    v = v_ref[0]                                  # (hg, tk, hd) bf16
    s = jnp.einsum("hqd,hkd->hqk", q, k,
                   preferred_element_type=jnp.float32)           # (hg, tq, tk)

    m_prev = m_ref[...]                           # (hg, tq, 1)
    m_new = jnp.maximum(m_prev, jnp.max(s, axis=-1, keepdims=True))
    alpha = jnp.exp(m_prev - m_new)
    p = jnp.exp(s - m_new)
    l_ref[...] = alpha * l_ref[...] + jnp.sum(p, axis=-1, keepdims=True)
    acc_ref[...] = alpha * acc_ref[...] + jnp.einsum(
        "hqk,hkd->hqd", p.astype(v.dtype), v,
        preferred_element_type=jnp.float32)
    m_ref[...] = m_new

    @pl.when(ki == pl.num_programs(3) - 1)
    def _():
        out = acc_ref[...] / l_ref[...]           # (hg, tq, hd) f32
        # Lane-concat the heads of this group -> (tq, hg*hd); lane-dense store
        # straight into the (B, S, H) ctx layout (no host-side transpose).
        o_ref[0] = jnp.concatenate(
            [out[i] for i in range(heads_per_group)], axis=-1).astype(o_ref.dtype)


def run_attention(q, k, v, *, heads_per_group, tq, tk):
    B, nh, S, hd = q.shape
    hg = heads_per_group
    ng = nh // hg
    gw = hg * hd
    nq, nk = S // tq, S // tk
    kernel = functools.partial(flash_attn_kernel, heads_per_group=hg)
    q_spec = pl.BlockSpec((1, hg, tq, hd), lambda b, g, qi, ki: (b, g, qi, 0))
    kv_spec = pl.BlockSpec((1, hg, tk, hd), lambda b, g, qi, ki: (b, g, ki, 0))
    return pl.pallas_call(
        kernel,
        out_shape=jax.ShapeDtypeStruct((B, S, nh * hd), MATMUL_DTYPE),
        grid=(B, ng, nq, nk),
        in_specs=[q_spec, kv_spec, kv_spec],
        out_specs=pl.BlockSpec((1, tq, gw), lambda b, g, qi, ki: (b, qi, g)),
        scratch_shapes=[pltpu.VMEM((hg, tq, 1), jnp.float32),
                        pltpu.VMEM((hg, tq, 1), jnp.float32),
                        pltpu.VMEM((hg, tq, hd), jnp.float32)],
        compiler_params=_mosaic_params(
            dimension_semantics=("parallel", "parallel", "parallel",
                                 "arbitrary")),
    )(q, k, v)


# ------------ kernel 3: out_proj + residual + ln2 + MLP + residual ------------

def block_mlp_kernel(x_ref, ctx_ref, wout_ref, g2_ref, bln2_ref,
                     w1_ref, b1_ref, w2_ref, b2_ref, out_ref, *, eps):
    x = x_ref[0]                                                  # (tm, H) f32
    x = x + jnp.dot(ctx_ref[0], wout_ref[...],
                    preferred_element_type=jnp.float32)           # residual 1
    h = _layernorm(x, g2_ref[...], bln2_ref[...], eps).astype(w1_ref.dtype)
    h1 = jnp.dot(h, w1_ref[...], preferred_element_type=jnp.float32) + b1_ref[...]
    h1 = _gelu_new(h1).astype(w2_ref.dtype)
    h2 = jnp.dot(h1, w2_ref[...], preferred_element_type=jnp.float32) + b2_ref[...]
    out_ref[0] = x + h2                                           # residual 2


def run_block_mlp(x, ctx, blk, *, eps, tm):
    B, S, H = x.shape
    inter = blk["w1"].shape[1]
    nt = S // tm
    kernel = functools.partial(block_mlp_kernel, eps=eps)
    return pl.pallas_call(
        kernel,
        out_shape=jax.ShapeDtypeStruct((B, S, H), jnp.float32),
        grid=(B, nt),
        in_specs=[
            pl.BlockSpec((1, tm, H), lambda b, t: (b, t, 0)),     # residual stream
            pl.BlockSpec((1, tm, H), lambda b, t: (b, t, 0)),     # attention ctx
            _inv_spec((H, H), lambda b, t: (0, 0)),               # wout
            _inv_spec((1, H), lambda b, t: (0, 0)),               # ln2 gamma
            _inv_spec((1, H), lambda b, t: (0, 0)),               # ln2 beta
            _inv_spec((H, inter), lambda b, t: (0, 0)),           # fc1 W
            _inv_spec((1, inter), lambda b, t: (0, 0)),           # fc1 b
            _inv_spec((inter, H), lambda b, t: (0, 0)),           # fc2 W
            _inv_spec((1, H), lambda b, t: (0, 0)),               # fc2 b
        ],
        out_specs=pl.BlockSpec((1, tm, H), lambda b, t: (b, t, 0)),
        input_output_aliases={0: 0},          # residual stream updated in place
        compiler_params=_mosaic_params(
            dimension_semantics=("parallel", "parallel"),
            vmem_limit_bytes=VMEM_LIMIT_BYTES),
    )(x, ctx, blk["wout"], blk["ln2_g"], blk["ln2_b"],
      blk["w1"], blk["b1"], blk["w2"], blk["b2"])


# -------------------- kernel 4: fused ln_f + tied LM head ---------------------

def lnf_head_kernel(x_ref, g_ref, b_ref, w_ref, logits_ref, hs_ref, hbf_ref, *,
                    eps):
    vi = pl.program_id(1)

    # ln_f of this token tile computed once (first vocab tile), reused after.
    @pl.when(vi == 0)
    def _():
        hs = _layernorm(x_ref[...], g_ref[...], b_ref[...], eps)
        hs_ref[...] = hs
        hbf_ref[...] = hs.astype(hbf_ref.dtype)

    logits_ref[...] = jnp.dot(hbf_ref[...], w_ref[...],
                              preferred_element_type=jnp.float32)


def run_lnf_head(x2d, g, b, w_t, *, eps, tm, tv):
    T, H = x2d.shape
    Vp = w_t.shape[1]
    kernel = functools.partial(lnf_head_kernel, eps=eps)
    return pl.pallas_call(
        kernel,
        out_shape=(jax.ShapeDtypeStruct((T, Vp), jnp.float32),
                   jax.ShapeDtypeStruct((T, H), jnp.float32)),
        grid=(T // tm, Vp // tv),
        in_specs=[
            pl.BlockSpec((tm, H), lambda t, v: (t, 0)),
            _inv_spec((1, H), lambda t, v: (0, 0)),
            _inv_spec((1, H), lambda t, v: (0, 0)),
            pl.BlockSpec((H, tv), lambda t, v: (0, v)),   # pre-transposed head W
        ],
        out_specs=(pl.BlockSpec((tm, tv), lambda t, v: (t, v)),
                   pl.BlockSpec((tm, H), lambda t, v: (t, 0))),
        scratch_shapes=[pltpu.VMEM((tm, H), MATMUL_DTYPE)],
        compiler_params=_mosaic_params(
            dimension_semantics=("parallel", "arbitrary"),
            vmem_limit_bytes=VMEM_LIMIT_BYTES),
    )(x2d, g, b, w_t)


# ------------------------------ parameter init --------------------------------

def init_params(key, *, vocab, max_pos, hidden, inter, layers, num_heads):
    head_size = hidden // num_heads
    std = 0.02
    out_std = 0.02 / math.sqrt(2 * layers)
    scale = head_size ** (-0.5)
    keys = jax.random.split(key, 2 + 4 * layers)

    wte = std * jax.random.normal(keys[0], (vocab, hidden), jnp.float32)
    tv, vp = _vocab_tile_and_pad(vocab)
    # Tied LM head, pre-transposed once to (H, V_padded): no per-tile relayout.
    head_wt = jnp.zeros((hidden, vp), MATMUL_DTYPE).at[:, :vocab].set(
        wte.T.astype(MATMUL_DTYPE))

    params = {
        "wte": wte,
        "head_wT": head_wt,
        "wpe": std * jax.random.normal(keys[1], (max_pos, hidden), jnp.float32),
        "lnf_g": jnp.ones((1, hidden), jnp.float32),
        "lnf_b": jnp.zeros((1, hidden), jnp.float32),
        "blocks": [],
    }
    for l in range(layers):
        kqkv, ko, k1, k2 = keys[2 + 4 * l: 2 + 4 * (l + 1)]
        wqkv = std * jax.random.normal(kqkv, (hidden, 3 * hidden), jnp.float32)
        # Fold the softmax scale 1/sqrt(hd) into the Q columns once.
        wqkv = wqkv.at[:, :hidden].multiply(scale)
        blk = {
            "ln1_g": jnp.ones((1, hidden), jnp.float32),
            "ln1_b": jnp.zeros((1, hidden), jnp.float32),
            "ln2_g": jnp.ones((1, hidden), jnp.float32),
            "ln2_b": jnp.zeros((1, hidden), jnp.float32),
            "wqkv": wqkv.astype(MATMUL_DTYPE),
            "wout": (out_std * jax.random.normal(
                ko, (hidden, hidden), jnp.float32)).astype(MATMUL_DTYPE),
            "w1": (std * jax.random.normal(
                k1, (hidden, inter), jnp.float32)).astype(MATMUL_DTYPE),
            "b1": jnp.zeros((1, inter), jnp.float32),
            "w2": (std * jax.random.normal(
                k2, (inter, hidden), jnp.float32)).astype(MATMUL_DTYPE),
            "b2": jnp.zeros((1, hidden), jnp.float32),
        }
        params["blocks"].append(blk)
    return params


# --------------------------------- forward ------------------------------------

def gpt2_forward(input_ids, params, *, num_heads, head_size, eps, vocab):
    B, S = input_ids.shape
    H = num_heads * head_size
    T = B * S

    hg = _heads_per_group(num_heads, head_size, H)
    tq = _pick_tile(S, 256)                 # q / token tile inside a sequence
    tk = _pick_tile(S, 1024)                # kv tile (big: amortize step cost)
    tm = _pick_tile(S, 256)                 # token tile for the MLP kernel
    tmh = _pick_tile(T, 512)                # token tile for ln_f + LM head
    tv, _ = _vocab_tile_and_pad(vocab)

    # Embedding lookups (gathers) are glue in plain JAX; dropout = identity.
    tok = jnp.take(params["wte"], input_ids, axis=0)          # (B, S, H) f32
    pos = params["wpe"][:S][None, :, :]
    h = tok + pos

    for blk in params["blocks"]:
        q, k, v = run_qkv(h, blk, num_heads=num_heads, head_size=head_size,
                          eps=eps, tq=tq)                     # (B, nh, S, hd)
        ctx = run_attention(q, k, v, heads_per_group=hg, tq=tq, tk=tk)
        h = run_block_mlp(h, ctx, blk, eps=eps, tm=tm)        # (B, S, H) f32

    logits_p, hs = run_lnf_head(h.reshape(T, H), params["lnf_g"],
                                params["lnf_b"], params["head_wT"],
                                eps=eps, tm=tmh, tv=tv)
    logits = logits_p[:, :vocab].reshape(B, S, vocab)
    return logits, hs.reshape(B, S, H)


# --------------------------- pure-JAX reference --------------------------------

def reference_forward(input_ids, params, *, num_heads, head_size, eps, vocab):
    f32 = jnp.float32
    B, S = input_ids.shape
    H = num_heads * head_size

    def split_heads(t):
        return t.reshape(B, S, num_heads, head_size).transpose(0, 2, 1, 3)

    h = jnp.take(params["wte"], input_ids, axis=0) + params["wpe"][:S][None]
    for blk in params["blocks"]:
        x = h
        hn = _layernorm(x, blk["ln1_g"], blk["ln1_b"], eps)
        y = hn @ blk["wqkv"].astype(f32)      # scale already folded into Q cols
        q, k, v = jnp.split(y, 3, axis=-1)
        qh, kh, vh = split_heads(q), split_heads(k), split_heads(v)
        s = jnp.einsum("bhqd,bhkd->bhqk", qh, kh)
        p = jax.nn.softmax(s, axis=-1)
        ctx = jnp.einsum("bhqk,bhkd->bhqd", p, vh)
        ctx = ctx.transpose(0, 2, 1, 3).reshape(B, S, H)
        x = x + ctx @ blk["wout"].astype(f32)
        hn = _layernorm(x, blk["ln2_g"], blk["ln2_b"], eps)
        h1 = _gelu_new(hn @ blk["w1"].astype(f32) + blk["b1"])
        h = x + h1 @ blk["w2"].astype(f32) + blk["b2"]
    hs = _layernorm(h, params["lnf_g"], params["lnf_b"], eps)
    logits = hs @ params["head_wT"].astype(f32)[:, :vocab]
    return logits, hs


# ----------------------------------- main --------------------------------------

if __name__ == "__main__":
    VOCAB = 256
    MAX_POS = 16
    HIDDEN = 32
    LAYERS = 2
    HEADS = 4
    HEAD_SIZE = HIDDEN // HEADS
    INTER = 128
    EPS = 1e-5
    B, S = 2, 8

    _probe_buffered_one()

    key = jax.random.PRNGKey(0)
    k_param, k_ids = jax.random.split(key)
    params = init_params(k_param, vocab=VOCAB, max_pos=MAX_POS, hidden=HIDDEN,
                         inter=INTER, layers=LAYERS, num_heads=HEADS)
    input_ids = jax.random.randint(k_ids, (B, S), 0, VOCAB, dtype=jnp.int32)

    fwd = jax.jit(functools.partial(gpt2_forward, num_heads=HEADS,
                                    head_size=HEAD_SIZE, eps=EPS, vocab=VOCAB))
    logits, hidden_states = fwd(input_ids, params)
    jax.block_until_ready((logits, hidden_states))

    assert logits.shape == (B, S, VOCAB)
    assert hidden_states.shape == (B, S, HIDDEN)
    assert bool(jnp.all(jnp.isfinite(logits)))
    assert bool(jnp.all(jnp.isfinite(hidden_states)))

    # Sanity check against a pure-JAX f32 reference (bf16 matmuls => loose tol).
    ref_logits, ref_hs = reference_forward(input_ids, params, num_heads=HEADS,
                                           head_size=HEAD_SIZE, eps=EPS,
                                           vocab=VOCAB)
    err_l = float(jnp.max(jnp.abs(logits - ref_logits)))
    err_h = float(jnp.max(jnp.abs(hidden_states - ref_hs)))
    assert err_l < 5e-2 and err_h < 5e-2, (err_l, err_h)

    print("KERNEL_OK")
</pallas_src>

<mosaic_0001>
module attributes {stable_mosaic.version = 11 : i64} {
  func.func @_probe_kernel(%arg0: i32, %arg1: memref<8x128xf32, #tpu.memory_space<vmem>>, %arg2: memref<8x128xf32, #tpu.memory_space<vmem>>) attributes {dimension_semantics = [#tpu.dimension_semantics<arbitrary>], iteration_bounds = array<i64: 2>, scalar_prefetch = 0 : i64, scratch_operands = 0 : i64, tpu.core_type = #tpu.core_type<tc>, window_params = [{pipeline_mode = #tpu.pipeline_mode<synchronous>, transform_indices = @transform_0, window_bounds = array<i64: 8, 128>}, {pipeline_mode = #tpu.pipeline_mode<synchronous>, transform_indices = @transform_1, window_bounds = array<i64: 8, 128>}]} {
    %c0 = arith.constant 0 : index
    %c0_0 = arith.constant 0 : index
    %0 = vector.load %arg1[%c0, %c0_0] : memref<8x128xf32, #tpu.memory_space<vmem>>, vector<8x128xf32>
    %cst = arith.constant 1.000000e+00 : f32
    %1 = vector.broadcast %cst : f32 to vector<8x128xf32>
    %2 = arith.addf %0, %1 : vector<8x128xf32>
    %c0_1 = arith.constant 0 : index
    %c0_2 = arith.constant 0 : index
    %3 = vector.load %arg2[%c0_1, %c0_2] : memref<8x128xf32, #tpu.memory_space<vmem>>, vector<8x128xf32>
    tpu.vector_store %arg2[%c0_1, %c0_2], %2 {strides = array<i32>} : memref<8x128xf32, #tpu.memory_space<vmem>>, vector<8x128xf32>,
    return
  }
  func.func @transform_0(%arg0: i32) -> (i32, i32) {
    %c0_i32 = arith.constant 0 : i32
    %c0_i32_0 = arith.constant 0 : i32
    %c0_i32_1 = arith.constant 0 : i32
    return %c0_i32, %c0_i32_0 : i32, i32
  }
  func.func @transform_1(%arg0: i32) -> (i32, i32) {
    %c0_i32 = arith.constant 0 : i32
    %c0_i32_0 = arith.constant 0 : i32
    %c0_i32_1 = arith.constant 0 : i32
    return %c0_i32, %c0_i32_0 : i32, i32
  }
}

module attributes {stable_mosaic.version = 11 : i64} {
  func.func @block_mlp_kernel(%arg0: i32, %arg1: i32, %arg2: memref<1x8x32xf32, #tpu.memory_space<vmem>>, %arg3: memref<1x8x32xbf16, #tpu.memory_space<vmem>>, %arg4: memref<32x32xbf16, #tpu.memory_space<vmem>>, %arg5: memref<1x32xf32, #tpu.memory_space<vmem>>, %arg6: memref<1x32xf32, #tpu.memory_space<vmem>>, %arg7: memref<32x128xbf16, #tpu.memory_space<vmem>>, %arg8: memref<1x128xf32, #tpu.memory_space<vmem>>, %arg9: memref<128x32xbf16, #tpu.memory_space<vmem>>, %arg10: memref<1x32xf32, #tpu.memory_space<vmem>>, %arg11: memref<1x8x32xf32, #tpu.memory_space<vmem>>) attributes {dimension_semantics = [#tpu.dimension_semantics<parallel>, #tpu.dimension_semantics<parallel>], iteration_bounds = array<i64: 2, 1>, scalar_prefetch = 0 : i64, scratch_operands = 0 : i64, tpu.core_type = #tpu.core_type<tc>, window_params = [{transform_indices = @transform_0, window_bounds = array<i64: 1, 8, 32>}, {transform_indices = @transform_1, window_bounds = array<i64: 1, 8, 32>}, {pipeline_mode = #tpu.pipeline_mode<synchronous>, transform_indices = @transform_2, window_bounds = array<i64: 32, 32>}, {pipeline_mode = #tpu.pipeline_mode<synchronous>, transform_indices = @transform_3, window_bounds = array<i64: 1, 32>}, {pipeline_mode = #tpu.pipeline_mode<synchronous>, transform_indices = @transform_4, window_bounds = array<i64: 1, 32>}, {pipeline_mode = #tpu.pipeline_mode<synchronous>, transform_indices = @transform_5, window_bounds = array<i64: 32, 128>}, {pipeline_mode = #tpu.pipeline_mode<synchronous>, transform_indices = @transform_6, window_bounds = array<i64: 1, 128>}, {pipeline_mode = #tpu.pipeline_mode<synchronous>, transform_indices = @transform_7, window_bounds = array<i64: 128, 32>}, {pipeline_mode = #tpu.pipeline_mode<synchronous>, transform_indices = @transform_8, window_bounds = array<i64: 1, 32>}, {transform_indices = @transform_9, window_bounds = array<i64: 1, 8, 32>}]} {
    %c0 = arith.constant 0 : index
    %c0_0 = arith.constant 0 : index
    %c0_1 = arith.constant 0 : index
    %0 = vector.load %arg2[%c0, %c0_0, %c0_1] : memref<1x8x32xf32, #tpu.memory_space<vmem>>, vector<1x8x32xf32>
    %1 = vector.shape_cast %0 : vector<1x8x32xf32> to vector<8x32xf32>
    %c0_2 = arith.constant 0 : index
    %c0_3 = arith.constant 0 : index
    %c0_4 = arith.constant 0 : index
    %2 = vector.load %arg3[%c0_2, %c0_3, %c0_4] : memref<1x8x32xbf16, #tpu.memory_space<vmem>>, vector<1x8x32xbf16>
    %3 = vector.shape_cast %2 : vector<1x8x32xbf16> to vector<8x32xbf16>
    %c0_5 = arith.constant 0 : index
    %c0_6 = arith.constant 0 : index
    %4 = vector.load %arg4[%c0_5, %c0_6] : memref<32x32xbf16, #tpu.memory_space<vmem>>, vector<32x32xbf16>
    %cst = arith.constant dense<0.000000e+00> : vector<8x32xf32>
    %5 = tpu.matmul %3, %4, %cst {dimension_numbers = #tpu.dot_dimension_numbers<[1], [0], [0], [1], [0, 0, 1, 1], [], []>} : vector<8x32xbf16>, vector<32x32xbf16>, vector<8x32xf32> -> vector<8x32xf32>
    %6 = arith.addf %1, %5 : vector<8x32xf32>
    %c0_7 = arith.constant 0 : index
    %c0_8 = arith.constant 0 : index
    %7 = vector.load %arg5[%c0_7, %c0_8] : memref<1x32xf32, #tpu.memory_space<vmem>>, vector<1x32xf32>
    %c0_9 = arith.constant 0 : index
    %c0_10 = arith.constant 0 : index
    %8 = vector.load %arg6[%c0_9, %c0_10] : memref<1x32xf32, #tpu.memory_space<vmem>>, vector<1x32xf32>
    %cst_11 = arith.constant dense<0.000000e+00> : vector<8xf32>
    %9 = vector.multi_reduction <add>, %6, %cst_11 [1] : vector<8x32xf32> to vector<8xf32>
    %10 = vector.shape_cast %9 : vector<8xf32> to vector<8x1xf32>
    %cst_12 = arith.constant 3.200000e+01 : f32
    %11 = vector.broadcast %cst_12 : f32 to vector<8x1xf32>
    %12 = arith.divf %10, %11 : vector<8x1xf32>
    %13 = vector.broadcast %12 : vector<8x1xf32> to vector<8x32xf32>
    %14 = arith.subf %6, %13 : vector<8x32xf32>
    %15 = arith.mulf %14, %14 : vector<8x32xf32>
    %cst_13 = arith.constant dense<0.000000e+00> : vector<8xf32>
    %16 = vector.multi_reduction <add>, %15, %cst_13 [1] : vector<8x32xf32> to vector<8xf32>
    %17 = vector.shape_cast %16 : vector<8xf32> to vector<8x1xf32>
    %cst_14 = arith.constant 3.200000e+01 : f32
    %18 = vector.broadcast %cst_14 : f32 to vector<8x1xf32>
    %19 = arith.divf %17, %18 : vector<8x1xf32>
    %20 = vector.broadcast %12 : vector<8x1xf32> to vector<8x32xf32>
    %21 = arith.subf %6, %20 : vector<8x32xf32>
    %cst_15 = arith.constant 9.99999974E-6 : f32
    %22 = vector.broadcast %cst_15 : f32 to vector<8x1xf32>
    %23 = arith.addf %19, %22 : vector<8x1xf32>
    %24 = math.rsqrt %23 : vector<8x1xf32>
    %25 = vector.broadcast %24 : vector<8x1xf32> to vector<8x32xf32>
    %26 = arith.mulf %21, %25 : vector<8x32xf32>
    %27 = vector.broadcast %7 : vector<1x32xf32> to vector<8x32xf32>
    %28 = arith.mulf %26, %27 : vector<8x32xf32>
    %29 = vector.broadcast %8 : vector<1x32xf32> to vector<8x32xf32>
    %30 = arith.addf %28, %29 : vector<8x32xf32>
    %31 = arith.truncf %30 : vector<8x32xf32> to vector<8x32xbf16>
    %c0_16 = arith.constant 0 : index
    %c0_17 = arith.constant 0 : index
    %32 = vector.load %arg7[%c0_16, %c0_17] : memref<32x128xbf16, #tpu.memory_space<vmem>>, vector<32x128xbf16>
    %cst_18 = arith.constant dense<0.000000e+00> : vector<8x128xf32>
    %33 = tpu.matmul %31, %32, %cst_18 {dimension_numbers = #tpu.dot_dimension_numbers<[1], [0], [0], [1], [0, 0, 1, 1], [], []>} : vector<8x32xbf16>, vector<32x128xbf16>, vector<8x128xf32> -> vector<8x128xf32>
    %c0_19 = arith.constant 0 : index
    %c0_20 = arith.constant 0 : index
    %34 = vector.load %arg8[%c0_19, %c0_20] : memref<1x128xf32, #tpu.memory_space<vmem>>, vector<1x128xf32>
    %35 = vector.broadcast %34 : vector<1x128xf32> to vector<8x128xf32>
    %36 = arith.addf %33, %35 : vector<8x128xf32>
    %cst_21 = arith.constant 5.000000e-01 : f32
    %37 = vector.broadcast %cst_21 : f32 to vector<8x128xf32>
    %38 = arith.mulf %37, %36 : vector<8x128xf32>
    %39 = arith.mulf %36, %36 : vector<8x128xf32>
    %40 = arith.mulf %36, %39 : vector<8x128xf32>
    %cst_22 = arith.constant 4.471500e-02 : f32
    %41 = vector.broadcast %cst_22 : f32 to vector<8x128xf32>
    %42 = arith.mulf %41, %40 : vector<8x128xf32>
    %43 = arith.addf %36, %42 : vector<8x128xf32>
    %cst_23 = arith.constant 0.797884583 : f32
    %44 = vector.broadcast %cst_23 : f32 to vector<8x128xf32>
    %45 = arith.mulf %44, %43 : vector<8x128xf32>
    %46 = math.tanh %45 : vector<8x128xf32>
    %cst_24 = arith.constant 1.000000e+00 : f32
    %47 = vector.broadcast %cst_24 : f32 to vector<8x128xf32>
    %48 = arith.addf %47, %46 : vector<8x128xf32>
    %49 = arith.mulf %38, %48 : vector<8x128xf32>
    %50 = arith.truncf %49 : vector<8x128xf32> to vector<8x128xbf16>
    %c0_25 = arith.constant 0 : index
    %c0_26 = arith.constant 0 : index
    %51 = vector.load %arg9[%c0_25, %c0_26] : memref<128x32xbf16, #tpu.memory_space<vmem>>, vector<128x32xbf16>
    %cst_27 = arith.constant dense<0.000000e+00> : vector<8x32xf32>
    %52 = tpu.matmul %50, %51, %cst_27 {dimension_numbers = #tpu.dot_dimension_numbers<[1], [0], [0], [1], [0, 0, 1, 1], [], []>} : vector<8x128xbf16>, vector<128x32xbf16>, vector<8x32xf32> -> vector<8x32xf32>
    %c0_28 = arith.constant 0 : index
    %c0_29 = arith.constant 0 : index
    %53 = vector.load %arg10[%c0_28, %c0_29] : memref<1x32xf32, #tpu.memory_space<vmem>>, vector<1x32xf32>
    %54 = vector.broadcast %53 : vector<1x32xf32> to vector<8x32xf32>
    %55 = arith.addf %52, %54 : vector<8x32xf32>
    %56 = arith.addf %6, %55 : vector<8x32xf32>
    %c0_30 = arith.constant 0 : index
    %c0_31 = arith.constant 0 : index
    %c0_32 = arith.constant 0 : index
    %57 = vector.load %arg11[%c0_30, %c0_31, %c0_32] : memref<1x8x32xf32, #tpu.memory_space<vmem>>, vector<1x8x32xf32>
    %58 = vector.shape_cast %57 : vector<1x8x32xf32> to vector<8x32xf32>
    %59 = vector.shape_cast %56 : vector<8x32xf32> to vector<1x8x32xf32>
    tpu.vector_store %arg11[%c0_30, %c0_31, %c0_32], %59 {strides = array<i32>} : memref<1x8x32xf32, #tpu.memory_space<vmem>>, vector<1x8x32xf32>,
    return
  }
  func.func @transform_0(%arg0: i32, %arg1: i32) -> (i32, i32, i32) {
    %c0_i32 = arith.constant 0 : i32
    %c0_i32_0 = arith.constant 0 : i32
    return %arg0, %arg1, %c0_i32 : i32, i32, i32
  }
  func.func @transform_1(%arg0: i32, %arg1: i32) -> (i32, i32, i32) {
    %c0_i32 = arith.constant 0 : i32
    %c0_i32_0 = arith.constant 0 : i32
    return %arg0, %arg1, %c0_i32 : i32, i32, i32
  }
  func.func @transform_2(%arg0: i32, %arg1: i32) -> (i32, i32) {
    %c0_i32 = arith.constant 0 : i32
    %c0_i32_0 = arith.constant 0 : i32
    %c0_i32_1 = arith.constant 0 : i32
    return %c0_i32, %c0_i32_0 : i32, i32
  }
  func.func @transform_3(%arg0: i32, %arg1: i32) -> (i32, i32) {
    %c0_i32 = arith.constant 0 : i32
    %c0_i32_0 = arith.constant 0 : i32
    %c0_i32_1 = arith.constant 0 : i32
    return %c0_i32, %c0_i32_0 : i32, i32
  }
  func.func @transform_4(%arg0: i32, %arg1: i32) -> (i32, i32) {
    %c0_i32 = arith.constant 0 : i32
    %c0_i32_0 = arith.constant 0 : i32
    %c0_i32_1 = arith.constant 0 : i32
    return %c0_i32, %c0_i32_0 : i32, i32
  }
  func.func @transform_5(%arg0: i32, %arg1: i32) -> (i32, i32) {
    %c0_i32 = arith.constant 0 : i32
    %c0_i32_0 = arith.constant 0 : i32
    %c0_i32_1 = arith.constant 0 : i32
    return %c0_i32, %c0_i32_0 : i32, i32
  }
  func.func @transform_6(%arg0: i32, %arg1: i32) -> (i32, i32) {
    %c0_i32 = arith.constant 0 : i32
    %c0_i32_0 = arith.constant 0 : i32
    %c0_i32_1 = arith.constant 0 : i32
    return %c0_i32, %c0_i32_0 : i32, i32
  }
  func.func @transform_7(%arg0: i32, %arg1: i32) -> (i32, i32) {
    %c0_i32 = arith.constant 0 : i32
    %c0_i32_0 = arith.constant 0 : i32
    %c0_i32_1 = arith.constant 0 : i32
    return %c0_i32, %c0_i32_0 : i32, i32
  }
  func.func @transform_8(%arg0: i32, %arg1: i32) -> (i32, i32) {
    %c0_i32 = arith.constant 0 : i32
    %c0_i32_0 = arith.constant 0 : i32
    %c0_i32_1 = arith.constant 0 : i32
    return %c0_i32, %c0_i32_0 : i32, i32
  }
  func.func @transform_9(%arg0: i32, %arg1: i32) -> (i32, i32, i32) {
    %c0_i32 = arith.constant 0 : i32
    %c0_i32_0 = arith.constant 0 : i32
    return %arg0, %arg1, %c0_i32 : i32, i32, i32
  }
}

module attributes {stable_mosaic.version = 11 : i64} {
  func.func @flash_attn_kernel(%arg0: i32, %arg1: i32, %arg2: i32, %arg3: i32, %arg4: memref<1x4x8x8xbf16, #tpu.memory_space<vmem>>, %arg5: memref<1x4x8x8xbf16, #tpu.memory_space<vmem>>, %arg6: memref<1x4x8x8xbf16, #tpu.memory_space<vmem>>, %arg7: memref<1x8x32xbf16, #tpu.memory_space<vmem>>, %arg8: memref<4x8x1xf32, #tpu.memory_space<vmem>>, %arg9: memref<4x8x1xf32, #tpu.memory_space<vmem>>, %arg10: memref<4x8x8xf32, #tpu.memory_space<vmem>>) attributes {dimension_semantics = [#tpu.dimension_semantics<parallel>, #tpu.dimension_semantics<parallel>, #tpu.dimension_semantics<parallel>, #tpu.dimension_semantics<arbitrary>], iteration_bounds = array<i64: 2, 1, 1, 1>, scalar_prefetch = 0 : i64, scratch_operands = 3 : i64, tpu.core_type = #tpu.core_type<tc>, window_params = [{transform_indices = @transform_0, window_bounds = array<i64: 1, 4, 8, 8>}, {transform_indices = @transform_1, window_bounds = array<i64: 1, 4, 8, 8>}, {transform_indices = @transform_2, window_bounds = array<i64: 1, 4, 8, 8>}, {transform_indices = @transform_3, window_bounds = array<i64: 1, 8, 32>}]} {
    %c0_i32 = arith.constant 0 : i32
    %0 = arith.cmpi eq, %arg3, %c0_i32 : i32
    %1 = arith.extui %0 : i1 to i32
    %c0_i32_0 = arith.constant 0 : i32
    %2 = arith.cmpi ne, %1, %c0_i32_0 : i32
    scf.if %2 {
      %cst_35 = arith.constant 0xFF800000 : f32
      %36 = vector.broadcast %cst_35 : f32 to vector<4x8x1xf32>
      %c0_36 = arith.constant 0 : index
      %c0_37 = arith.constant 0 : index
      %c0_38 = arith.constant 0 : index
      %37 = vector.load %arg8[%c0_36, %c0_37, %c0_38] : memref<4x8x1xf32, #tpu.memory_space<vmem>>, vector<4x8x1xf32>
      tpu.vector_store %arg8[%c0_36, %c0_37, %c0_38], %36 {strides = array<i32>} : memref<4x8x1xf32, #tpu.memory_space<vmem>>, vector<4x8x1xf32>,
      %cst_39 = arith.constant 0.000000e+00 : f32
      %38 = vector.broadcast %cst_39 : f32 to vector<4x8x1xf32>
      %c0_40 = arith.constant 0 : index
      %c0_41 = arith.constant 0 : index
      %c0_42 = arith.constant 0 : index
      %39 = vector.load %arg9[%c0_40, %c0_41, %c0_42] : memref<4x8x1xf32, #tpu.memory_space<vmem>>, vector<4x8x1xf32>
      tpu.vector_store %arg9[%c0_40, %c0_41, %c0_42], %38 {strides = array<i32>} : memref<4x8x1xf32, #tpu.memory_space<vmem>>, vector<4x8x1xf32>,
      %cst_43 = arith.constant 0.000000e+00 : f32
      %40 = vector.broadcast %cst_43 : f32 to vector<4x8x8xf32>
      %c0_44 = arith.constant 0 : index
      %c0_45 = arith.constant 0 : index
      %c0_46 = arith.constant 0 : index
      %41 = vector.load %arg10[%c0_44, %c0_45, %c0_46] : memref<4x8x8xf32, #tpu.memory_space<vmem>>, vector<4x8x8xf32>
      tpu.vector_store %arg10[%c0_44, %c0_45, %c0_46], %40 {strides = array<i32>} : memref<4x8x8xf32, #tpu.memory_space<vmem>>, vector<4x8x8xf32>,
    } else {
    }
    %c0 = arith.constant 0 : index
    %c0_1 = arith.constant 0 : index
    %c0_2 = arith.constant 0 : index
    %c0_3 = arith.constant 0 : index
    %3 = vector.load %arg4[%c0, %c0_1, %c0_2, %c0_3] : memref<1x4x8x8xbf16, #tpu.memory_space<vmem>>, vector<1x4x8x8xbf16>
    %4 = vector.shape_cast %3 : vector<1x4x8x8xbf16> to vector<4x8x8xbf16>
    %c0_4 = arith.constant 0 : index
    %c0_5 = arith.constant 0 : index
    %c0_6 = arith.constant 0 : index
    %c0_7 = arith.constant 0 : index
    %5 = vector.load %arg5[%c0_4, %c0_5, %c0_6, %c0_7] : memref<1x4x8x8xbf16, #tpu.memory_space<vmem>>, vector<1x4x8x8xbf16>
    %6 = vector.shape_cast %5 : vector<1x4x8x8xbf16> to vector<4x8x8xbf16>
    %c0_8 = arith.constant 0 : index
    %c0_9 = arith.constant 0 : index
    %c0_10 = arith.constant 0 : index
    %c0_11 = arith.constant 0 : index
    %7 = vector.load %arg6[%c0_8, %c0_9, %c0_10, %c0_11] : memref<1x4x8x8xbf16, #tpu.memory_space<vmem>>, vector<1x4x8x8xbf16>
    %8 = vector.shape_cast %7 : vector<1x4x8x8xbf16> to vector<4x8x8xbf16>
    "tpu.trace_start"() <{level = 10 : i32, message = "hqd,hkd->hqk"}> : () -> ()
    %cst = arith.constant dense<0.000000e+00> : vector<4x8x8xf32>
    %9 = tpu.matmul %4, %6, %cst {dimension_numbers = #tpu.dot_dimension_numbers<[2], [2], [1], [1], [0, 0, 0, 1, 1, 1], [0], [0]>} : vector<4x8x8xbf16>, vector<4x8x8xbf16>, vector<4x8x8xf32> -> vector<4x8x8xf32>
    "tpu.trace_stop"() : () -> ()
    %c0_12 = arith.constant 0 : index
    %c0_13 = arith.constant 0 : index
    %c0_14 = arith.constant 0 : index
    %10 = vector.load %arg8[%c0_12, %c0_13, %c0_14] : memref<4x8x1xf32, #tpu.memory_space<vmem>>, vector<4x8x1xf32>
    %cst_15 = arith.constant dense<0xFF800000> : vector<4x8xf32>
    %11 = vector.multi_reduction <maximumf>, %9, %cst_15 [2] : vector<4x8x8xf32> to vector<4x8xf32>
    %12 = vector.shape_cast %11 : vector<4x8xf32> to vector<4x8x1xf32>
    %13 = arith.maximumf %10, %12 : vector<4x8x1xf32>
    %14 = arith.subf %10, %13 : vector<4x8x1xf32>
    %15 = math.exp %14 : vector<4x8x1xf32>
    %16 = vector.broadcast %13 : vector<4x8x1xf32> to vector<4x8x8xf32>
    %17 = arith.subf %9, %16 : vector<4x8x8xf32>
    %18 = math.exp %17 : vector<4x8x8xf32>
    %c0_16 = arith.constant 0 : index
    %c0_17 = arith.constant 0 : index
    %c0_18 = arith.constant 0 : index
    %19 = vector.load %arg9[%c0_16, %c0_17, %c0_18] : memref<4x8x1xf32, #tpu.memory_space<vmem>>, vector<4x8x1xf32>
    %20 = arith.mulf %15, %19 : vector<4x8x1xf32>
    %cst_19 = arith.constant dense<0.000000e+00> : vector<4x8xf32>
    %21 = vector.multi_reduction <add>, %18, %cst_19 [2] : vector<4x8x8xf32> to vector<4x8xf32>
    %22 = vector.shape_cast %21 : vector<4x8xf32> to vector<4x8x1xf32>
    %23 = arith.addf %20, %22 : vector<4x8x1xf32>
    %c0_20 = arith.constant 0 : index
    %c0_21 = arith.constant 0 : index
    %c0_22 = arith.constant 0 : index
    %24 = vector.load %arg9[%c0_20, %c0_21, %c0_22] : memref<4x8x1xf32, #tpu.memory_space<vmem>>, vector<4x8x1xf32>
    tpu.vector_store %arg9[%c0_20, %c0_21, %c0_22], %23 {strides = array<i32>} : memref<4x8x1xf32, #tpu.memory_space<vmem>>, vector<4x8x1xf32>,
    %c0_23 = arith.constant 0 : index
    %c0_24 = arith.constant 0 : index
    %c0_25 = arith.constant 0 : index
    %25 = vector.load %arg10[%c0_23, %c0_24, %c0_25] : memref<4x8x8xf32, #tpu.memory_space<vmem>>, vector<4x8x8xf32>
    %26 = vector.broadcast %15 : vector<4x8x1xf32> to vector<4x8x8xf32>
    %27 = arith.mulf %26, %25 : vector<4x8x8xf32>
    %28 = arith.truncf %18 : vector<4x8x8xf32> to vector<4x8x8xbf16>
    "tpu.trace_start"() <{level = 10 : i32, message = "hqk,hkd->hqd"}> : () -> ()
    %cst_26 = arith.constant dense<0.000000e+00> : vector<4x8x8xf32>
    %29 = tpu.matmul %28, %8, %cst_26 {dimension_numbers = #tpu.dot_dimension_numbers<[2], [1], [1], [2], [0, 0, 0, 1, 1, 2], [0], [0]>} : vector<4x8x8xbf16>, vector<4x8x8xbf16>, vector<4x8x8xf32> -> vector<4x8x8xf32>
    "tpu.trace_stop"() : () -> ()
    %30 = arith.addf %27, %29 : vector<4x8x8xf32>
    %c0_27 = arith.constant 0 : index
    %c0_28 = arith.constant 0 : index
    %c0_29 = arith.constant 0 : index
    %31 = vector.load %arg10[%c0_27, %c0_28, %c0_29] : memref<4x8x8xf32, #tpu.memory_space<vmem>>, vector<4x8x8xf32>
    tpu.vector_store %arg10[%c0_27, %c0_28, %c0_29], %30 {strides = array<i32>} : memref<4x8x8xf32, #tpu.memory_space<vmem>>, vector<4x8x8xf32>,
    %c0_30 = arith.constant 0 : index
    %c0_31 = arith.constant 0 : index
    %c0_32 = arith.constant 0 : index
    %32 = vector.load %arg8[%c0_30, %c0_31, %c0_32] : memref<4x8x1xf32, #tpu.memory_space<vmem>>, vector<4x8x1xf32>
    tpu.vector_store %arg8[%c0_30, %c0_31, %c0_32], %13 {strides = array<i32>} : memref<4x8x1xf32, #tpu.memory_space<vmem>>, vector<4x8x1xf32>,
    %c0_i32_33 = arith.constant 0 : i32
    %33 = arith.cmpi eq, %arg3, %c0_i32_33 : i32
    %34 = arith.extui %33 : i1 to i32
    %c0_i32_34 = arith.constant 0 : i32
    %35 = arith.cmpi ne, %34, %c0_i32_34 : i32
    scf.if %35 {
      %c0_35 = arith.constant 0 : index
      %c0_36 = arith.constant 0 : index
      %c0_37 = arith.constant 0 : index
      %36 = vector.load %arg10[%c0_35, %c0_36, %c0_37] : memref<4x8x8xf32, #tpu.memory_space<vmem>>, vector<4x8x8xf32>
      %c0_38 = arith.constant 0 : index
      %c0_39 = arith.constant 0 : index
      %c0_40 = arith.constant 0 : index
      %37 = vector.load %arg9[%c0_38, %c0_39, %c0_40] : memref<4x8x1xf32, #tpu.memory_space<vmem>>, vector<4x8x1xf32>
      %38 = vector.broadcast %37 : vector<4x8x1xf32> to vector<4x8x8xf32>
      %39 = arith.divf %36, %38 : vector<4x8x8xf32>
      %40 = vector.extract_strided_slice %39 {offsets = [0, 0, 0], sizes = [1, 8, 8], strides = [1, 1, 1]} : vector<4x8x8xf32> to vector<1x8x8xf32>
      %41 = vector.shape_cast %40 : vector<1x8x8xf32> to vector<8x8xf32>
      %42 = vector.extract_strided_slice %39 {offsets = [1, 0, 0], sizes = [1, 8, 8], strides = [1, 1, 1]} : vector<4x8x8xf32> to vector<1x8x8xf32>
      %43 = vector.shape_cast %42 : vector<1x8x8xf32> to vector<8x8xf32>
      %44 = vector.extract_strided_slice %39 {offsets = [2, 0, 0], sizes = [1, 8, 8], strides = [1, 1, 1]} : vector<4x8x8xf32> to vector<1x8x8xf32>
      %45 = vector.shape_cast %44 : vector<1x8x8xf32> to vector<8x8xf32>
      %46 = vector.extract_strided_slice %39 {offsets = [3, 0, 0], sizes = [1, 8, 8], strides = [1, 1, 1]} : vector<4x8x8xf32> to vector<1x8x8xf32>
      %47 = vector.shape_cast %46 : vector<1x8x8xf32> to vector<8x8xf32>
      %48 = tpu.concatenate %41, %43, %45, %47 in 1 : vector<8x8xf32>, vector<8x8xf32>, vector<8x8xf32>, vector<8x8xf32> -> vector<8x32xf32>
      %49 = arith.truncf %48 : vector<8x32xf32> to vector<8x32xbf16>
      %c0_41 = arith.constant 0 : index
      %c0_42 = arith.constant 0 : index
      %c0_43 = arith.constant 0 : index
      %50 = vector.load %arg7[%c0_41, %c0_42, %c0_43] : memref<1x8x32xbf16, #tpu.memory_space<vmem>>, vector<1x8x32xbf16>
      %51 = vector.shape_cast %50 : vector<1x8x32xbf16> to vector<8x32xbf16>
      %52 = vector.shape_cast %49 : vector<8x32xbf16> to vector<1x8x32xbf16>
      tpu.vector_store %arg7[%c0_41, %c0_42, %c0_43], %52 {strides = array<i32>} : memref<1x8x32xbf16, #tpu.memory_space<vmem>>, vector<1x8x32xbf16>,
    } else {
    }
    return
  }
  func.func @transform_0(%arg0: i32, %arg1: i32, %arg2: i32, %arg3: i32) -> (i32, i32, i32, i32) {
    %c0_i32 = arith.constant 0 : i32
    %c0_i32_0 = arith.constant 0 : i32
    return %arg0, %arg1, %arg2, %c0_i32 : i32, i32, i32, i32
  }
  func.func @transform_1(%arg0: i32, %arg1: i32, %arg2: i32, %arg3: i32) -> (i32, i32, i32, i32) {
    %c0_i32 = arith.constant 0 : i32
    %c0_i32_0 = arith.constant 0 : i32
    return %arg0, %arg1, %arg3, %c0_i32 : i32, i32, i32, i32
  }
  func.func @transform_2(%arg0: i32, %arg1: i32, %arg2: i32, %arg3: i32) -> (i32, i32, i32, i32) {
    %c0_i32 = arith.constant 0 : i32
    %c0_i32_0 = arith.constant 0 : i32
    return %arg0, %arg1, %arg3, %c0_i32 : i32, i32, i32, i32
  }
  func.func @transform_3(%arg0: i32, %arg1: i32, %arg2: i32, %arg3: i32) -> (i32, i32, i32) {
    %c0_i32 = arith.constant 0 : i32
    return %arg0, %arg2, %arg1 : i32, i32, i32
  }
}

module attributes {stable_mosaic.version = 11 : i64} {
  func.func @qkv_kernel(%arg0: i32, %arg1: i32, %arg2: memref<1x8x32xf32, #tpu.memory_space<vmem>>, %arg3: memref<1x32xf32, #tpu.memory_space<vmem>>, %arg4: memref<1x32xf32, #tpu.memory_space<vmem>>, %arg5: memref<32x96xbf16, #tpu.memory_space<vmem>>, %arg6: memref<1x4x8x8xbf16, #tpu.memory_space<vmem>>, %arg7: memref<1x4x8x8xbf16, #tpu.memory_space<vmem>>, %arg8: memref<1x4x8x8xbf16, #tpu.memory_space<vmem>>) attributes {dimension_semantics = [#tpu.dimension_semantics<parallel>, #tpu.dimension_semantics<parallel>], iteration_bounds = array<i64: 2, 1>, scalar_prefetch = 0 : i64, scratch_operands = 0 : i64, tpu.core_type = #tpu.core_type<tc>, window_params = [{transform_indices = @transform_0, window_bounds = array<i64: 1, 8, 32>}, {pipeline_mode = #tpu.pipeline_mode<synchronous>, transform_indices = @transform_1, window_bounds = array<i64: 1, 32>}, {pipeline_mode = #tpu.pipeline_mode<synchronous>, transform_indices = @transform_2, window_bounds = array<i64: 1, 32>}, {pipeline_mode = #tpu.pipeline_mode<synchronous>, transform_indices = @transform_3, window_bounds = array<i64: 32, 96>}, {transform_indices = @transform_4, window_bounds = array<i64: 1, 4, 8, 8>}, {transform_indices = @transform_5, window_bounds = array<i64: 1, 4, 8, 8>}, {transform_indices = @transform_6, window_bounds = array<i64: 1, 4, 8, 8>}]} {
    %c0 = arith.constant 0 : index
    %c0_0 = arith.constant 0 : index
    %c0_1 = arith.constant 0 : index
    %0 = vector.load %arg2[%c0, %c0_0, %c0_1] : memref<1x8x32xf32, #tpu.memory_space<vmem>>, vector<1x8x32xf32>
    %1 = vector.shape_cast %0 : vector<1x8x32xf32> to vector<8x32xf32>
    %c0_2 = arith.constant 0 : index
    %c0_3 = arith.constant 0 : index
    %2 = vector.load %arg3[%c0_2, %c0_3] : memref<1x32xf32, #tpu.memory_space<vmem>>, vector<1x32xf32>
    %c0_4 = arith.constant 0 : index
    %c0_5 = arith.constant 0 : index
    %3 = vector.load %arg4[%c0_4, %c0_5] : memref<1x32xf32, #tpu.memory_space<vmem>>, vector<1x32xf32>
    %cst = arith.constant dense<0.000000e+00> : vector<8xf32>
    %4 = vector.multi_reduction <add>, %1, %cst [1] : vector<8x32xf32> to vector<8xf32>
    %5 = vector.shape_cast %4 : vector<8xf32> to vector<8x1xf32>
    %cst_6 = arith.constant 3.200000e+01 : f32
    %6 = vector.broadcast %cst_6 : f32 to vector<8x1xf32>
    %7 = arith.divf %5, %6 : vector<8x1xf32>
    %8 = vector.broadcast %7 : vector<8x1xf32> to vector<8x32xf32>
    %9 = arith.subf %1, %8 : vector<8x32xf32>
    %10 = arith.mulf %9, %9 : vector<8x32xf32>
    %cst_7 = arith.constant dense<0.000000e+00> : vector<8xf32>
    %11 = vector.multi_reduction <add>, %10, %cst_7 [1] : vector<8x32xf32> to vector<8xf32>
    %12 = vector.shape_cast %11 : vector<8xf32> to vector<8x1xf32>
    %cst_8 = arith.constant 3.200000e+01 : f32
    %13 = vector.broadcast %cst_8 : f32 to vector<8x1xf32>
    %14 = arith.divf %12, %13 : vector<8x1xf32>
    %15 = vector.broadcast %7 : vector<8x1xf32> to vector<8x32xf32>
    %16 = arith.subf %1, %15 : vector<8x32xf32>
    %cst_9 = arith.constant 9.99999974E-6 : f32
    %17 = vector.broadcast %cst_9 : f32 to vector<8x1xf32>
    %18 = arith.addf %14, %17 : vector<8x1xf32>
    %19 = math.rsqrt %18 : vector<8x1xf32>
    %20 = vector.broadcast %19 : vector<8x1xf32> to vector<8x32xf32>
    %21 = arith.mulf %16, %20 : vector<8x32xf32>
    %22 = vector.broadcast %2 : vector<1x32xf32> to vector<8x32xf32>
    %23 = arith.mulf %21, %22 : vector<8x32xf32>
    %24 = vector.broadcast %3 : vector<1x32xf32> to vector<8x32xf32>
    %25 = arith.addf %23, %24 : vector<8x32xf32>
    %26 = arith.truncf %25 : vector<8x32xf32> to vector<8x32xbf16>
    %c0_10 = arith.constant 0 : index
    %c0_11 = arith.constant 0 : index
    %27 = vector.load %arg5[%c0_10, %c0_11] : memref<32x96xbf16, #tpu.memory_space<vmem>>, vector<32x96xbf16>
    %cst_12 = arith.constant dense<0.000000e+00> : vector<8x96xf32>
    %28 = tpu.matmul %26, %27, %cst_12 {dimension_numbers = #tpu.dot_dimension_numbers<[1], [0], [0], [1], [0, 0, 1, 1], [], []>} : vector<8x32xbf16>, vector<32x96xbf16>, vector<8x96xf32> -> vector<8x96xf32>
    %29 = vector.extract_strided_slice %28 {offsets = [0, 0], sizes = [8, 8], strides = [1, 1]} : vector<8x96xf32> to vector<8x8xf32>
    %30 = arith.truncf %29 : vector<8x8xf32> to vector<8x8xbf16>
    %c0_13 = arith.constant 0 : index
    %c0_14 = arith.constant 0 : index
    %c0_15 = arith.constant 0 : index
    %c0_16 = arith.constant 0 : index
    %31 = vector.load %arg6[%c0_13, %c0_14, %c0_15, %c0_16] : memref<1x4x8x8xbf16, #tpu.memory_space<vmem>>, vector<1x1x8x8xbf16>
    %32 = vector.shape_cast %31 : vector<1x1x8x8xbf16> to vector<8x8xbf16>
    %33 = vector.shape_cast %30 : vector<8x8xbf16> to vector<1x1x8x8xbf16>
    tpu.vector_store %arg6[%c0_13, %c0_14, %c0_15, %c0_16], %33 {strides = array<i32>} : memref<1x4x8x8xbf16, #tpu.memory_space<vmem>>, vector<1x1x8x8xbf16>,
    %34 = vector.extract_strided_slice %28 {offsets = [0, 32], sizes = [8, 8], strides = [1, 1]} : vector<8x96xf32> to vector<8x8xf32>
    %35 = arith.truncf %34 : vector<8x8xf32> to vector<8x8xbf16>
    %c0_17 = arith.constant 0 : index
    %c0_18 = arith.constant 0 : index
    %c0_19 = arith.constant 0 : index
    %c0_20 = arith.constant 0 : index
    %36 = vector.load %arg7[%c0_17, %c0_18, %c0_19, %c0_20] : memref<1x4x8x8xbf16, #tpu.memory_space<vmem>>, vector<1x1x8x8xbf16>
    %37 = vector.shape_cast %36 : vector<1x1x8x8xbf16> to vector<8x8xbf16>
    %38 = vector.shape_cast %35 : vector<8x8xbf16> to vector<1x1x8x8xbf16>
    tpu.vector_store %arg7[%c0_17, %c0_18, %c0_19, %c0_20], %38 {strides = array<i32>} : memref<1x4x8x8xbf16, #tpu.memory_space<vmem>>, vector<1x1x8x8xbf16>,
    %39 = vector.extract_strided_slice %28 {offsets = [0, 64], sizes = [8, 8], strides = [1, 1]} : vector<8x96xf32> to vector<8x8xf32>
    %40 = arith.truncf %39 : vector<8x8xf32> to vector<8x8xbf16>
    %c0_21 = arith.constant 0 : index
    %c0_22 = arith.constant 0 : index
    %c0_23 = arith.constant 0 : index
    %c0_24 = arith.constant 0 : index
    %41 = vector.load %arg8[%c0_21, %c0_22, %c0_23, %c0_24] : memref<1x4x8x8xbf16, #tpu.memory_space<vmem>>, vector<1x1x8x8xbf16>
    %42 = vector.shape_cast %41 : vector<1x1x8x8xbf16> to vector<8x8xbf16>
    %43 = vector.shape_cast %40 : vector<8x8xbf16> to vector<1x1x8x8xbf16>
    tpu.vector_store %arg8[%c0_21, %c0_22, %c0_23, %c0_24], %43 {strides = array<i32>} : memref<1x4x8x8xbf16, #tpu.memory_space<vmem>>, vector<1x1x8x8xbf16>,
    %44 = vector.extract_strided_slice %28 {offsets = [0, 8], sizes = [8, 8], strides = [1, 1]} : vector<8x96xf32> to vector<8x8xf32>
    %45 = arith.truncf %44 : vector<8x8xf32> to vector<8x8xbf16>
    %c0_25 = arith.constant 0 : index
    %c1 = arith.constant 1 : index
    %c0_26 = arith.constant 0 : index
    %c0_27 = arith.constant 0 : index
    %46 = vector.load %arg6[%c0_25, %c1, %c0_26, %c0_27] : memref<1x4x8x8xbf16, #tpu.memory_space<vmem>>, vector<1x1x8x8xbf16>
    %47 = vector.shape_cast %46 : vector<1x1x8x8xbf16> to vector<8x8xbf16>
    %48 = vector.shape_cast %45 : vector<8x8xbf16> to vector<1x1x8x8xbf16>
    tpu.vector_store %arg6[%c0_25, %c1, %c0_26, %c0_27], %48 {strides = array<i32>} : memref<1x4x8x8xbf16, #tpu.memory_space<vmem>>, vector<1x1x8x8xbf16>,
    %49 = vector.extract_strided_slice %28 {offsets = [0, 40], sizes = [8, 8], strides = [1, 1]} : vector<8x96xf32> to vector<8x8xf32>
    %50 = arith.truncf %49 : vector<8x8xf32> to vector<8x8xbf16>
    %c0_28 = arith.constant 0 : index
    %c1_29 = arith.constant 1 : index
    %c0_30 = arith.constant 0 : index
    %c0_31 = arith.constant 0 : index
    %51 = vector.load %arg7[%c0_28, %c1_29, %c0_30, %c0_31] : memref<1x4x8x8xbf16, #tpu.memory_space<vmem>>, vector<1x1x8x8xbf16>
    %52 = vector.shape_cast %51 : vector<1x1x8x8xbf16> to vector<8x8xbf16>
    %53 = vector.shape_cast %50 : vector<8x8xbf16> to vector<1x1x8x8xbf16>
    tpu.vector_store %arg7[%c0_28, %c1_29, %c0_30, %c0_31], %53 {strides = array<i32>} : memref<1x4x8x8xbf16, #tpu.memory_space<vmem>>, vector<1x1x8x8xbf16>,
    %54 = vector.extract_strided_slice %28 {offsets = [0, 72], sizes = [8, 8], strides = [1, 1]} : vector<8x96xf32> to vector<8x8xf32>
    %55 = arith.truncf %54 : vector<8x8xf32> to vector<8x8xbf16>
    %c0_32 = arith.constant 0 : index
    %c1_33 = arith.constant 1 : index
    %c0_34 = arith.constant 0 : index
    %c0_35 = arith.constant 0 : index
    %56 = vector.load %arg8[%c0_32, %c1_33, %c0_34, %c0_35] : memref<1x4x8x8xbf16, #tpu.memory_space<vmem>>, vector<1x1x8x8xbf16>
    %57 = vector.shape_cast %56 : vector<1x1x8x8xbf16> to vector<8x8xbf16>
    %58 = vector.shape_cast %55 : vector<8x8xbf16> to vector<1x1x8x8xbf16>
    tpu.vector_store %arg8[%c0_32, %c1_33, %c0_34, %c0_35], %58 {strides = array<i32>} : memref<1x4x8x8xbf16, #tpu.memory_space<vmem>>, vector<1x1x8x8xbf16>,
    %59 = vector.extract_strided_slice %28 {offsets = [0, 16], sizes = [8, 8], strides = [1, 1]} : vector<8x96xf32> to vector<8x8xf32>
    %60 = arith.truncf %59 : vector<8x8xf32> to vector<8x8xbf16>
    %c0_36 = arith.constant 0 : index
    %c2 = arith.constant 2 : index
    %c0_37 = arith.constant 0 : index
    %c0_38 = arith.constant 0 : index
    %61 = vector.load %arg6[%c0_36, %c2, %c0_37, %c0_38] : memref<1x4x8x8xbf16, #tpu.memory_space<vmem>>, vector<1x1x8x8xbf16>
    %62 = vector.shape_cast %61 : vector<1x1x8x8xbf16> to vector<8x8xbf16>
    %63 = vector.shape_cast %60 : vector<8x8xbf16> to vector<1x1x8x8xbf16>
    tpu.vector_store %arg6[%c0_36, %c2, %c0_37, %c0_38], %63 {strides = array<i32>} : memref<1x4x8x8xbf16, #tpu.memory_space<vmem>>, vector<1x1x8x8xbf16>,
    %64 = vector.extract_strided_slice %28 {offsets = [0, 48], sizes = [8, 8], strides = [1, 1]} : vector<8x96xf32> to vector<8x8xf32>
    %65 = arith.truncf %64 : vector<8x8xf32> to vector<8x8xbf16>
    %c0_39 = arith.constant 0 : index
    %c2_40 = arith.constant 2 : index
    %c0_41 = arith.constant 0 : index
    %c0_42 = arith.constant 0 : index
    %66 = vector.load %arg7[%c0_39, %c2_40, %c0_41, %c0_42] : memref<1x4x8x8xbf16, #tpu.memory_space<vmem>>, vector<1x1x8x8xbf16>
    %67 = vector.shape_cast %66 : vector<1x1x8x8xbf16> to vector<8x8xbf16>
    %68 = vector.shape_cast %65 : vector<8x8xbf16> to vector<1x1x8x8xbf16>
    tpu.vector_store %arg7[%c0_39, %c2_40, %c0_41, %c0_42], %68 {strides = array<i32>} : memref<1x4x8x8xbf16, #tpu.memory_space<vmem>>, vector<1x1x8x8xbf16>,
    %69 = vector.extract_strided_slice %28 {offsets = [0, 80], sizes = [8, 8], strides = [1, 1]} : vector<8x96xf32> to vector<8x8xf32>
    %70 = arith.truncf %69 : vector<8x8xf32> to vector<8x8xbf16>
    %c0_43 = arith.constant 0 : index
    %c2_44 = arith.constant 2 : index
    %c0_45 = arith.constant 0 : index
    %c0_46 = arith.constant 0 : index
    %71 = vector.load %arg8[%c0_43, %c2_44, %c0_45, %c0_46] : memref<1x4x8x8xbf16, #tpu.memory_space<vmem>>, vector<1x1x8x8xbf16>
    %72 = vector.shape_cast %71 : vector<1x1x8x8xbf16> to vector<8x8xbf16>
    %73 = vector.shape_cast %70 : vector<8x8xbf16> to vector<1x1x8x8xbf16>
    tpu.vector_store %arg8[%c0_43, %c2_44, %c0_45, %c0_46], %73 {strides = array<i32>} : memref<1x4x8x8xbf16, #tpu.memory_space<vmem>>, vector<1x1x8x8xbf16>,
    %74 = vector.extract_strided_slice %28 {offsets = [0, 24], sizes = [8, 8], strides = [1, 1]} : vector<8x96xf32> to vector<8x8xf32>
    %75 = arith.truncf %74 : vector<8x8xf32> to vector<8x8xbf16>
    %c0_47 = arith.constant 0 : index
    %c3 = arith.constant 3 : index
    %c0_48 = arith.constant 0 : index
    %c0_49 = arith.constant 0 : index
    %76 = vector.load %arg6[%c0_47, %c3, %c0_48, %c0_49] : memref<1x4x8x8xbf16, #tpu.memory_space<vmem>>, vector<1x1x8x8xbf16>
    %77 = vector.shape_cast %76 : vector<1x1x8x8xbf16> to vector<8x8xbf16>
    %78 = vector.shape_cast %75 : vector<8x8xbf16> to vector<1x1x8x8xbf16>
    tpu.vector_store %arg6[%c0_47, %c3, %c0_48, %c0_49], %78 {strides = array<i32>} : memref<1x4x8x8xbf16, #tpu.memory_space<vmem>>, vector<1x1x8x8xbf16>,
    %79 = vector.extract_strided_slice %28 {offsets = [0, 56], sizes = [8, 8], strides = [1, 1]} : vector<8x96xf32> to vector<8x8xf32>
    %80 = arith.truncf %79 : vector<8x8xf32> to vector<8x8xbf16>
    %c0_50 = arith.constant 0 : index
    %c3_51 = arith.constant 3 : index
    %c0_52 = arith.constant 0 : index
    %c0_53 = arith.constant 0 : index
    %81 = vector.load %arg7[%c0_50, %c3_51, %c0_52, %c0_53] : memref<1x4x8x8xbf16, #tpu.memory_space<vmem>>, vector<1x1x8x8xbf16>
    %82 = vector.shape_cast %81 : vector<1x1x8x8xbf16> to vector<8x8xbf16>
    %83 = vector.shape_cast %80 : vector<8x8xbf16> to vector<1x1x8x8xbf16>
    tpu.vector_store %arg7[%c0_50, %c3_51, %c0_52, %c0_53], %83 {strides = array<i32>} : memref<1x4x8x8xbf16, #tpu.memory_space<vmem>>, vector<1x1x8x8xbf16>,
    %84 = vector.extract_strided_slice %28 {offsets = [0, 88], sizes = [8, 8], strides = [1, 1]} : vector<8x96xf32> to vector<8x8xf32>
    %85 = arith.truncf %84 : vector<8x8xf32> to vector<8x8xbf16>
    %c0_54 = arith.constant 0 : index
    %c3_55 = arith.constant 3 : index
    %c0_56 = arith.constant 0 : index
    %c0_57 = arith.constant 0 : index
    %86 = vector.load %arg8[%c0_54, %c3_55, %c0_56, %c0_57] : memref<1x4x8x8xbf16, #tpu.memory_space<vmem>>, vector<1x1x8x8xbf16>
    %87 = vector.shape_cast %86 : vector<1x1x8x8xbf16> to vector<8x8xbf16>
    %88 = vector.shape_cast %85 : vector<8x8xbf16> to vector<1x1x8x8xbf16>
    tpu.vector_store %arg8[%c0_54, %c3_55, %c0_56, %c0_57], %88 {strides = array<i32>} : memref<1x4x8x8xbf16, #tpu.memory_space<vmem>>, vector<1x1x8x8xbf16>,
    return
  }
  func.func @transform_0(%arg0: i32, %arg1: i32) -> (i32, i32, i32) {
    %c0_i32 = arith.constant 0 : i32
    %c0_i32_0 = arith.constant 0 : i32
    return %arg0, %arg1, %c0_i32 : i32, i32, i32
  }
  func.func @transform_1(%arg0: i32, %arg1: i32) -> (i32, i32) {
    %c0_i32 = arith.constant 0 : i32
    %c0_i32_0 = arith.constant 0 : i32
    %c0_i32_1 = arith.constant 0 : i32
    return %c0_i32, %c0_i32_0 : i32, i32
  }
  func.func @transform_2(%arg0: i32, %arg1: i32) -> (i32, i32) {
    %c0_i32 = arith.constant 0 : i32
    %c0_i32_0 = arith.constant 0 : i32
    %c0_i32_1 = arith.constant 0 : i32
    return %c0_i32, %c0_i32_0 : i32, i32
  }
  func.func @transform_3(%arg0: i32, %arg1: i32) -> (i32, i32) {
    %c0_i32 = arith.constant 0 : i32
    %c0_i32_0 = arith.constant 0 : i32
    %c0_i32_1 = arith.constant 0 : i32
    return %c0_i32, %c0_i32_0 : i32, i32
  }
  func.func @transform_4(%arg0: i32, %arg1: i32) -> (i32, i32, i32, i32) {
    %c0_i32 = arith.constant 0 : i32
    %c0_i32_0 = arith.constant 0 : i32
    %c0_i32_1 = arith.constant 0 : i32
    return %arg0, %c0_i32, %arg1, %c0_i32_0 : i32, i32, i32, i32
  }
  func.func @transform_5(%arg0: i32, %arg1: i32) -> (i32, i32, i32, i32) {
    %c0_i32 = arith.constant 0 : i32
    %c0_i32_0 = arith.constant 0 : i32
    %c0_i32_1 = arith.constant 0 : i32
    return %arg0, %c0_i32, %arg1, %c0_i32_0 : i32, i32, i32, i32
  }
  func.func @transform_6(%arg0: i32, %arg1: i32) -> (i32, i32, i32, i32) {
    %c0_i32 = arith.constant 0 : i32
    %c0_i32_0 = arith.constant 0 : i32
    %c0_i32_1 = arith.constant 0 : i32
    return %arg0, %c0_i32, %arg1, %c0_i32_0 : i32, i32, i32, i32
  }
}

module attributes {stable_mosaic.version = 11 : i64} {
  func.func @lnf_head_kernel(%arg0: i32, %arg1: i32, %arg2: memref<16x32xf32, #tpu.memory_space<vmem>>, %arg3: memref<1x32xf32, #tpu.memory_space<vmem>>, %arg4: memref<1x32xf32, #tpu.memory_space<vmem>>, %arg5: memref<32x256xbf16, #tpu.memory_space<vmem>>, %arg6: memref<16x256xf32, #tpu.memory_space<vmem>>, %arg7: memref<16x32xf32, #tpu.memory_space<vmem>>, %arg8: memref<16x32xbf16, #tpu.memory_space<vmem>>) attributes {dimension_semantics = [#tpu.dimension_semantics<parallel>, #tpu.dimension_semantics<arbitrary>], iteration_bounds = array<i64: 1, 1>, scalar_prefetch = 0 : i64, scratch_operands = 1 : i64, tpu.core_type = #tpu.core_type<tc>, window_params = [{transform_indices = @transform_0, window_bounds = array<i64: 16, 32>}, {pipeline_mode = #tpu.pipeline_mode<synchronous>, transform_indices = @transform_1, window_bounds = array<i64: 1, 32>}, {pipeline_mode = #tpu.pipeline_mode<synchronous>, transform_indices = @transform_2, window_bounds = array<i64: 1, 32>}, {transform_indices = @transform_3, window_bounds = array<i64: 32, 256>}, {transform_indices = @transform_4, window_bounds = array<i64: 16, 256>}, {transform_indices = @transform_5, window_bounds = array<i64: 16, 32>}]} {
    %c0_i32 = arith.constant 0 : i32
    %0 = arith.cmpi eq, %arg1, %c0_i32 : i32
    %1 = arith.extui %0 : i1 to i32
    %c0_i32_0 = arith.constant 0 : i32
    %2 = arith.cmpi ne, %1, %c0_i32_0 : i32
    scf.if %2 {
      %c0_6 = arith.constant 0 : index
      %c0_7 = arith.constant 0 : index
      %7 = vector.load %arg2[%c0_6, %c0_7] : memref<16x32xf32, #tpu.memory_space<vmem>>, vector<16x32xf32>
      %c0_8 = arith.constant 0 : index
      %c0_9 = arith.constant 0 : index
      %8 = vector.load %arg3[%c0_8, %c0_9] : memref<1x32xf32, #tpu.memory_space<vmem>>, vector<1x32xf32>
      %c0_10 = arith.constant 0 : index
      %c0_11 = arith.constant 0 : index
      %9 = vector.load %arg4[%c0_10, %c0_11] : memref<1x32xf32, #tpu.memory_space<vmem>>, vector<1x32xf32>
      %cst_12 = arith.constant dense<0.000000e+00> : vector<16xf32>
      %10 = vector.multi_reduction <add>, %7, %cst_12 [1] : vector<16x32xf32> to vector<16xf32>
      %11 = vector.shape_cast %10 : vector<16xf32> to vector<16x1xf32>
      %cst_13 = arith.constant 3.200000e+01 : f32
      %12 = vector.broadcast %cst_13 : f32 to vector<16x1xf32>
      %13 = arith.divf %11, %12 : vector<16x1xf32>
      %14 = vector.broadcast %13 : vector<16x1xf32> to vector<16x32xf32>
      %15 = arith.subf %7, %14 : vector<16x32xf32>
      %16 = arith.mulf %15, %15 : vector<16x32xf32>
      %cst_14 = arith.constant dense<0.000000e+00> : vector<16xf32>
      %17 = vector.multi_reduction <add>, %16, %cst_14 [1] : vector<16x32xf32> to vector<16xf32>
      %18 = vector.shape_cast %17 : vector<16xf32> to vector<16x1xf32>
      %cst_15 = arith.constant 3.200000e+01 : f32
      %19 = vector.broadcast %cst_15 : f32 to vector<16x1xf32>
      %20 = arith.divf %18, %19 : vector<16x1xf32>
      %21 = vector.broadcast %13 : vector<16x1xf32> to vector<16x32xf32>
      %22 = arith.subf %7, %21 : vector<16x32xf32>
      %cst_16 = arith.constant 9.99999974E-6 : f32
      %23 = vector.broadcast %cst_16 : f32 to vector<16x1xf32>
      %24 = arith.addf %20, %23 : vector<16x1xf32>
      %25 = math.rsqrt %24 : vector<16x1xf32>
      %26 = vector.broadcast %25 : vector<16x1xf32> to vector<16x32xf32>
      %27 = arith.mulf %22, %26 : vector<16x32xf32>
      %28 = vector.broadcast %8 : vector<1x32xf32> to vector<16x32xf32>
      %29 = arith.mulf %27, %28 : vector<16x32xf32>
      %30 = vector.broadcast %9 : vector<1x32xf32> to vector<16x32xf32>
      %31 = arith.addf %29, %30 : vector<16x32xf32>
      %c0_17 = arith.constant 0 : index
      %c0_18 = arith.constant 0 : index
      %32 = vector.load %arg7[%c0_17, %c0_18] : memref<16x32xf32, #tpu.memory_space<vmem>>, vector<16x32xf32>
      tpu.vector_store %arg7[%c0_17, %c0_18], %31 {strides = array<i32>} : memref<16x32xf32, #tpu.memory_space<vmem>>, vector<16x32xf32>,
      %33 = arith.truncf %31 : vector<16x32xf32> to vector<16x32xbf16>
      %c0_19 = arith.constant 0 : index
      %c0_20 = arith.constant 0 : index
      %34 = vector.load %arg8[%c0_19, %c0_20] : memref<16x32xbf16, #tpu.memory_space<vmem>>, vector<16x32xbf16>
      tpu.vector_store %arg8[%c0_19, %c0_20], %33 {strides = array<i32>} : memref<16x32xbf16, #tpu.memory_space<vmem>>, vector<16x32xbf16>,
    } else {
    }
    %c0 = arith.constant 0 : index
    %c0_1 = arith.constant 0 : index
    %3 = vector.load %arg8[%c0, %c0_1] : memref<16x32xbf16, #tpu.memory_space<vmem>>, vector<16x32xbf16>
    %c0_2 = arith.constant 0 : index
    %c0_3 = arith.constant 0 : index
    %4 = vector.load %arg5[%c0_2, %c0_3] : memref<32x256xbf16, #tpu.memory_space<vmem>>, vector<32x256xbf16>
    %cst = arith.constant dense<0.000000e+00> : vector<16x256xf32>
    %5 = tpu.matmul %3, %4, %cst {dimension_numbers = #tpu.dot_dimension_numbers<[1], [0], [0], [1], [0, 0, 1, 1], [], []>} : vector<16x32xbf16>, vector<32x256xbf16>, vector<16x256xf32> -> vector<16x256xf32>
    %c0_4 = arith.constant 0 : index
    %c0_5 = arith.constant 0 : index
    %6 = vector.load %arg6[%c0_4, %c0_5] : memref<16x256xf32, #tpu.memory_space<vmem>>, vector<16x256xf32>
    tpu.vector_store %arg6[%c0_4, %c0_5], %5 {strides = array<i32>} : memref<16x256xf32, #tpu.memory_space<vmem>>, vector<16x256xf32>,
    return
  }
  func.func @transform_0(%arg0: i32, %arg1: i32) -> (i32, i32) {
    %c0_i32 = arith.constant 0 : i32
    %c0_i32_0 = arith.constant 0 : i32
    return %arg0, %c0_i32 : i32, i32
  }
  func.func @transform_1(%arg0: i32, %arg1: i32) -> (i32, i32) {
    %c0_i32 = arith.constant 0 : i32
    %c0_i32_0 = arith.constant 0 : i32
    %c0_i32_1 = arith.constant 0 : i32
    return %c0_i32, %c0_i32_0 : i32, i32
  }
  func.func @transform_2(%arg0: i32, %arg1: i32) -> (i32, i32) {
    %c0_i32 = arith.constant 0 : i32
    %c0_i32_0 = arith.constant 0 : i32
    %c0_i32_1 = arith.constant 0 : i32
    return %c0_i32, %c0_i32_0 : i32, i32
  }
  func.func @transform_3(%arg0: i32, %arg1: i32) -> (i32, i32) {
    %c0_i32 = arith.constant 0 : i32
    %c0_i32_0 = arith.constant 0 : i32
    return %c0_i32, %arg1 : i32, i32
  }
  func.func @transform_4(%arg0: i32, %arg1: i32) -> (i32, i32) {
    %c0_i32 = arith.constant 0 : i32
    return %arg0, %arg1 : i32, i32
  }
  func.func @transform_5(%arg0: i32, %arg1: i32) -> (i32, i32) {
    %c0_i32 = arith.constant 0 : i32
    %c0_i32_0 = arith.constant 0 : i32
    return %arg0, %c0_i32 : i32, i32
  }
}

</mosaic_0001>

<llo_original>
// kernel: tpu_custom_call.1
$region0: #{tpu_custom_call.1}
  #allocation0 [shape = 'u32[]', space=smem, size = 0x4, offset = 0x4, fixed_abs, tag = 'smem constant byte address 0x4 - core index']
  #allocation1 [shape = 'u32[144,128]{1,0:T(1,128)}', space=vmem, size = 0x12000, scoped, tag = 'internal scratch']
  %s0 = inlined_call_operand.hbm [shape: f32[8,128], index: 0, kind: input, shape index: {}]
  %s1 = inlined_call_operand.hbm [shape: f32[8,128], index: 1, kind: output, shape index: {}]
  %s2 = sld [smem:[#allocation0]]
  $region41: #{tpu_custom_call.1} parent=0
    _
  %s4 = ssub.s32 1, %s2
  %s5 = scalar_select 0, %s4, %s2
  $region1: #{tpu_custom_call.1} parent=0
    #allocation2 [shape = 'u8[4096]{0}', space=vmem, size = 0x1000, scoped, tag = 'input window, operand 0, single buffered']
    #allocation3 [shape = 's32[2]{0}', space=sflag, size = 0x8, scoped, tag = 'scoped memory for tpu_custom_call.1']
    #allocation4 [shape = 's32[2]{0}', space=sflag, size = 0x8, scoped, tag = 'scoped memory for tpu_custom_call.1']
    #allocation5 [shape = 'u8[4096]{0}', space=vmem, size = 0x1000, scoped, tag = 'output window, operand 0, single buffered']
    %6 = vsyncpa [#allocation3], 0
    %7 = vsyncpa [#allocation4], 0
    loop: start=0, step=1, limit=4
    $region2: #{tpu_custom_call.1} parent=1 // loop_pre_header
      _
    $region3: #{tpu_custom_call.1} parent=1 // loop_header
      %s9 = sphi 0, %s13
      %p10 = scmp.ge.s32.totalorder %s9, 4
      %s17 = sphi 0, %s17
      %s19 = sphi 0, %s17
      %s20 = sphi 0, %s19
      %s34 = sphi 0, %s20
      %s38 = sphi 0, %s38
      %s40 = sphi 0, %s38
      %s41 = sphi 0, %s40
      %s55 = sphi 0, %s41
    $region4: #{tpu_custom_call.1} parent=1 // loop_header_branch
      %12 = sbr.rel (%p10) target = $region8
    $region5: #{tpu_custom_call.1} parent=1 // loop_body
      %s14 = ssub.s32 %s9, 1
      %s15 = ssub.s32 %s9, 2
      %s16 = sadd.s32 %s9, 1
      %s18 = sadd.s32 %s17, 1
      %p21 = scmp.eq.s32.totalorder %s9, 1
      %p22 = scmp.ne.s32.totalorder %s17, %s19
      %p23 = scmp.eq.s32.totalorder %s9, 0
      %p24 = por %p22, %p23
      %p25 = scmp.ne.s32.totalorder %s17, %s19
      %p26 = scmp.eq.s32.totalorder %s14, 1
      %p27 = por %p25, %p26
      %p28 = scmp.ne.s32.totalorder %s19, %s20
      %p29 = scmp.eq.s32.totalorder %s14, 0
      %p30 = por %p28, %p29
      %p31 = scmp.ne.s32.totalorder %s19, %s20
      %p32 = scmp.eq.s32.totalorder %s15, 1
      %p33 = por %p31, %p32
      %p35 = scmp.ne.s32.totalorder %s20, %s34
      %p36 = scmp.eq.s32.totalorder %s15, 0
      %p37 = por %p35, %p36
      %s39 = sadd.s32 %s38, 1
      %p42 = scmp.eq.s32.totalorder %s9, 1
      %p43 = scmp.ne.s32.totalorder %s38, %s40
      %p44 = scmp.eq.s32.totalorder %s9, 0
      %p45 = por %p43, %p44
      %p46 = scmp.ne.s32.totalorder %s38, %s40
      %p47 = scmp.eq.s32.totalorder %s14, 1
      %p48 = por %p46, %p47
      %p49 = scmp.ne.s32.totalorder %s40, %s41
      %p50 = scmp.eq.s32.totalorder %s14, 0
      %p51 = por %p49, %p50
      %p52 = scmp.ne.s32.totalorder %s40, %s41
      %p53 = scmp.eq.s32.totalorder %s15, 1
      %p54 = por %p52, %p53
      %p56 = scmp.ne.s32.totalorder %s41, %s55
      %p57 = scmp.eq.s32.totalorder %s15, 0
      %p58 = por %p56, %p57
      %p59 = scmp.le.s32.totalorder 1, %s9
      %p60 = scmp.lt.s32.totalorder %s9, 3
      %p61 = pnand %p59, %p60
      %p62 = pneg %p61
      // Predicated region
      $region9: #{tpu_custom_call.1} parent=5 // pred_check
        _
      $region10: #{tpu_custom_call.1} parent=5 // pred_check_branch
        %64 = sbr.rel (%p61) target = $region12
      $region11: #{tpu_custom_call.1} parent=5 // pred_region
        %s65 = ssub.s32 %s9, 1
        // Predicated region
        $region13: #{tpu_custom_call.1} parent=11 // pred_check
          %p66 = pneg %p30
        $region14: #{tpu_custom_call.1} parent=11 // pred_check_branch
          %68 = sbr.rel (%p66) target = $region16
        $region15: #{tpu_custom_call.1} parent=11 // pred_region
          %s70 = ssub.s32 128, 128
          %71 = vsyncadd [#allocation3], %s70
          %s73 = sshll.u32 [#allocation2], 4
          %s74 = int_to_ptr.vmem [resolvable:$true] %s73
          %76 = dma.hbm_to_vmem [thread:$0]  %s0, 128, %s74, [#allocation3]
        $region16: #{tpu_custom_call.1} parent=11 // pred_fallthru
          _
      $region12: #{tpu_custom_call.1} parent=5 // pred_fallthru
        _
      %p77 = scmp.lt.s32.totalorder %s9, 2
      // Predicated region
      $region17: #{tpu_custom_call.1} parent=5 // pred_check
        %p78 = pneg %p77
      $region18: #{tpu_custom_call.1} parent=5 // pred_check_branch
        %80 = sbr.rel (%p78) target = $region20
      $region19: #{tpu_custom_call.1} parent=5 // pred_region
        _
      $region20: #{tpu_custom_call.1} parent=5 // pred_fallthru
        _
      %p81 = scmp.le.s32.totalorder 1, %s9
      %p82 = scmp.lt.s32.totalorder %s9, 3
      %p83 = pnand %p81, %p82
      %p84 = pneg %p83
      // Predicated region
      $region21: #{tpu_custom_call.1} parent=5 // pred_check
        _
      $region22: #{tpu_custom_call.1} parent=5 // pred_check_branch
        %86 = sbr.rel (%p83) target = $region24
      $region23: #{tpu_custom_call.1} parent=5 // pred_region
        %s87 = ssub.s32 %s9, 1
        // Predicated region
        $region25: #{tpu_custom_call.1} parent=23 // pred_check
          %p88 = pneg %p30
        $region26: #{tpu_custom_call.1} parent=23 // pred_check_branch
          %90 = sbr.rel (%p88) target = $region28
        $region27: #{tpu_custom_call.1} parent=23 // pred_region
          %91 = dma.done [#allocation3], 128
        $region28: #{tpu_custom_call.1} parent=23 // pred_fallthru
          _
        %p92 = pneg %p30
        %p93 = pneg %p27
        %p94 = pneg %p51
        %p95 = pneg %p48
        %v96 = vld [vmem:[#allocation2] sm:$0xff]
        %v97 = vadd.f32 %v96, 1.0
        %98 = vst [vmem:[#allocation5] sm:$0xff] %v97
        // Predicated region
        $region29: #{tpu_custom_call.1} parent=23 // pred_check
          %p99 = pneg %p48
        $region30: #{tpu_custom_call.1} parent=23 // pred_check_branch
          %101 = sbr.rel (%p99) target = $region32
        $region31: #{tpu_custom_call.1} parent=23 // pred_region
          %s103 = ssub.s32 128, 128
          %104 = vsyncadd [#allocation4], %s103
          %s106 = sshll.u32 [#allocation5], 4
          %s107 = int_to_ptr.vmem [resolvable:$true] %s106
          %109 = dma.vmem_to_hbm [thread:$0]  %s107, 128, %s1, [#allocation4]
        $region32: #{tpu_custom_call.1} parent=23 // pred_fallthru
          _
        // Predicated region
        $region33: #{tpu_custom_call.1} parent=23 // pred_check
          %p110 = pneg %p48
        $region34: #{tpu_custom_call.1} parent=23 // pred_check_branch
          %112 = sbr.rel (%p110) target = $region36
        $region35: #{tpu_custom_call.1} parent=23 // pred_region
          %113 = dma.done [#allocation4], 128
        $region36: #{tpu_custom_call.1} parent=23 // pred_fallthru
          _
      $region24: #{tpu_custom_call.1} parent=5 // pred_fallthru
        _
      %p114 = scmp.le.s32.totalorder 2, %s9
      // Predicated region
      $region37: #{tpu_custom_call.1} parent=5 // pred_check
        %p115 = pneg %p114
      $region38: #{tpu_custom_call.1} parent=5 // pred_check_branch
        %117 = sbr.rel (%p115) target = $region40
      $region39: #{tpu_custom_call.1} parent=5 // pred_region
        %s118 = ssub.s32 %s9, 2
      $region40: #{tpu_custom_call.1} parent=5 // pred_fallthru
        _
    $region6: #{tpu_custom_call.1} parent=1 // loop_footer
      %s13 = sadd.s32 1, %s9
    $region7: #{tpu_custom_call.1} parent=1 // loop_footer_branch
      %8 = sbr.rel target = $region3
    $region8: #{tpu_custom_call.1} parent=1 // loop_exit
      _
    %119 = vsyncpa [#allocation3], 1
    %s120 = scalar_lea.sflag [#allocation3], 1
    %121 = vsyncpa %s120, 1
    %122 = vsyncpa [#allocation4], 1
    %s123 = scalar_lea.sflag [#allocation4], 1
    %124 = vsyncpa %s123, 1

// kernel: gpt2_forward.9
$region0: #{gpt2_forward.9}
  #allocation0 [shape = 'u32[]', space=smem, size = 0x4, offset = 0x4, fixed_abs, tag = 'smem constant byte address 0x4 - core index']
  #allocation1 [shape = 'u32[144,128]{1,0:T(1,128)}', space=vmem, size = 0x12000, scoped, tag = 'internal scratch']
  %s0 = inlined_call_operand.vmem [shape: f32[2,8,32], index: 0, kind: input, shape index: {}, may-alias: {0,9}]
  %s1 = inlined_call_operand.vmem [shape: bf16[2,8,32], index: 1, kind: input, shape index: {}]
  %s2 = inlined_call_operand.vmem [shape: bf16[32,32], index: 2, kind: input, shape index: {}]
  %s3 = inlined_call_operand.vmem [shape: f32[1,32], index: 3, kind: input, shape index: {}]
  %s4 = inlined_call_operand.vmem [shape: f32[1,32], index: 4, kind: input, shape index: {}]
  %s5 = inlined_call_operand.vmem [shape: bf16[32,128], index: 5, kind: input, shape index: {}]
  %s6 = inlined_call_operand.vmem [shape: f32[1,128], index: 6, kind: input, shape index: {}]
  %s7 = inlined_call_operand.vmem [shape: bf16[128,32], index: 7, kind: input, shape index: {}]
  %s8 = inlined_call_operand.vmem [shape: f32[1,32], index: 8, kind: input, shape index: {}]
  %s9 = inlined_call_operand.vmem [shape: f32[2,8,32], index: 9, kind: output, shape index: {}, may-alias: {0,9}]
  %s10 = sld [smem:[#allocation0]]
  $region69: #{gpt2_forward.9} parent=0
    _
  %s12 = ssub.s32 1, %s10
  %s13 = scalar_select 0, %s12, %s10
  loop: start=0, step=1, limit=4
  $region2: #{gpt2_forward.9} parent=0 // loop_pre_header
    _
  $region3: #{gpt2_forward.9} parent=0 // loop_header
    %s15 = sphi 0, %s19
    %p16 = scmp.ge.s32.totalorder %s15, 4
    %s22 = sphi 0, %s34
    %s23 = sphi 0, %s30
    %s24 = sphi 0, %s22
    %s25 = sphi 0, %s23
    %s26 = sphi 0, %s24
    %s27 = sphi 0, %s25
    %s39 = sphi 0, %s41
    %s42 = sphi 0, %s39
    %s43 = sphi 0, %s42
    %s59 = sphi 0, %s43
    %s67 = sphi 0, %s69
    %s70 = sphi 0, %s67
    %s71 = sphi 0, %s70
    %s87 = sphi 0, %s71
    %s91 = sphi 0, %s91
    %s93 = sphi 0, %s91
    %s94 = sphi 0, %s93
    %s108 = sphi 0, %s94
    %s112 = sphi 0, %s112
    %s114 = sphi 0, %s112
    %s115 = sphi 0, %s114
    %s129 = sphi 0, %s115
    %s133 = sphi 0, %s133
    %s135 = sphi 0, %s133
    %s136 = sphi 0, %s135
    %s150 = sphi 0, %s136
    %s154 = sphi 0, %s154
    %s156 = sphi 0, %s154
    %s157 = sphi 0, %s156
    %s171 = sphi 0, %s157
    %s175 = sphi 0, %s175
    %s177 = sphi 0, %s175
    %s178 = sphi 0, %s177
    %s192 = sphi 0, %s178
    %s196 = sphi 0, %s196
    %s198 = sphi 0, %s196
    %s199 = sphi 0, %s198
    %s213 = sphi 0, %s199
    %s217 = sphi 0, %s217
    %s219 = sphi 0, %s217
    %s220 = sphi 0, %s219
    %s234 = sphi 0, %s220
    %s242 = sphi 0, %s244
    %s245 = sphi 0, %s242
    %s246 = sphi 0, %s245
    %s262 = sphi 0, %s246
  $region4: #{gpt2_forward.9} parent=0 // loop_header_branch
    %18 = sbr.rel (%p16) target = $region8
  $region5: #{gpt2_forward.9} parent=0 // loop_body
    %s20 = ssub.s32 %s15, 1
    %s21 = ssub.s32 %s15, 2
    %s28 = sadd.s32 1, %s23
    %p29 = scmp.ge.s32.totalorder %s28, 1
    %s30 = scalar_select %p29, 0, %s28
    %s31 = sadd.s32 1, %s22
    %s32 = scalar_select %p29, %s31, %s22
    %p33 = scmp.ge.s32.totalorder %s32, 2
    %s34 = scalar_select %p33, 0, %s32
    %s35 = ssub.s32 %s22, %s34
    %s36 = ssub.s32 %s23, %s30
    %s37 = sor.u32 %s35, %s36
    %p38 = scmp.eq.s32.totalorder %s37, 0
    %s40 = sadd.s32 %s39, 1
    %s41 = scalar_select %p38, %s39, %s40
    %p44 = pneg %p38
    %p45 = scmp.eq.s32.totalorder %s15, 1
    %p46 = por %p44, %p45
    %p47 = scmp.ne.s32.totalorder %s39, %s42
    %p48 = scmp.eq.s32.totalorder %s15, 0
    %p49 = por %p47, %p48
    %p50 = scmp.ne.s32.totalorder %s39, %s42
    %p51 = scmp.eq.s32.totalorder %s20, 1
    %p52 = por %p50, %p51
    %p53 = scmp.ne.s32.totalorder %s42, %s43
    %p54 = scmp.eq.s32.totalorder %s20, 0
    %p55 = por %p53, %p54
    %p56 = scmp.ne.s32.totalorder %s42, %s43
    %p57 = scmp.eq.s32.totalorder %s21, 1
    %p58 = por %p56, %p57
    %p60 = scmp.ne.s32.totalorder %s43, %s59
    %p61 = scmp.eq.s32.totalorder %s21, 0
    %p62 = por %p60, %p61
    %s63 = ssub.s32 %s22, %s34
    %s64 = ssub.s32 %s23, %s30
    %s65 = sor.u32 %s63, %s64
    %p66 = scmp.eq.s32.totalorder %s65, 0
    %s68 = sadd.s32 %s67, 1
    %s69 = scalar_select %p66, %s67, %s68
    %p72 = pneg %p66
    %p73 = scmp.eq.s32.totalorder %s15, 1
    %p74 = por %p72, %p73
    %p75 = scmp.ne.s32.totalorder %s67, %s70
    %p76 = scmp.eq.s32.totalorder %s15, 0
    %p77 = por %p75, %p76
    %p78 = scmp.ne.s32.totalorder %s67, %s70
    %p79 = scmp.eq.s32.totalorder %s20, 1
    %p80 = por %p78, %p79
    %p81 = scmp.ne.s32.totalorder %s70, %s71
    %p82 = scmp.eq.s32.totalorder %s20, 0
    %p83 = por %p81, %p82
    %p84 = scmp.ne.s32.totalorder %s70, %s71
    %p85 = scmp.eq.s32.totalorder %s21, 1
    %p86 = por %p84, %p85
    %p88 = scmp.ne.s32.totalorder %s71, %s87
    %p89 = scmp.eq.s32.totalorder %s21, 0
    %p90 = por %p88, %p89
    %s92 = sadd.s32 %s91, 1
    %p95 = scmp.eq.s32.totalorder %s15, 1
    %p96 = scmp.ne.s32.totalorder %s91, %s93
    %p97 = scmp.eq.s32.totalorder %s15, 0
    %p98 = por %p96, %p97
    %p99 = scmp.ne.s32.totalorder %s91, %s93
    %p100 = scmp.eq.s32.totalorder %s20, 1
    %p101 = por %p99, %p100
    %p102 = scmp.ne.s32.totalorder %s93, %s94
    %p103 = scmp.eq.s32.totalorder %s20, 0
    %p104 = por %p102, %p103
    %p105 = scmp.ne.s32.totalorder %s93, %s94
    %p106 = scmp.eq.s32.totalorder %s21, 1
    %p107 = por %p105, %p106
    %p109 = scmp.ne.s32.totalorder %s94, %s108
    %p110 = scmp.eq.s32.totalorder %s21, 0
    %p111 = por %p109, %p110
    %s113 = sadd.s32 %s112, 1
    %p116 = scmp.eq.s32.totalorder %s15, 1
    %p117 = scmp.ne.s32.totalorder %s112, %s114
    %p118 = scmp.eq.s32.totalorder %s15, 0
    %p119 = por %p117, %p118
    %p120 = scmp.ne.s32.totalorder %s112, %s114
    %p121 = scmp.eq.s32.totalorder %s20, 1
    %p122 = por %p120, %p121
    %p123 = scmp.ne.s32.totalorder %s114, %s115
    %p124 = scmp.eq.s32.totalorder %s20, 0
    %p125 = por %p123, %p124
    %p126 = scmp.ne.s32.totalorder %s114, %s115
    %p127 = scmp.eq.s32.totalorder %s21, 1
    %p128 = por %p126, %p127
    %p130 = scmp.ne.s32.totalorder %s115, %s129
    %p131 = scmp.eq.s32.totalorder %s21, 0
    %p132 = por %p130, %p131
    %s134 = sadd.s32 %s133, 1
    %p137 = scmp.eq.s32.totalorder %s15, 1
    %p138 = scmp.ne.s32.totalorder %s133, %s135
    %p139 = scmp.eq.s32.totalorder %s15, 0
    %p140 = por %p138, %p139
    %p141 = scmp.ne.s32.totalorder %s133, %s135
    %p142 = scmp.eq.s32.totalorder %s20, 1
    %p143 = por %p141, %p142
    %p144 = scmp.ne.s32.totalorder %s135, %s136
    %p145 = scmp.eq.s32.totalorder %s20, 0
    %p146 = por %p144, %p145
    %p147 = scmp.ne.s32.totalorder %s135, %s136
    %p148 = scmp.eq.s32.totalorder %s21, 1
    %p149 = por %p147, %p148
    %p151 = scmp.ne.s32.totalorder %s136, %s150
    %p152 = scmp.eq.s32.totalorder %s21, 0
    %p153 = por %p151, %p152
    %s155 = sadd.s32 %s154, 1
    %p158 = scmp.eq.s32.totalorder %s15, 1
    %p159 = scmp.ne.s32.totalorder %s154, %s156
    %p160 = scmp.eq.s32.totalorder %s15, 0
    %p161 = por %p159, %p160
    %p162 = scmp.ne.s32.totalorder %s154, %s156
    %p163 = scmp.eq.s32.totalorder %s20, 1
    %p164 = por %p162, %p163
    %p165 = scmp.ne.s32.totalorder %s156, %s157
    %p166 = scmp.eq.s32.totalorder %s20, 0
    %p167 = por %p165, %p166
    %p168 = scmp.ne.s32.totalorder %s156, %s157
    %p169 = scmp.eq.s32.totalorder %s21, 1
    %p170 = por %p168, %p169
    %p172 = scmp.ne.s32.totalorder %s157, %s171
    %p173 = scmp.eq.s32.totalorder %s21, 0
    %p174 = por %p172, %p173
    %s176 = sadd.s32 %s175, 1
    %p179 = scmp.eq.s32.totalorder %s15, 1
    %p180 = scmp.ne.s32.totalorder %s175, %s177
    %p181 = scmp.eq.s32.totalorder %s15, 0
    %p182 = por %p180, %p181
    %p183 = scmp.ne.s32.totalorder %s175, %s177
    %p184 = scmp.eq.s32.totalorder %s20, 1
    %p185 = por %p183, %p184
    %p186 = scmp.ne.s32.totalorder %s177, %s178
    %p187 = scmp.eq.s32.totalorder %s20, 0
    %p188 = por %p186, %p187
    %p189 = scmp.ne.s32.totalorder %s177, %s178
    %p190 = scmp.eq.s32.totalorder %s21, 1
    %p191 = por %p189, %p190
    %p193 = scmp.ne.s32.totalorder %s178, %s192
    %p194 = scmp.eq.s32.totalorder %s21, 0
    %p195 = por %p193, %p194
    %s197 = sadd.s32 %s196, 1
    %p200 = scmp.eq.s32.totalorder %s15, 1
    %p201 = scmp.ne.s32.totalorder %s196, %s198
    %p202 = scmp.eq.s32.totalorder %s15, 0
    %p203 = por %p201, %p202
    %p204 = scmp.ne.s32.totalorder %s196, %s198
    %p205 = scmp.eq.s32.totalorder %s20, 1
    %p206 = por %p204, %p205
    %p207 = scmp.ne.s32.totalorder %s198, %s199
    %p208 = scmp.eq.s32.totalorder %s20, 0
    %p209 = por %p207, %p208
    %p210 = scmp.ne.s32.totalorder %s198, %s199
    %p211 = scmp.eq.s32.totalorder %s21, 1
    %p212 = por %p210, %p211
    %p214 = scmp.ne.s32.totalorder %s199, %s213
    %p215 = scmp.eq.s32.totalorder %s21, 0
    %p216 = por %p214, %p215
    %s218 = sadd.s32 %s217, 1
    %p221 = scmp.eq.s32.totalorder %s15, 1
    %p222 = scmp.ne.s32.totalorder %s217, %s219
    %p223 = scmp.eq.s32.totalorder %s15, 0
    %p224 = por %p222, %p223
    %p225 = scmp.ne.s32.totalorder %s217, %s219
    %p226 = scmp.eq.s32.totalorder %s20, 1
    %p227 = por %p225, %p226
    %p228 = scmp.ne.s32.totalorder %s219, %s220
    %p229 = scmp.eq.s32.totalorder %s20, 0
    %p230 = por %p228, %p229
    %p231 = scmp.ne.s32.totalorder %s219, %s220
    %p232 = scmp.eq.s32.totalorder %s21, 1
    %p233 = por %p231, %p232
    %p235 = scmp.ne.s32.totalorder %s220, %s234
    %p236 = scmp.eq.s32.totalorder %s21, 0
    %p237 = por %p235, %p236
    %s238 = ssub.s32 %s22, %s34
    %s239 = ssub.s32 %s23, %s30
    %s240 = sor.u32 %s238, %s239
    %p241 = scmp.eq.s32.totalorder %s240, 0
    %s243 = sadd.s32 %s242, 1
    %s244 = scalar_select %p241, %s242, %s243
    %p247 = pneg %p241
    %p248 = scmp.eq.s32.totalorder %s15, 1
    %p249 = por %p247, %p248
    %p250 = scmp.ne.s32.totalorder %s242, %s245
    %p251 = scmp.eq.s32.totalorder %s15, 0
    %p252 = por %p250, %p251
    %p253 = scmp.ne.s32.totalorder %s242, %s245
    %p254 = scmp.eq.s32.totalorder %s20, 1
    %p255 = por %p253, %p254
    %p256 = scmp.ne.s32.totalorder %s245, %s246
    %p257 = scmp.eq.s32.totalorder %s20, 0
    %p258 = por %p256, %p257
    %p259 = scmp.ne.s32.totalorder %s245, %s246
    %p260 = scmp.eq.s32.totalorder %s21, 1
    %p261 = por %p259, %p260
    %p263 = scmp.ne.s32.totalorder %s246, %s262
    %p264 = scmp.eq.s32.totalorder %s21, 0
    %p265 = por %p263, %p264
    %p266 = scmp.le.s32.totalorder 1, %s15
    %p267 = scmp.lt.s32.totalorder %s15, 3
    %p268 = pnand %p266, %p267
    %p269 = pneg %p268
    // Predicated region
    $region9: #{gpt2_forward.9} parent=5 // pred_check
      _
    $region10: #{gpt2_forward.9} parent=5 // pred_check_branch
      %271 = sbr.rel (%p268) target = $region12
    $region11: #{gpt2_forward.9} parent=5 // pred_region
      %s272 = ssub.s32 %s15, 1
      // Predicated region
      $region13: #{gpt2_forward.9} parent=11 // pred_check
        %p273 = pneg %p104
      $region14: #{gpt2_forward.9} parent=11 // pred_check_branch
        %275 = sbr.rel (%p273) target = $region16
      $region15: #{gpt2_forward.9} parent=11 // pred_region
        _
      $region16: #{gpt2_forward.9} parent=11 // pred_fallthru
        _
      // Predicated region
      $region17: #{gpt2_forward.9} parent=11 // pred_check
        %p276 = pneg %p125
      $region18: #{gpt2_forward.9} parent=11 // pred_check_branch
        %278 = sbr.rel (%p276) target = $region20
      $region19: #{gpt2_forward.9} parent=11 // pred_region
        _
      $region20: #{gpt2_forward.9} parent=11 // pred_fallthru
        _
      // Predicated region
      $region21: #{gpt2_forward.9} parent=11 // pred_check
        %p279 = pneg %p146
      $region22: #{gpt2_forward.9} parent=11 // pred_check_branch
        %281 = sbr.rel (%p279) target = $region24
      $region23: #{gpt2_forward.9} parent=11 // pred_region
        _
      $region24: #{gpt2_forward.9} parent=11 // pred_fallthru
        _
      // Predicated region
      $region25: #{gpt2_forward.9} parent=11 // pred_check
        %p282 = pneg %p167
      $region26: #{gpt2_forward.9} parent=11 // pred_check_branch
        %284 = sbr.rel (%p282) target = $region28
      $region27: #{gpt2_forward.9} parent=11 // pred_region
        _
      $region28: #{gpt2_forward.9} parent=11 // pred_fallthru
        _
      // Predicated region
      $region29: #{gpt2_forward.9} parent=11 // pred_check
        %p285 = pneg %p188
      $region30: #{gpt2_forward.9} parent=11 // pred_check_branch
        %287 = sbr.rel (%p285) target = $region32
      $region31: #{gpt2_forward.9} parent=11 // pred_region
        _
      $region32: #{gpt2_forward.9} parent=11 // pred_fallthru
        _
      // Predicated region
      $region33: #{gpt2_forward.9} parent=11 // pred_check
        %p288 = pneg %p209
      $region34: #{gpt2_forward.9} parent=11 // pred_check_branch
        %290 = sbr.rel (%p288) target = $region36
      $region35: #{gpt2_forward.9} parent=11 // pred_region
        _
      $region36: #{gpt2_forward.9} parent=11 // pred_fallthru
        _
      // Predicated region
      $region37: #{gpt2_forward.9} parent=11 // pred_check
        %p291 = pneg %p230
      $region38: #{gpt2_forward.9} parent=11 // pred_check_branch
        %293 = sbr.rel (%p291) target = $region40
      $region39: #{gpt2_forward.9} parent=11 // pred_region
        _
      $region40: #{gpt2_forward.9} parent=11 // pred_fallthru
        _
    $region12: #{gpt2_forward.9} parent=5 // pred_fallthru
      _
    %p294 = scmp.lt.s32.totalorder %s15, 2
    // Predicated region
    $region41: #{gpt2_forward.9} parent=5 // pred_check
      %p295 = pneg %p294
    $region42: #{gpt2_forward.9} parent=5 // pred_check_branch
      %297 = sbr.rel (%p295) target = $region44
    $region43: #{gpt2_forward.9} parent=5 // pred_region
      // Predicated region
      $region45: #{gpt2_forward.9} parent=43 // pred_check
        %p298 = pneg %p49
      $region46: #{gpt2_forward.9} parent=43 // pred_check_branch
        %300 = sbr.rel (%p298) target = $region48
      $region47: #{gpt2_forward.9} parent=43 // pred_region
        %p301 = scmp.lt.s32.totalorder %s22, 1
        %s302 = scalar_select %p301, %s22, 1
        %p303 = scmp.lt.s32.totalorder %s23, 0
        %s304 = scalar_select %p303, %s23, 0
        %s305 = sadd.s32 %s304, %s302
        %s306 = smul.addr %s305, 8
        %s307 = scalar_lea.vmem %s0, %s306
      $region48: #{gpt2_forward.9} parent=43 // pred_fallthru
        _
      // Predicated region
      $region49: #{gpt2_forward.9} parent=43 // pred_check
        %p308 = pneg %p77
      $region50: #{gpt2_forward.9} parent=43 // pred_check_branch
        %310 = sbr.rel (%p308) target = $region52
      $region51: #{gpt2_forward.9} parent=43 // pred_region
        %p311 = scmp.lt.s32.totalorder %s22, 1
        %s312 = scalar_select %p311, %s22, 1
        %p313 = scmp.lt.s32.totalorder %s23, 0
        %s314 = scalar_select %p313, %s23, 0
        %s315 = sadd.s32 %s314, %s312
        %s316 = smul.addr %s315, 4
        %s317 = scalar_lea.vmem %s1, %s316
      $region52: #{gpt2_forward.9} parent=43 // pred_fallthru
        _
    $region44: #{gpt2_forward.9} parent=5 // pred_fallthru
      _
    %p318 = scmp.le.s32.totalorder 1, %s15
    %p319 = scmp.lt.s32.totalorder %s15, 3
    %p320 = pnand %p318, %p319
    %p321 = pneg %p320
    // Predicated region
    $region53: #{gpt2_forward.9} parent=5 // pred_check
      _
    $region54: #{gpt2_forward.9} parent=5 // pred_check_branch
      %323 = sbr.rel (%p320) target = $region56
    $region55: #{gpt2_forward.9} parent=5 // pred_region
      %s324 = ssub.s32 %s15, 1
      %p325 = scmp.lt.s32.totalorder %s24, 1
      %s326 = scalar_select %p325, %s24, 1
      %p327 = scmp.lt.s32.totalorder %s25, 0
      %s328 = scalar_select %p327, %s25, 0
      %s329 = sadd.s32 %s328, %s326
      %s330 = smul.addr %s329, 8
      %s331 = scalar_lea.vmem %s0, %s330
      %p332 = pneg %p55
      %p333 = pneg %p52
      %p334 = scmp.lt.s32.totalorder %s24, 1
      %s335 = scalar_select %p334, %s24, 1
      %p336 = scmp.lt.s32.totalorder %s25, 0
      %s337 = scalar_select %p336, %s25, 0
      %s338 = sadd.s32 %s337, %s335
      %s339 = smul.addr %s338, 4
      %s340 = scalar_lea.vmem %s1, %s339
      %p341 = pneg %p83
      %p342 = pneg %p80
      %p343 = pneg %p104
      %p344 = pneg %p101
      %p345 = pneg %p125
      %p346 = pneg %p122
      %p347 = pneg %p146
      %p348 = pneg %p143
      %p349 = pneg %p167
      %p350 = pneg %p164
      %p351 = pneg %p188
      %p352 = pneg %p185
      %p353 = pneg %p209
      %p354 = pneg %p206
      %p355 = pneg %p230
      %p356 = pneg %p227
      %p357 = pneg %p258
      %p358 = pneg %p255
      %p359 = scmp.lt.s32.totalorder %s24, 1
      %s360 = scalar_select %p359, %s24, 1
      %p361 = scmp.lt.s32.totalorder %s25, 0
      %s362 = scalar_select %p361, %s25, 0
      %s363 = sadd.s32 %s362, %s360
      %s364 = smul.addr %s363, 8
      %s365 = scalar_lea.vmem %s9, %s364
      %p366 = scmp.lt.s32.totalorder %s24, 1
      %s367 = scalar_select %p366, %s24, 1
      %p368 = scmp.lt.s32.totalorder %s25, 0
      %s369 = scalar_select %p368, %s25, 0
      %s370 = sadd.s32 %s369, %s367
      %s371 = smul.addr %s370, 8
      %s372 = scalar_lea.vmem %s0, %s371
      %p373 = scmp.lt.s32.totalorder %s24, 1
      %s374 = scalar_select %p373, %s24, 1
      %p375 = scmp.lt.s32.totalorder %s25, 0
      %s376 = scalar_select %p375, %s25, 0
      %s377 = sadd.s32 %s376, %s374
      %s378 = smul.addr %s377, 4
      %s379 = scalar_lea.vmem %s1, %s378
      %p380 = scmp.lt.s32.totalorder %s24, 1
      %s381 = scalar_select %p380, %s24, 1
      %p382 = scmp.lt.s32.totalorder %s25, 0
      %s383 = scalar_select %p382, %s25, 0
      %s384 = sadd.s32 %s383, %s381
      %s385 = smul.addr %s384, 8
      %s386 = scalar_lea.vmem %s9, %s385
      %v388 = vld [vmem:[%s372] sm:$0xff]
      %v389 = vld [vmem:[%s379] sm:$0xf]
      %v390 = vld [vmem:[%s2] sm:$0xf]
      %v391 = vld [vmem:[%s2 + $0x4] sm:$0xf]
      %v392 = vld [vmem:[%s2 + $0x8] sm:$0xf]
      %v393 = vld [vmem:[%s2 + $0xc] sm:$0xf]
      %v398 = vunpack.c.l.b16 %v390
      %v399 = vunpack.c.l.b16 %v391
      %v400 = vunpack.c.l.b16 %v392
      %v401 = vunpack.c.l.b16 %v393
      %v402 = vpack.c.b16 %v399, %v398
      %v403 = vpack.c.b16 %v401, %v400
      %vm406 = vcmask 261120
      %v408 = vsel %vm406, %v389, 0
      %410 = vmatprep.subr.bf16.mxu0 0
      %411 = vmatpush1.bf16.msra.mxu0 %v402
      %412 = vmatprep.subr.bf16.mxu0 0
      %413 = vmatpush1.bf16.msra.mxu0 %v403
      %414 = vmatprep.subr.bf16.mxu0 0
      %415 = vmatpush1.bf16.msra.mxu0 0
      %416 = vmatprep.subr.bf16.mxu0 0
      %417 = vmatpush1.bf16.msra.mxu0 0
      %418 = vmatprep.subr.bf16.mxu0 0
      %419 = vmatpush1.bf16.msra.mxu0 0
      %420 = vmatprep.subr.bf16.mxu0 0
      %421 = vmatpush1.bf16.msra.mxu0 0
      %422 = vmatprep.subr.bf16.mxu0 0
      %423 = vmatpush1.bf16.msra.mxu0 0
      %424 = vmatprep.subr.bf16.mxu0 0
      %425 = vmatpush1.bf16.msra.mxu0 0
      %426 = vmatprep.subr.bf16.mxu0 0
      %427 = vmatpush1.bf16.msra.mxu0 0
      %428 = vmatprep.subr.bf16.mxu0 0
      %429 = vmatpush1.bf16.msra.mxu0 0
      %430 = vmatprep.subr.bf16.mxu0 0
      %431 = vmatpush1.bf16.msra.mxu0 0
      %432 = vmatprep.subr.bf16.mxu0 0
      %433 = vmatpush1.bf16.msra.mxu0 0
      %434 = vmatprep.subr.bf16.mxu0 0
      %435 = vmatpush1.bf16.msra.mxu0 0
      %436 = vmatprep.subr.bf16.mxu0 0
      %437 = vmatpush1.bf16.msra.mxu0 0
      %438 = vmatprep.subr.bf16.mxu0 0
      %439 = vmatpush1.bf16.msra.mxu0 0
      %440 = vmatprep.subr.bf16.mxu0 0
      %441 = vmatpush1.bf16.msra.mxu0 0
      %442 = vmatprep.mubr.bf16.mxu0 0
      %443 = vmatmul.mubr.bf16.gmra.mrb[0].mxu0 %v408
      %v444 = vpop.f32.mrb[0].mxu0
      %v445 = vadd.f32 0.0, %v444
      %v446 = vpop.f32.mrb[0].mxu0
      %v447 = vpop.f32.mrb[0].mxu0
      %v448 = vpop.f32.mrb[0].mxu0
      %449 = vdwg.mxu0
      %v450 = vadd.f32 %v388, %v445
      %v451 = vld [vmem:[%s3] sm:$0x1]
      %v452 = vld [vmem:[%s4] sm:$0x1]
      %v453 = vsel %vm406, %v450, 0.0
      %454 = vadd.xlane.f32.xlu0 %v453
      %v455 = vpop.xlane.xlu0 %454
      %v456 = vrcp.pop 32.0
      %v457 = vmul.f32 %v455, %v456
      %v458 = vsub.f32 %v450, %v457
      %v459 = vmul.f32 %v458, %v458
      %v460 = vsel %vm406, %v459, 0.0
      %461 = vadd.xlane.f32.xlu0 %v460
      %v462 = vpop.xlane.xlu0 %461
      %v463 = vmul.f32 %v462, %v456
      %v464 = vadd.f32 %v463, 1e-05
      %v465 = vrsqrt.pop %v464
      %v466 = vmul.f32 %v458, %v465
      %v468 = vlaneseq
      %v469 = vshrl.u32 %v468, 7
      %v470 = vsub.s32 0, %v469
      %v471 = vrot.slane %v451, %v470
      %v473 = vmul.f32 %v466, %v471
      %v475 = vlaneseq
      %v476 = vshrl.u32 %v475, 7
      %v477 = vsub.s32 0, %v476
      %v478 = vrot.slane %v452, %v477
      %v480 = vadd.f32 %v473, %v478
      %v481 = vpack.c.bf16 %v480, %v480
      %v482 = vld [vmem:[%s5] sm:$0xf]
      %v483 = vld [vmem:[%s5 + $0x4] sm:$0xf]
      %v484 = vld [vmem:[%s5 + $0x8] sm:$0xf]
      %v485 = vld [vmem:[%s5 + $0xc] sm:$0xf]
      %v486 = vld [vmem:[%s6] sm:$0x1]
      %v488 = vlaneseq
      %v489 = vshrl.u32 %v488, 7
      %v490 = vsub.s32 0, %v489
      %v491 = vrot.slane %v486, %v490
      %v497 = vunpack.c.l.b16 %v482
      %v498 = vunpack.c.l.b16 %v483
      %v499 = vunpack.c.l.b16 %v484
      %v500 = vunpack.c.l.b16 %v485
      %v501 = vpack.c.b16 %v498, %v497
      %v502 = vpack.c.b16 %v500, %v499
      %v506 = vsel %vm406, %v481, 0
      %508 = vmatprep.subr.bf16.mxu0 0
      %509 = vmatpush1.bf16.msra.mxu0 %v501
      %510 = vmatprep.subr.bf16.mxu0 0
      %511 = vmatpush1.bf16.msra.mxu0 %v502
      %512 = vmatprep.subr.bf16.mxu0 0
      %513 = vmatpush1.bf16.msra.mxu0 0
      %514 = vmatprep.subr.bf16.mxu0 0
      %515 = vmatpush1.bf16.msra.mxu0 0
      %516 = vmatprep.subr.bf16.mxu0 0
      %517 = vmatpush1.bf16.msra.mxu0 0
      %518 = vmatprep.subr.bf16.mxu0 0
      %519 = vmatpush1.bf16.msra.mxu0 0
      %520 = vmatprep.subr.bf16.mxu0 0
      %521 = vmatpush1.bf16.msra.mxu0 0
      %522 = vmatprep.subr.bf16.mxu0 0
      %523 = vmatpush1.bf16.msra.mxu0 0
      %524 = vmatprep.subr.bf16.mxu0 0
      %525 = vmatpush1.bf16.msra.mxu0 0
      %526 = vmatprep.subr.bf16.mxu0 0
      %527 = vmatpush1.bf16.msra.mxu0 0
      %528 = vmatprep.subr.bf16.mxu0 0
      %529 = vmatpush1.bf16.msra.mxu0 0
      %530 = vmatprep.subr.bf16.mxu0 0
      %531 = vmatpush1.bf16.msra.mxu0 0
      %532 = vmatprep.subr.bf16.mxu0 0
      %533 = vmatpush1.bf16.msra.mxu0 0
      %534 = vmatprep.subr.bf16.mxu0 0
      %535 = vmatpush1.bf16.msra.mxu0 0
      %536 = vmatprep.subr.bf16.mxu0 0
      %537 = vmatpush1.bf16.msra.mxu0 0
      %538 = vmatprep.subr.bf16.mxu0 0
      %539 = vmatpush1.bf16.msra.mxu0 0
      %540 = vmatprep.mubr.bf16.mxu0 0
      %541 = vmatmul.mubr.bf16.gmra.mrb[0].mxu0 %v506
      %v542 = vpop.f32.mrb[0].mxu0
      %v543 = vadd.f32 %v491, %v542
      %v544 = vpop.f32.mrb[0].mxu0
      %v545 = vpop.f32.mrb[0].mxu0
      %v546 = vpop.f32.mrb[0].mxu0
      %547 = vdwg.mxu0
      %v548 = vmul.f32 %v543, 0.5
      %v549 = vmul.f32 %v543, %v543
      %v550 = vmul.f32 %v543, %v549
      %v551 = vmul.f32 %v550, 0.044715
      %v552 = vadd.f32 %v543, %v551
      %v553 = vmul.f32 %v552, 0.7978846
      %v554 = vtanh.pop %v553
      %v555 = vadd.f32 %v554, 1.0
      %v556 = vmul.f32 %v548, %v555
      %v557 = vpack.c.bf16 %v556, %v556
      %v558 = vld [vmem:[%s7] sm:$0xf]
      %v559 = vld [vmem:[%s7 + $0x4] sm:$0xf]
      %v560 = vld [vmem:[%s7 + $0x8] sm:$0xf]
      %v561 = vld [vmem:[%s7 + $0xc] sm:$0xf]
      %v562 = vld [vmem:[%s7 + $0x10] sm:$0xf]
      %v563 = vld [vmem:[%s7 + $0x14] sm:$0xf]
      %v564 = vld [vmem:[%s7 + $0x18] sm:$0xf]
      %v565 = vld [vmem:[%s7 + $0x1c] sm:$0xf]
      %v566 = vld [vmem:[%s7 + $0x20] sm:$0xf]
      %v567 = vld [vmem:[%s7 + $0x24] sm:$0xf]
      %v568 = vld [vmem:[%s7 + $0x28] sm:$0xf]
      %v569 = vld [vmem:[%s7 + $0x2c] sm:$0xf]
      %v570 = vld [vmem:[%s7 + $0x30] sm:$0xf]
      %v571 = vld [vmem:[%s7 + $0x34] sm:$0xf]
      %v572 = vld [vmem:[%s7 + $0x38] sm:$0xf]
      %v573 = vld [vmem:[%s7 + $0x3c] sm:$0xf]
      %v574 = vld [vmem:[%s8] sm:$0x1]
      %v576 = vlaneseq
      %v577 = vshrl.u32 %v576, 7
      %v578 = vsub.s32 0, %v577
      %v579 = vrot.slane %v574, %v578
      %v597 = vunpack.c.l.b16 %v558
      %v598 = vunpack.c.l.b16 %v559
      %v599 = vunpack.c.l.b16 %v560
      %v600 = vunpack.c.l.b16 %v561
      %v601 = vunpack.c.l.b16 %v562
      %v602 = vunpack.c.l.b16 %v563
      %v603 = vunpack.c.l.b16 %v564
      %v604 = vunpack.c.l.b16 %v565
      %v605 = vunpack.c.l.b16 %v566
      %v606 = vunpack.c.l.b16 %v567
      %v607 = vunpack.c.l.b16 %v568
      %v608 = vunpack.c.l.b16 %v569
      %v609 = vunpack.c.l.b16 %v570
      %v610 = vunpack.c.l.b16 %v571
      %v611 = vunpack.c.l.b16 %v572
      %v612 = vunpack.c.l.b16 %v573
      %v613 = vpack.c.b16 %v598, %v597
      %v614 = vpack.c.b16 %v600, %v599
      %v615 = vpack.c.b16 %v602, %v601
      %v616 = vpack.c.b16 %v604, %v603
      %v617 = vpack.c.b16 %v606, %v605
      %v618 = vpack.c.b16 %v608, %v607
      %v619 = vpack.c.b16 %v610, %v609
      %v620 = vpack.c.b16 %v612, %v611
      %629 = vmatprep.subr.bf16.mxu0 0
      %630 = vmatpush1.bf16.msra.mxu0 %v613
      %631 = vmatprep.subr.bf16.mxu0 0
      %632 = vmatpush1.bf16.msra.mxu0 %v614
      %633 = vmatprep.subr.bf16.mxu0 0
      %634 = vmatpush1.bf16.msra.mxu0 %v615
      %635 = vmatprep.subr.bf16.mxu0 0
      %636 = vmatpush1.bf16.msra.mxu0 %v616
      %637 = vmatprep.subr.bf16.mxu0 0
      %638 = vmatpush1.bf16.msra.mxu0 %v617
      %639 = vmatprep.subr.bf16.mxu0 0
      %640 = vmatpush1.bf16.msra.mxu0 %v618
      %641 = vmatprep.subr.bf16.mxu0 0
      %642 = vmatpush1.bf16.msra.mxu0 %v619
      %643 = vmatprep.subr.bf16.mxu0 0
      %644 = vmatpush1.bf16.msra.mxu0 %v620
      %645 = vmatprep.subr.bf16.mxu0 0
      %646 = vmatpush1.bf16.msra.mxu0 0
      %647 = vmatprep.subr.bf16.mxu0 0
      %648 = vmatpush1.bf16.msra.mxu0 0
      %649 = vmatprep.subr.bf16.mxu0 0
      %650 = vmatpush1.bf16.msra.mxu0 0
      %651 = vmatprep.subr.bf16.mxu0 0
      %652 = vmatpush1.bf16.msra.mxu0 0
      %653 = vmatprep.subr.bf16.mxu0 0
      %654 = vmatpush1.bf16.msra.mxu0 0
      %655 = vmatprep.subr.bf16.mxu0 0
      %656 = vmatpush1.bf16.msra.mxu0 0
      %657 = vmatprep.subr.bf16.mxu0 0
      %658 = vmatpush1.bf16.msra.mxu0 0
      %659 = vmatprep.subr.bf16.mxu0 0
      %660 = vmatpush1.bf16.msra.mxu0 0
      %661 = vmatprep.mubr.bf16.mxu0 0
      %662 = vmatmul.mubr.bf16.gmra.mrb[0].mxu0 %v557
      %v663 = vpop.f32.mrb[0].mxu0
      %v664 = vadd.f32 %v579, %v663
      %v665 = vpop.f32.mrb[0].mxu0
      %v666 = vpop.f32.mrb[0].mxu0
      %v667 = vpop.f32.mrb[0].mxu0
      %668 = vdwg.mxu0
      %v669 = vadd.f32 %v450, %v664
      %670 = vst.msk [vmem:[%s386] sm:$0xff] %vm406, %v669
      %p671 = scmp.lt.s32.totalorder %s24, 1
      %s672 = scalar_select %p671, %s24, 1
      %p673 = scmp.lt.s32.totalorder %s25, 0
      %s674 = scalar_select %p673, %s25, 0
      %s675 = sadd.s32 %s674, %s672
      %s676 = smul.addr %s675, 8
      %s677 = scalar_lea.vmem %s9, %s676
      // Predicated region
      $region57: #{gpt2_forward.9} parent=55 // pred_check
        %p678 = pneg %p255
      $region58: #{gpt2_forward.9} parent=55 // pred_check_branch
        %680 = sbr.rel (%p678) target = $region60
      $region59: #{gpt2_forward.9} parent=55 // pred_region
        _
      $region60: #{gpt2_forward.9} parent=55 // pred_fallthru
        _
    $region56: #{gpt2_forward.9} parent=5 // pred_fallthru
      _
    %p681 = scmp.le.s32.totalorder 2, %s15
    // Predicated region
    $region61: #{gpt2_forward.9} parent=5 // pred_check
      %p682 = pneg %p681
    $region62: #{gpt2_forward.9} parent=5 // pred_check_branch
      %684 = sbr.rel (%p682) target = $region64
    $region63: #{gpt2_forward.9} parent=5 // pred_region
      %s685 = ssub.s32 %s15, 2
      // Predicated region
      $region65: #{gpt2_forward.9} parent=63 // pred_check
        %p686 = pneg %p261
      $region66: #{gpt2_forward.9} parent=63 // pred_check_branch
        %688 = sbr.rel (%p686) target = $region68
      $region67: #{gpt2_forward.9} parent=63 // pred_region
        %p689 = scmp.lt.s32.totalorder %s26, 1
        %s690 = scalar_select %p689, %s26, 1
        %p691 = scmp.lt.s32.totalorder %s27, 0
        %s692 = scalar_select %p691, %s27, 0
        %s693 = sadd.s32 %s692, %s690
        %s694 = smul.addr %s693, 8
        %s695 = scalar_lea.vmem %s9, %s694
      $region68: #{gpt2_forward.9} parent=63 // pred_fallthru
        _
    $region64: #{gpt2_forward.9} parent=5 // pred_fallthru
      _
  $region6: #{gpt2_forward.9} parent=0 // loop_footer
    %s19 = sadd.s32 1, %s15
  $region7: #{gpt2_forward.9} parent=0 // loop_footer_branch
    %14 = sbr.rel target = $region3
  $region8: #{gpt2_forward.9} parent=0 // loop_exit
    _

// kernel: gpt2_forward.13
$region0: #{gpt2_forward.13}
  #allocation0 [shape = 'u32[]', space=smem, size = 0x4, offset = 0x4, fixed_abs, tag = 'smem constant byte address 0x4 - core index']
  #allocation1 [shape = 'u32[144,128]{1,0:T(1,128)}', space=vmem, size = 0x12000, scoped, tag = 'internal scratch']
  #allocation2 [shape = 'bf16[16,32]{1,0:T(16,128)(2,1)}', space=vmem, size = 0x1000, scoped, tag = 'scratch operand']
  %s0 = inlined_call_operand.vmem [shape: f32[16,32], index: 0, kind: input, shape index: {}]
  %s1 = inlined_call_operand.vmem [shape: f32[1,32], index: 1, kind: input, shape index: {}]
  %s2 = inlined_call_operand.vmem [shape: f32[1,32], index: 2, kind: input, shape index: {}]
  %s3 = inlined_call_operand.vmem [shape: bf16[32,256], index: 3, kind: input, shape index: {}]
  %s4 = inlined_call_operand.hbm [shape: f32[16,256], index: 4, kind: output, shape index: {0}]
  %s5 = inlined_call_operand.hbm [shape: f32[16,32], index: 5, kind: output, shape index: {1}]
  %6 = xla_tuple %s4, %s5
  %s7 = sld [smem:[#allocation0]]
  $region38: #{gpt2_forward.13} parent=0
    _
  %s9 = ssub.s32 1, %s7
  %s10 = scalar_select 0, %s9, %s7
  $region1: #{gpt2_forward.13} parent=0
    #allocation3 [shape = 'u8[16384]{0}', space=vmem, size = 0x4000, scoped, tag = 'output window, operand 0, single buffered']
    #allocation4 [shape = 's32[1]{0}', space=sflag, size = 0x4, scoped, tag = 'scoped memory for gpt2_forward.13']
    #allocation5 [shape = 'u8[8192]{0}', space=vmem, size = 0x2000, scoped, tag = 'output window, operand 1, single buffered']
    #allocation6 [shape = 's32[1]{0}', space=sflag, size = 0x4, scoped, tag = 'scoped memory for gpt2_forward.13']
    %11 = vsyncpa [#allocation4], 0
    %12 = vsyncpa [#allocation6], 0
    // Predicated region
    $region2: #{gpt2_forward.13} parent=1 // pred_check
      _
    $region3: #{gpt2_forward.13} parent=1 // pred_check_branch
      %14 = sbr.rel (0) target = $region5
    $region4: #{gpt2_forward.13} parent=1 // pred_region
      _
    $region5: #{gpt2_forward.13} parent=1 // pred_fallthru
      _
    // Predicated region
    $region6: #{gpt2_forward.13} parent=1 // pred_check
      _
    $region7: #{gpt2_forward.13} parent=1 // pred_check_branch
      %16 = sbr.rel (0) target = $region9
    $region8: #{gpt2_forward.13} parent=1 // pred_region
      _
    $region9: #{gpt2_forward.13} parent=1 // pred_fallthru
      _
    // Predicated region
    $region10: #{gpt2_forward.13} parent=1 // pred_check
      _
    $region11: #{gpt2_forward.13} parent=1 // pred_check_branch
      %18 = sbr.rel (0) target = $region13
    $region12: #{gpt2_forward.13} parent=1 // pred_region
      _
    $region13: #{gpt2_forward.13} parent=1 // pred_fallthru
      _
    // Predicated region
    $region14: #{gpt2_forward.13} parent=1 // pred_check
      _
    $region15: #{gpt2_forward.13} parent=1 // pred_check_branch
      %20 = sbr.rel (0) target = $region17
    $region16: #{gpt2_forward.13} parent=1 // pred_region
      _
    $region17: #{gpt2_forward.13} parent=1 // pred_fallthru
      _
    %p22 = scmp.eq.s32.totalorder 0, 0
    // Predicated region
    $region18: #{gpt2_forward.13} parent=1 // pred_check
      %p23 = pneg %p22
    $region19: #{gpt2_forward.13} parent=1 // pred_check_branch
      %25 = sbr.rel (%p23) target = $region21
    $region20: #{gpt2_forward.13} parent=1 // pred_region
      %v26 = vld [vmem:[%s0] sm:$0xff]
      %v27 = vld [vmem:[%s0 + $0x8] sm:$0xff]
      %v28 = vld [vmem:[%s1] sm:$0x1]
      %v29 = vld [vmem:[%s2] sm:$0x1]
      %vm30 = vcmask 261120
      %v31 = vsel %vm30, %v26, 0.0
      %32 = vadd.xlane.f32.xlu0 %v31
      %v33 = vpop.xlane.xlu0 %32
      %v34 = vsel %vm30, %v27, 0.0
      %35 = vadd.xlane.f32.xlu0 %v34
      %v36 = vpop.xlane.xlu0 %35
      %v37 = vrcp.pop 32.0
      %v38 = vmul.f32 %v33, %v37
      %v39 = vmul.f32 %v36, %v37
      %v40 = vsub.f32 %v26, %v38
      %v41 = vsub.f32 %v27, %v39
      %v42 = vmul.f32 %v40, %v40
      %v43 = vmul.f32 %v41, %v41
      %v44 = vsel %vm30, %v42, 0.0
      %45 = vadd.xlane.f32.xlu0 %v44
      %v46 = vpop.xlane.xlu0 %45
      %v47 = vsel %vm30, %v43, 0.0
      %48 = vadd.xlane.f32.xlu0 %v47
      %v49 = vpop.xlane.xlu0 %48
      %v50 = vmul.f32 %v46, %v37
      %v51 = vmul.f32 %v49, %v37
      %v52 = vadd.f32 %v50, 1e-05
      %v53 = vadd.f32 %v51, 1e-05
      %v54 = vrsqrt.pop %v52
      %v55 = vrsqrt.pop %v53
      %v56 = vmul.f32 %v40, %v54
      %v57 = vmul.f32 %v41, %v55
      %v59 = vlaneseq
      %v60 = vshrl.u32 %v59, 7
      %v61 = vsub.s32 0, %v60
      %v62 = vrot.slane %v28, %v61
      %v64 = vmul.f32 %v56, %v62
      %v65 = vmul.f32 %v57, %v62
      %v67 = vlaneseq
      %v68 = vshrl.u32 %v67, 7
      %v69 = vsub.s32 0, %v68
      %v70 = vrot.slane %v29, %v69
      %v72 = vadd.f32 %v64, %v70
      %v73 = vadd.f32 %v65, %v70
      %74 = vst.msk [vmem:[#allocation5] sm:$0xff] %vm30, %v72
      %75 = vst.msk [vmem:[#allocation5 + $0x8] sm:$0xff] %vm30, %v73
      %v76 = vpack.c.bf16 %v73, %v72
      %77 = vst.msk [vmem:[#allocation2] sm:$0xff] %vm30, %v76
    $region21: #{gpt2_forward.13} parent=1 // pred_fallthru
      _
    %v78 = vld [vmem:[#allocation2] sm:$0xff]
    %v79 = vld [vmem:[%s3] sm:$0xff]
    %v80 = vld [vmem:[%s3 + $0x8] sm:$0xff]
    %v81 = vld [vmem:[%s3 + $0x10] sm:$0xff]
    %v82 = vld [vmem:[%s3 + $0x18] sm:$0xff]
    %v87 = vunpack.c.l.b16 %v79
    %v88 = vunpack.c.h.b16 %v79
    %v89 = vunpack.c.l.b16 %v80
    %v90 = vunpack.c.h.b16 %v80
    %v91 = vunpack.c.l.b16 %v81
    %v92 = vunpack.c.h.b16 %v81
    %v93 = vunpack.c.l.b16 %v82
    %v94 = vunpack.c.h.b16 %v82
    %v95 = vpack.c.b16 %v89, %v87
    %v96 = vpack.c.b16 %v90, %v88
    %v97 = vpack.c.b16 %v93, %v91
    %v98 = vpack.c.b16 %v94, %v92
    %vm103 = vcmask 261120
    %v105 = vsel %vm103, %v78, 0
    %107 = vmatprep.subr.bf16.mxu0 %v96
    %108 = vmatpush1.bf16.msra.mxu0 %v95
    %109 = vmatprep.subr.bf16.mxu0 %v98
    %110 = vmatpush1.bf16.msra.mxu0 %v97
    %111 = vmatprep.subr.bf16.mxu0 0
    %112 = vmatpush1.bf16.msra.mxu0 0
    %113 = vmatprep.subr.bf16.mxu0 0
    %114 = vmatpush1.bf16.msra.mxu0 0
    %115 = vmatprep.subr.bf16.mxu0 0
    %116 = vmatpush1.bf16.msra.mxu0 0
    %117 = vmatprep.subr.bf16.mxu0 0
    %118 = vmatpush1.bf16.msra.mxu0 0
    %119 = vmatprep.subr.bf16.mxu0 0
    %120 = vmatpush1.bf16.msra.mxu0 0
    %121 = vmatprep.subr.bf16.mxu0 0
    %122 = vmatpush1.bf16.msra.mxu0 0
    %123 = vmatprep.subr.bf16.mxu0 0
    %124 = vmatpush1.bf16.msra.mxu0 0
    %125 = vmatprep.subr.bf16.mxu0 0
    %126 = vmatpush1.bf16.msra.mxu0 0
    %127 = vmatprep.subr.bf16.mxu0 0
    %128 = vmatpush1.bf16.msra.mxu0 0
    %129 = vmatprep.subr.bf16.mxu0 0
    %130 = vmatpush1.bf16.msra.mxu0 0
    %131 = vmatprep.subr.bf16.mxu0 0
    %132 = vmatpush1.bf16.msra.mxu0 0
    %133 = vmatprep.subr.bf16.mxu0 0
    %134 = vmatpush1.bf16.msra.mxu0 0
    %135 = vmatprep.subr.bf16.mxu0 0
    %136 = vmatpush1.bf16.msra.mxu0 0
    %137 = vmatprep.subr.bf16.mxu0 0
    %138 = vmatpush1.bf16.msra.mxu0 0
    %139 = vmatprep.mubr.bf16.mxu0 0
    %140 = vmatmul.mubr.bf16.gmra.mrb[0].mxu0 %v105
    %v141 = vpop.f32.mrb[0].mxu0
    %v142 = vadd.f32 0.0, %v141
    %v143 = vpop.f32.mrb[0].mxu0
    %v144 = vadd.f32 0.0, %v143
    %v145 = vpop.f32.mrb[0].mxu0
    %v146 = vadd.f32 0.0, %v145
    %v147 = vpop.f32.mrb[0].mxu0
    %v148 = vadd.f32 0.0, %v147
    %149 = vdwg.mxu0
    %150 = vst [vmem:[#allocation3] sm:$0xff] %v142
    %151 = vst [vmem:[#allocation3 + $0x8] sm:$0xff] %v144
    %152 = vst [vmem:[#allocation3 + $0x10] sm:$0xff] %v146
    %153 = vst [vmem:[#allocation3 + $0x18] sm:$0xff] %v148
    // Predicated region
    $region22: #{gpt2_forward.13} parent=1 // pred_check
      _
    $region23: #{gpt2_forward.13} parent=1 // pred_check_branch
      %155 = sbr.rel (0) target = $region25
    $region24: #{gpt2_forward.13} parent=1 // pred_region
      %s157 = ssub.s32 512, 512
      %158 = vsyncadd [#allocation4], %s157
      %s159 = sshll.u32 [#allocation3], 4
      %s160 = int_to_ptr.vmem [resolvable:$true] %s159
      %165 = dma.vmem_to_hbm [thread:$0]  %s160, 512, %s4, [#allocation4], 256, 256, 16
    $region25: #{gpt2_forward.13} parent=1 // pred_fallthru
      _
    // Predicated region
    $region26: #{gpt2_forward.13} parent=1 // pred_check
      _
    $region27: #{gpt2_forward.13} parent=1 // pred_check_branch
      %167 = sbr.rel (0) target = $region29
    $region28: #{gpt2_forward.13} parent=1 // pred_region
      %s169 = ssub.s32 256, 256
      %170 = vsyncadd [#allocation6], %s169
      %s171 = sshll.u32 [#allocation5], 4
      %s172 = int_to_ptr.vmem [resolvable:$true] %s171
      %177 = dma.vmem_to_hbm [thread:$0]  %s172, 256, %s5, [#allocation6], 128, 128, 8
    $region29: #{gpt2_forward.13} parent=1 // pred_fallthru
      _
    // Predicated region
    $region30: #{gpt2_forward.13} parent=1 // pred_check
      _
    $region31: #{gpt2_forward.13} parent=1 // pred_check_branch
      %179 = sbr.rel (0) target = $region33
    $region32: #{gpt2_forward.13} parent=1 // pred_region
      %180 = dma.done [#allocation4], 512
    $region33: #{gpt2_forward.13} parent=1 // pred_fallthru
      _
    // Predicated region
    $region34: #{gpt2_forward.13} parent=1 // pred_check
      _
    $region35: #{gpt2_forward.13} parent=1 // pred_check_branch
      %182 = sbr.rel (0) target = $region37
    $region36: #{gpt2_forward.13} parent=1 // pred_region
      %183 = dma.done [#allocation6], 256
    $region37: #{gpt2_forward.13} parent=1 // pred_fallthru
      _
    %184 = vsyncpa [#allocation4], 1
    %185 = vsyncpa [#allocation6], 1

// kernel: gpt2_forward.7
$region0: #{gpt2_forward.7}
  #allocation0 [shape = 'u32[]', space=smem, size = 0x4, offset = 0x4, fixed_abs, tag = 'smem constant byte address 0x4 - core index']
  #allocation1 [shape = 'u32[144,128]{1,0:T(1,128)}', space=vmem, size = 0x12000, scoped, tag = 'internal scratch']
  %s0 = inlined_call_operand.vmem [shape: f32[2,8,32], index: 0, kind: input, shape index: {}]
  %s1 = inlined_call_operand.vmem [shape: f32[1,32], index: 1, kind: input, shape index: {}]
  %s2 = inlined_call_operand.vmem [shape: f32[1,32], index: 2, kind: input, shape index: {}]
  %s3 = inlined_call_operand.vmem [shape: bf16[32,96], index: 3, kind: input, shape index: {}]
  %s4 = inlined_call_operand.vmem [shape: bf16[2,4,8,8], index: 4, kind: output, shape index: {0}]
  %s5 = inlined_call_operand.vmem [shape: bf16[2,4,8,8], index: 5, kind: output, shape index: {1}]
  %s6 = inlined_call_operand.vmem [shape: bf16[2,4,8,8], index: 6, kind: output, shape index: {2}]
  %7 = xla_tuple %s4, %s5, %s6
  %s8 = sld [smem:[#allocation0]]
  $region65: #{gpt2_forward.7} parent=0
    _
  %s10 = ssub.s32 1, %s8
  %s11 = scalar_select 0, %s10, %s8
  loop: start=0, step=1, limit=4
  $region2: #{gpt2_forward.7} parent=0 // loop_pre_header
    _
  $region3: #{gpt2_forward.7} parent=0 // loop_header
    %s13 = sphi 0, %s17
    %p14 = scmp.ge.s32.totalorder %s13, 4
    %s20 = sphi 0, %s32
    %s21 = sphi 0, %s28
    %s22 = sphi 0, %s20
    %s23 = sphi 0, %s21
    %s24 = sphi 0, %s22
    %s25 = sphi 0, %s23
    %s37 = sphi 0, %s39
    %s40 = sphi 0, %s37
    %s41 = sphi 0, %s40
    %s57 = sphi 0, %s41
    %s61 = sphi 0, %s61
    %s63 = sphi 0, %s61
    %s64 = sphi 0, %s63
    %s78 = sphi 0, %s64
    %s82 = sphi 0, %s82
    %s84 = sphi 0, %s82
    %s85 = sphi 0, %s84
    %s99 = sphi 0, %s85
    %s103 = sphi 0, %s103
    %s105 = sphi 0, %s103
    %s106 = sphi 0, %s105
    %s120 = sphi 0, %s106
    %s128 = sphi 0, %s130
    %s131 = sphi 0, %s128
    %s132 = sphi 0, %s131
    %s148 = sphi 0, %s132
    %s156 = sphi 0, %s158
    %s159 = sphi 0, %s156
    %s160 = sphi 0, %s159
    %s176 = sphi 0, %s160
    %s184 = sphi 0, %s186
    %s187 = sphi 0, %s184
    %s188 = sphi 0, %s187
    %s204 = sphi 0, %s188
  $region4: #{gpt2_forward.7} parent=0 // loop_header_branch
    %16 = sbr.rel (%p14) target = $region8
  $region5: #{gpt2_forward.7} parent=0 // loop_body
    %s18 = ssub.s32 %s13, 1
    %s19 = ssub.s32 %s13, 2
    %s26 = sadd.s32 1, %s21
    %p27 = scmp.ge.s32.totalorder %s26, 1
    %s28 = scalar_select %p27, 0, %s26
    %s29 = sadd.s32 1, %s20
    %s30 = scalar_select %p27, %s29, %s20
    %p31 = scmp.ge.s32.totalorder %s30, 2
    %s32 = scalar_select %p31, 0, %s30
    %s33 = ssub.s32 %s20, %s32
    %s34 = ssub.s32 %s21, %s28
    %s35 = sor.u32 %s33, %s34
    %p36 = scmp.eq.s32.totalorder %s35, 0
    %s38 = sadd.s32 %s37, 1
    %s39 = scalar_select %p36, %s37, %s38
    %p42 = pneg %p36
    %p43 = scmp.eq.s32.totalorder %s13, 1
    %p44 = por %p42, %p43
    %p45 = scmp.ne.s32.totalorder %s37, %s40
    %p46 = scmp.eq.s32.totalorder %s13, 0
    %p47 = por %p45, %p46
    %p48 = scmp.ne.s32.totalorder %s37, %s40
    %p49 = scmp.eq.s32.totalorder %s18, 1
    %p50 = por %p48, %p49
    %p51 = scmp.ne.s32.totalorder %s40, %s41
    %p52 = scmp.eq.s32.totalorder %s18, 0
    %p53 = por %p51, %p52
    %p54 = scmp.ne.s32.totalorder %s40, %s41
    %p55 = scmp.eq.s32.totalorder %s19, 1
    %p56 = por %p54, %p55
    %p58 = scmp.ne.s32.totalorder %s41, %s57
    %p59 = scmp.eq.s32.totalorder %s19, 0
    %p60 = por %p58, %p59
    %s62 = sadd.s32 %s61, 1
    %p65 = scmp.eq.s32.totalorder %s13, 1
    %p66 = scmp.ne.s32.totalorder %s61, %s63
    %p67 = scmp.eq.s32.totalorder %s13, 0
    %p68 = por %p66, %p67
    %p69 = scmp.ne.s32.totalorder %s61, %s63
    %p70 = scmp.eq.s32.totalorder %s18, 1
    %p71 = por %p69, %p70
    %p72 = scmp.ne.s32.totalorder %s63, %s64
    %p73 = scmp.eq.s32.totalorder %s18, 0
    %p74 = por %p72, %p73
    %p75 = scmp.ne.s32.totalorder %s63, %s64
    %p76 = scmp.eq.s32.totalorder %s19, 1
    %p77 = por %p75, %p76
    %p79 = scmp.ne.s32.totalorder %s64, %s78
    %p80 = scmp.eq.s32.totalorder %s19, 0
    %p81 = por %p79, %p80
    %s83 = sadd.s32 %s82, 1
    %p86 = scmp.eq.s32.totalorder %s13, 1
    %p87 = scmp.ne.s32.totalorder %s82, %s84
    %p88 = scmp.eq.s32.totalorder %s13, 0
    %p89 = por %p87, %p88
    %p90 = scmp.ne.s32.totalorder %s82, %s84
    %p91 = scmp.eq.s32.totalorder %s18, 1
    %p92 = por %p90, %p91
    %p93 = scmp.ne.s32.totalorder %s84, %s85
    %p94 = scmp.eq.s32.totalorder %s18, 0
    %p95 = por %p93, %p94
    %p96 = scmp.ne.s32.totalorder %s84, %s85
    %p97 = scmp.eq.s32.totalorder %s19, 1
    %p98 = por %p96, %p97
    %p100 = scmp.ne.s32.totalorder %s85, %s99
    %p101 = scmp.eq.s32.totalorder %s19, 0
    %p102 = por %p100, %p101
    %s104 = sadd.s32 %s103, 1
    %p107 = scmp.eq.s32.totalorder %s13, 1
    %p108 = scmp.ne.s32.totalorder %s103, %s105
    %p109 = scmp.eq.s32.totalorder %s13, 0
    %p110 = por %p108, %p109
    %p111 = scmp.ne.s32.totalorder %s103, %s105
    %p112 = scmp.eq.s32.totalorder %s18, 1
    %p113 = por %p111, %p112
    %p114 = scmp.ne.s32.totalorder %s105, %s106
    %p115 = scmp.eq.s32.totalorder %s18, 0
    %p116 = por %p114, %p115
    %p117 = scmp.ne.s32.totalorder %s105, %s106
    %p118 = scmp.eq.s32.totalorder %s19, 1
    %p119 = por %p117, %p118
    %p121 = scmp.ne.s32.totalorder %s106, %s120
    %p122 = scmp.eq.s32.totalorder %s19, 0
    %p123 = por %p121, %p122
    %s124 = ssub.s32 %s20, %s32
    %s125 = ssub.s32 %s21, %s28
    %s126 = sor.u32 %s124, %s125
    %p127 = scmp.eq.s32.totalorder %s126, 0
    %s129 = sadd.s32 %s128, 1
    %s130 = scalar_select %p127, %s128, %s129
    %p133 = pneg %p127
    %p134 = scmp.eq.s32.totalorder %s13, 1
    %p135 = por %p133, %p134
    %p136 = scmp.ne.s32.totalorder %s128, %s131
    %p137 = scmp.eq.s32.totalorder %s13, 0
    %p138 = por %p136, %p137
    %p139 = scmp.ne.s32.totalorder %s128, %s131
    %p140 = scmp.eq.s32.totalorder %s18, 1
    %p141 = por %p139, %p140
    %p142 = scmp.ne.s32.totalorder %s131, %s132
    %p143 = scmp.eq.s32.totalorder %s18, 0
    %p144 = por %p142, %p143
    %p145 = scmp.ne.s32.totalorder %s131, %s132
    %p146 = scmp.eq.s32.totalorder %s19, 1
    %p147 = por %p145, %p146
    %p149 = scmp.ne.s32.totalorder %s132, %s148
    %p150 = scmp.eq.s32.totalorder %s19, 0
    %p151 = por %p149, %p150
    %s152 = ssub.s32 %s20, %s32
    %s153 = ssub.s32 %s21, %s28
    %s154 = sor.u32 %s152, %s153
    %p155 = scmp.eq.s32.totalorder %s154, 0
    %s157 = sadd.s32 %s156, 1
    %s158 = scalar_select %p155, %s156, %s157
    %p161 = pneg %p155
    %p162 = scmp.eq.s32.totalorder %s13, 1
    %p163 = por %p161, %p162
    %p164 = scmp.ne.s32.totalorder %s156, %s159
    %p165 = scmp.eq.s32.totalorder %s13, 0
    %p166 = por %p164, %p165
    %p167 = scmp.ne.s32.totalorder %s156, %s159
    %p168 = scmp.eq.s32.totalorder %s18, 1
    %p169 = por %p167, %p168
    %p170 = scmp.ne.s32.totalorder %s159, %s160
    %p171 = scmp.eq.s32.totalorder %s18, 0
    %p172 = por %p170, %p171
    %p173 = scmp.ne.s32.totalorder %s159, %s160
    %p174 = scmp.eq.s32.totalorder %s19, 1
    %p175 = por %p173, %p174
    %p177 = scmp.ne.s32.totalorder %s160, %s176
    %p178 = scmp.eq.s32.totalorder %s19, 0
    %p179 = por %p177, %p178
    %s180 = ssub.s32 %s20, %s32
    %s181 = ssub.s32 %s21, %s28
    %s182 = sor.u32 %s180, %s181
    %p183 = scmp.eq.s32.totalorder %s182, 0
    %s185 = sadd.s32 %s184, 1
    %s186 = scalar_select %p183, %s184, %s185
    %p189 = pneg %p183
    %p190 = scmp.eq.s32.totalorder %s13, 1
    %p191 = por %p189, %p190
    %p192 = scmp.ne.s32.totalorder %s184, %s187
    %p193 = scmp.eq.s32.totalorder %s13, 0
    %p194 = por %p192, %p193
    %p195 = scmp.ne.s32.totalorder %s184, %s187
    %p196 = scmp.eq.s32.totalorder %s18, 1
    %p197 = por %p195, %p196
    %p198 = scmp.ne.s32.totalorder %s187, %s188
    %p199 = scmp.eq.s32.totalorder %s18, 0
    %p200 = por %p198, %p199
    %p201 = scmp.ne.s32.totalorder %s187, %s188
    %p202 = scmp.eq.s32.totalorder %s19, 1
    %p203 = por %p201, %p202
    %p205 = scmp.ne.s32.totalorder %s188, %s204
    %p206 = scmp.eq.s32.totalorder %s19, 0
    %p207 = por %p205, %p206
    %p208 = scmp.le.s32.totalorder 1, %s13
    %p209 = scmp.lt.s32.totalorder %s13, 3
    %p210 = pnand %p208, %p209
    %p211 = pneg %p210
    // Predicated region
    $region9: #{gpt2_forward.7} parent=5 // pred_check
      _
    $region10: #{gpt2_forward.7} parent=5 // pred_check_branch
      %213 = sbr.rel (%p210) target = $region12
    $region11: #{gpt2_forward.7} parent=5 // pred_region
      %s214 = ssub.s32 %s13, 1
      // Predicated region
      $region13: #{gpt2_forward.7} parent=11 // pred_check
        %p215 = pneg %p74
      $region14: #{gpt2_forward.7} parent=11 // pred_check_branch
        %217 = sbr.rel (%p215) target = $region16
      $region15: #{gpt2_forward.7} parent=11 // pred_region
        _
      $region16: #{gpt2_forward.7} parent=11 // pred_fallthru
        _
      // Predicated region
      $region17: #{gpt2_forward.7} parent=11 // pred_check
        %p218 = pneg %p95
      $region18: #{gpt2_forward.7} parent=11 // pred_check_branch
        %220 = sbr.rel (%p218) target = $region20
      $region19: #{gpt2_forward.7} parent=11 // pred_region
        _
      $region20: #{gpt2_forward.7} parent=11 // pred_fallthru
        _
      // Predicated region
      $region21: #{gpt2_forward.7} parent=11 // pred_check
        %p221 = pneg %p116
      $region22: #{gpt2_forward.7} parent=11 // pred_check_branch
        %223 = sbr.rel (%p221) target = $region24
      $region23: #{gpt2_forward.7} parent=11 // pred_region
        _
      $region24: #{gpt2_forward.7} parent=11 // pred_fallthru
        _
    $region12: #{gpt2_forward.7} parent=5 // pred_fallthru
      _
    %p224 = scmp.lt.s32.totalorder %s13, 2
    // Predicated region
    $region25: #{gpt2_forward.7} parent=5 // pred_check
      %p225 = pneg %p224
    $region26: #{gpt2_forward.7} parent=5 // pred_check_branch
      %227 = sbr.rel (%p225) target = $region28
    $region27: #{gpt2_forward.7} parent=5 // pred_region
      // Predicated region
      $region29: #{gpt2_forward.7} parent=27 // pred_check
        %p228 = pneg %p47
      $region30: #{gpt2_forward.7} parent=27 // pred_check_branch
        %230 = sbr.rel (%p228) target = $region32
      $region31: #{gpt2_forward.7} parent=27 // pred_region
        %p231 = scmp.lt.s32.totalorder %s20, 1
        %s232 = scalar_select %p231, %s20, 1
        %p233 = scmp.lt.s32.totalorder %s21, 0
        %s234 = scalar_select %p233, %s21, 0
        %s235 = sadd.s32 %s234, %s232
        %s236 = smul.addr %s235, 8
        %s237 = scalar_lea.vmem %s0, %s236
      $region32: #{gpt2_forward.7} parent=27 // pred_fallthru
        _
    $region28: #{gpt2_forward.7} parent=5 // pred_fallthru
      _
    %p238 = scmp.le.s32.totalorder 1, %s13
    %p239 = scmp.lt.s32.totalorder %s13, 3
    %p240 = pnand %p238, %p239
    %p241 = pneg %p240
    // Predicated region
    $region33: #{gpt2_forward.7} parent=5 // pred_check
      _
    $region34: #{gpt2_forward.7} parent=5 // pred_check_branch
      %243 = sbr.rel (%p240) target = $region36
    $region35: #{gpt2_forward.7} parent=5 // pred_region
      %s244 = ssub.s32 %s13, 1
      %p245 = scmp.lt.s32.totalorder %s22, 1
      %s246 = scalar_select %p245, %s22, 1
      %p247 = scmp.lt.s32.totalorder %s23, 0
      %s248 = scalar_select %p247, %s23, 0
      %s249 = sadd.s32 %s248, %s246
      %s250 = smul.addr %s249, 8
      %s251 = scalar_lea.vmem %s0, %s250
      %p252 = pneg %p53
      %p253 = pneg %p50
      %p254 = pneg %p74
      %p255 = pneg %p71
      %p256 = pneg %p95
      %p257 = pneg %p92
      %p258 = pneg %p116
      %p259 = pneg %p113
      %p260 = pneg %p144
      %p261 = pneg %p141
      %p262 = scmp.lt.s32.totalorder %s22, 1
      %s263 = scalar_select %p262, %s22, 1
      %p264 = scmp.lt.s32.totalorder %s23, 0
      %s265 = scalar_select %p264, %s23, 0
      %s266 = smul.addr %s263, 4
      %s267 = sadd.s32 %s265, %s266
      %s268 = smul.addr %s267, 4
      %s269 = scalar_lea.vmem %s4, %s268
      %p270 = pneg %p172
      %p271 = pneg %p169
      %p272 = scmp.lt.s32.totalorder %s22, 1
      %s273 = scalar_select %p272, %s22, 1
      %p274 = scmp.lt.s32.totalorder %s23, 0
      %s275 = scalar_select %p274, %s23, 0
      %s276 = smul.addr %s273, 4
      %s277 = sadd.s32 %s275, %s276
      %s278 = smul.addr %s277, 4
      %s279 = scalar_lea.vmem %s5, %s278
      %p280 = pneg %p200
      %p281 = pneg %p197
      %p282 = scmp.lt.s32.totalorder %s22, 1
      %s283 = scalar_select %p282, %s22, 1
      %p284 = scmp.lt.s32.totalorder %s23, 0
      %s285 = scalar_select %p284, %s23, 0
      %s286 = smul.addr %s283, 4
      %s287 = sadd.s32 %s285, %s286
      %s288 = smul.addr %s287, 4
      %s289 = scalar_lea.vmem %s6, %s288
      %p290 = scmp.lt.s32.totalorder %s22, 1
      %s291 = scalar_select %p290, %s22, 1
      %p292 = scmp.lt.s32.totalorder %s23, 0
      %s293 = scalar_select %p292, %s23, 0
      %s294 = sadd.s32 %s293, %s291
      %s295 = smul.addr %s294, 8
      %s296 = scalar_lea.vmem %s0, %s295
      %p297 = scmp.lt.s32.totalorder %s22, 1
      %s298 = scalar_select %p297, %s22, 1
      %p299 = scmp.lt.s32.totalorder %s23, 0
      %s300 = scalar_select %p299, %s23, 0
      %s301 = smul.addr %s298, 4
      %s302 = sadd.s32 %s300, %s301
      %s303 = smul.addr %s302, 4
      %s304 = scalar_lea.vmem %s4, %s303
      %p305 = scmp.lt.s32.totalorder %s22, 1
      %s306 = scalar_select %p305, %s22, 1
      %p307 = scmp.lt.s32.totalorder %s23, 0
      %s308 = scalar_select %p307, %s23, 0
      %s309 = smul.addr %s306, 4
      %s310 = sadd.s32 %s308, %s309
      %s311 = smul.addr %s310, 4
      %s312 = scalar_lea.vmem %s5, %s311
      %p313 = scmp.lt.s32.totalorder %s22, 1
      %s314 = scalar_select %p313, %s22, 1
      %p315 = scmp.lt.s32.totalorder %s23, 0
      %s316 = scalar_select %p315, %s23, 0
      %s317 = smul.addr %s314, 4
      %s318 = sadd.s32 %s316, %s317
      %s319 = smul.addr %s318, 4
      %s320 = scalar_lea.vmem %s6, %s319
      %v322 = vld [vmem:[%s296] sm:$0xff]
      %v323 = vld [vmem:[%s1] sm:$0x1]
      %v324 = vld [vmem:[%s2] sm:$0x1]
      %vm325 = vcmask 261120
      %v326 = vsel %vm325, %v322, 0.0
      %327 = vadd.xlane.f32.xlu0 %v326
      %v328 = vpop.xlane.xlu0 %327
      %v329 = vrcp.pop 32.0
      %v330 = vmul.f32 %v328, %v329
      %v331 = vsub.f32 %v322, %v330
      %v332 = vmul.f32 %v331, %v331
      %v333 = vsel %vm325, %v332, 0.0
      %334 = vadd.xlane.f32.xlu0 %v333
      %v335 = vpop.xlane.xlu0 %334
      %v336 = vmul.f32 %v335, %v329
      %v337 = vadd.f32 %v336, 1e-05
      %v338 = vrsqrt.pop %v337
      %v339 = vmul.f32 %v331, %v338
      %v341 = vlaneseq
      %v342 = vshrl.u32 %v341, 7
      %v343 = vsub.s32 0, %v342
      %v344 = vrot.slane %v323, %v343
      %v346 = vmul.f32 %v339, %v344
      %v348 = vlaneseq
      %v349 = vshrl.u32 %v348, 7
      %v350 = vsub.s32 0, %v349
      %v351 = vrot.slane %v324, %v350
      %v353 = vadd.f32 %v346, %v351
      %v354 = vpack.c.bf16 %v353, %v353
      %v355 = vld [vmem:[%s3] sm:$0xf]
      %v356 = vld [vmem:[%s3 + $0x4] sm:$0xf]
      %v357 = vld [vmem:[%s3 + $0x8] sm:$0xf]
      %v358 = vld [vmem:[%s3 + $0xc] sm:$0xf]
      %v363 = vunpack.c.l.b16 %v355
      %v364 = vunpack.c.l.b16 %v356
      %v365 = vunpack.c.l.b16 %v357
      %v366 = vunpack.c.l.b16 %v358
      %v367 = vpack.c.b16 %v364, %v363
      %v368 = vpack.c.b16 %v366, %v365
      %v372 = vsel %vm325, %v354, 0
      %374 = vmatprep.subr.bf16.mxu0 0
      %375 = vmatpush1.bf16.msra.mxu0 %v367
      %376 = vmatprep.subr.bf16.mxu0 0
      %377 = vmatpush1.bf16.msra.mxu0 %v368
      %378 = vmatprep.subr.bf16.mxu0 0
      %379 = vmatpush1.bf16.msra.mxu0 0
      %380 = vmatprep.subr.bf16.mxu0 0
      %381 = vmatpush1.bf16.msra.mxu0 0
      %382 = vmatprep.subr.bf16.mxu0 0
      %383 = vmatpush1.bf16.msra.mxu0 0
      %384 = vmatprep.subr.bf16.mxu0 0
      %385 = vmatpush1.bf16.msra.mxu0 0
      %386 = vmatprep.subr.bf16.mxu0 0
      %387 = vmatpush1.bf16.msra.mxu0 0
      %388 = vmatprep.subr.bf16.mxu0 0
      %389 = vmatpush1.bf16.msra.mxu0 0
      %390 = vmatprep.subr.bf16.mxu0 0
      %391 = vmatpush1.bf16.msra.mxu0 0
      %392 = vmatprep.subr.bf16.mxu0 0
      %393 = vmatpush1.bf16.msra.mxu0 0
      %394 = vmatprep.subr.bf16.mxu0 0
      %395 = vmatpush1.bf16.msra.mxu0 0
      %396 = vmatprep.subr.bf16.mxu0 0
      %397 = vmatpush1.bf16.msra.mxu0 0
      %398 = vmatprep.subr.bf16.mxu0 0
      %399 = vmatpush1.bf16.msra.mxu0 0
      %400 = vmatprep.subr.bf16.mxu0 0
      %401 = vmatpush1.bf16.msra.mxu0 0
      %402 = vmatprep.subr.bf16.mxu0 0
      %403 = vmatpush1.bf16.msra.mxu0 0
      %404 = vmatprep.subr.bf16.mxu0 0
      %405 = vmatpush1.bf16.msra.mxu0 0
      %406 = vmatprep.mubr.bf16.mxu0 0
      %407 = vmatmul.mubr.bf16.gmra.mrb[0].mxu0 %v372
      %v408 = vpop.f32.mrb[0].mxu0
      %v409 = vadd.f32 0.0, %v408
      %v410 = vpop.f32.mrb[0].mxu0
      %v411 = vpop.f32.mrb[0].mxu0
      %v412 = vpop.f32.mrb[0].mxu0
      %413 = vdwg.mxu0
      %v414 = vpack.c.bf16 %v409, %v409
      %vm415 = vcmask 60416
      %416 = vst.msk [vmem:[%s304] sm:$0xf] %vm415, %v414
      %v418 = vunpack.c.l.b16 %v414
      %v419 = vpack.c.b16 %v418, %v418
      %420 = vrot.lane.b32.xlu0 %v419, 96
      %v421 = vpop.permute.xlu0 %420
      %423 = vst.msk [vmem:[%s312] sm:$0xf] %vm415, %v421
      %424 = vrot.lane.b32.xlu0 %v419, 64
      %v425 = vpop.permute.xlu0 %424
      %427 = vst.msk [vmem:[%s320] sm:$0xf] %vm415, %v425
      %428 = vrot.lane.b32.xlu0 %v419, 120
      %v429 = vpop.permute.xlu0 %428
      %s431 = scalar_lea.vmem %s304, 4
      %432 = vst.msk [vmem:[%s431] sm:$0xf] %vm415, %v429
      %433 = vrot.lane.b32.xlu0 %v419, 88
      %v434 = vpop.permute.xlu0 %433
      %s436 = scalar_lea.vmem %s312, 4
      %437 = vst.msk [vmem:[%s436] sm:$0xf] %vm415, %v434
      %438 = vrot.lane.b32.xlu0 %v419, 56
      %v439 = vpop.permute.xlu0 %438
      %s441 = scalar_lea.vmem %s320, 4
      %442 = vst.msk [vmem:[%s441] sm:$0xf] %vm415, %v439
      %443 = vrot.lane.b32.xlu0 %v419, 112
      %v444 = vpop.permute.xlu0 %443
      %s446 = scalar_lea.vmem %s304, 8
      %447 = vst.msk [vmem:[%s446] sm:$0xf] %vm415, %v444
      %448 = vrot.lane.b32.xlu0 %v419, 80
      %v449 = vpop.permute.xlu0 %448
      %s451 = scalar_lea.vmem %s312, 8
      %452 = vst.msk [vmem:[%s451] sm:$0xf] %vm415, %v449
      %453 = vrot.lane.b32.xlu0 %v419, 48
      %v454 = vpop.permute.xlu0 %453
      %s456 = scalar_lea.vmem %s320, 8
      %457 = vst.msk [vmem:[%s456] sm:$0xf] %vm415, %v454
      %458 = vrot.lane.b32.xlu0 %v419, 104
      %v459 = vpop.permute.xlu0 %458
      %s461 = scalar_lea.vmem %s304, 12
      %462 = vst.msk [vmem:[%s461] sm:$0xf] %vm415, %v459
      %463 = vrot.lane.b32.xlu0 %v419, 72
      %v464 = vpop.permute.xlu0 %463
      %s466 = scalar_lea.vmem %s312, 12
      %467 = vst.msk [vmem:[%s466] sm:$0xf] %vm415, %v464
      %468 = vrot.lane.b32.xlu0 %v419, 40
      %v469 = vpop.permute.xlu0 %468
      %s471 = scalar_lea.vmem %s320, 12
      %472 = vst.msk [vmem:[%s471] sm:$0xf] %vm415, %v469
      %p473 = scmp.lt.s32.totalorder %s22, 1
      %s474 = scalar_select %p473, %s22, 1
      %p475 = scmp.lt.s32.totalorder %s23, 0
      %s476 = scalar_select %p475, %s23, 0
      %s477 = smul.addr %s474, 4
      %s478 = sadd.s32 %s476, %s477
      %s479 = smul.addr %s478, 4
      %s480 = scalar_lea.vmem %s4, %s479
      %p481 = scmp.lt.s32.totalorder %s22, 1
      %s482 = scalar_select %p481, %s22, 1
      %p483 = scmp.lt.s32.totalorder %s23, 0
      %s484 = scalar_select %p483, %s23, 0
      %s485 = smul.addr %s482, 4
      %s486 = sadd.s32 %s484, %s485
      %s487 = smul.addr %s486, 4
      %s488 = scalar_lea.vmem %s5, %s487
      %p489 = scmp.lt.s32.totalorder %s22, 1
      %s490 = scalar_select %p489, %s22, 1
      %p491 = scmp.lt.s32.totalorder %s23, 0
      %s492 = scalar_select %p491, %s23, 0
      %s493 = smul.addr %s490, 4
      %s494 = sadd.s32 %s492, %s493
      %s495 = smul.addr %s494, 4
      %s496 = scalar_lea.vmem %s6, %s495
      // Predicated region
      $region37: #{gpt2_forward.7} parent=35 // pred_check
        %p497 = pneg %p141
      $region38: #{gpt2_forward.7} parent=35 // pred_check_branch
        %499 = sbr.rel (%p497) target = $region40
      $region39: #{gpt2_forward.7} parent=35 // pred_region
        _
      $region40: #{gpt2_forward.7} parent=35 // pred_fallthru
        _
      // Predicated region
      $region41: #{gpt2_forward.7} parent=35 // pred_check
        %p500 = pneg %p169
      $region42: #{gpt2_forward.7} parent=35 // pred_check_branch
        %502 = sbr.rel (%p500) target = $region44
      $region43: #{gpt2_forward.7} parent=35 // pred_region
        _
      $region44: #{gpt2_forward.7} parent=35 // pred_fallthru
        _
      // Predicated region
      $region45: #{gpt2_forward.7} parent=35 // pred_check
        %p503 = pneg %p197
      $region46: #{gpt2_forward.7} parent=35 // pred_check_branch
        %505 = sbr.rel (%p503) target = $region48
      $region47: #{gpt2_forward.7} parent=35 // pred_region
        _
      $region48: #{gpt2_forward.7} parent=35 // pred_fallthru
        _
    $region36: #{gpt2_forward.7} parent=5 // pred_fallthru
      _
    %p506 = scmp.le.s32.totalorder 2, %s13
    // Predicated region
    $region49: #{gpt2_forward.7} parent=5 // pred_check
      %p507 = pneg %p506
    $region50: #{gpt2_forward.7} parent=5 // pred_check_branch
      %509 = sbr.rel (%p507) target = $region52
    $region51: #{gpt2_forward.7} parent=5 // pred_region
      %s510 = ssub.s32 %s13, 2
      // Predicated region
      $region53: #{gpt2_forward.7} parent=51 // pred_check
        %p511 = pneg %p147
      $region54: #{gpt2_forward.7} parent=51 // pred_check_branch
        %513 = sbr.rel (%p511) target = $region56
      $region55: #{gpt2_forward.7} parent=51 // pred_region
        %p514 = scmp.lt.s32.totalorder %s24, 1
        %s515 = scalar_select %p514, %s24, 1
        %p516 = scmp.lt.s32.totalorder %s25, 0
        %s517 = scalar_select %p516, %s25, 0
        %s518 = smul.addr %s515, 4
        %s519 = sadd.s32 %s517, %s518
        %s520 = smul.addr %s519, 4
        %s521 = scalar_lea.vmem %s4, %s520
      $region56: #{gpt2_forward.7} parent=51 // pred_fallthru
        _
      // Predicated region
      $region57: #{gpt2_forward.7} parent=51 // pred_check
        %p522 = pneg %p175
      $region58: #{gpt2_forward.7} parent=51 // pred_check_branch
        %524 = sbr.rel (%p522) target = $region60
      $region59: #{gpt2_forward.7} parent=51 // pred_region
        %p525 = scmp.lt.s32.totalorder %s24, 1
        %s526 = scalar_select %p525, %s24, 1
        %p527 = scmp.lt.s32.totalorder %s25, 0
        %s528 = scalar_select %p527, %s25, 0
        %s529 = smul.addr %s526, 4
        %s530 = sadd.s32 %s528, %s529
        %s531 = smul.addr %s530, 4
        %s532 = scalar_lea.vmem %s5, %s531
      $region60: #{gpt2_forward.7} parent=51 // pred_fallthru
        _
      // Predicated region
      $region61: #{gpt2_forward.7} parent=51 // pred_check
        %p533 = pneg %p203
      $region62: #{gpt2_forward.7} parent=51 // pred_check_branch
        %535 = sbr.rel (%p533) target = $region64
      $region63: #{gpt2_forward.7} parent=51 // pred_region
        %p536 = scmp.lt.s32.totalorder %s24, 1
        %s537 = scalar_select %p536, %s24, 1
        %p538 = scmp.lt.s32.totalorder %s25, 0
        %s539 = scalar_select %p538, %s25, 0
        %s540 = smul.addr %s537, 4
        %s541 = sadd.s32 %s539, %s540
        %s542 = smul.addr %s541, 4
        %s543 = scalar_lea.vmem %s6, %s542
      $region64: #{gpt2_forward.7} parent=51 // pred_fallthru
        _
    $region52: #{gpt2_forward.7} parent=5 // pred_fallthru
      _
  $region6: #{gpt2_forward.7} parent=0 // loop_footer
    %s17 = sadd.s32 1, %s13
  $region7: #{gpt2_forward.7} parent=0 // loop_footer_branch
    %12 = sbr.rel target = $region3
  $region8: #{gpt2_forward.7} parent=0 // loop_exit
    _

// kernel: gpt2_forward.8
$region0: #{gpt2_forward.8}
  #allocation0 [shape = 'u32[]', space=smem, size = 0x4, offset = 0x4, fixed_abs, tag = 'smem constant byte address 0x4 - core index']
  #allocation1 [shape = 'u32[144,128]{1,0:T(1,128)}', space=vmem, size = 0x12000, scoped, tag = 'internal scratch']
  #allocation2 [shape = 'f32[4,8,1]{2,1,0:T(8,128)}', space=vmem, size = 0x4000, scoped, tag = 'scratch operand']
  #allocation3 [shape = 'f32[4,8,1]{2,1,0:T(8,128)}', space=vmem, size = 0x4000, scoped, tag = 'scratch operand']
  #allocation4 [shape = 'f32[4,8,8]{2,1,0:T(8,128)}', space=vmem, size = 0x4000, scoped, tag = 'scratch operand']
  %s0 = inlined_call_operand.vmem [shape: bf16[2,4,8,8], index: 0, kind: input, shape index: {}]
  %s1 = inlined_call_operand.vmem [shape: bf16[2,4,8,8], index: 1, kind: input, shape index: {}]
  %s2 = inlined_call_operand.vmem [shape: bf16[2,4,8,8], index: 2, kind: input, shape index: {}]
  %s3 = inlined_call_operand.vmem [shape: bf16[2,8,32], index: 3, kind: output, shape index: {}]
  %s4 = sld [smem:[#allocation0]]
  $region53: #{gpt2_forward.8} parent=0
    _
  %s6 = ssub.s32 1, %s4
  %s7 = scalar_select 0, %s6, %s4
  loop: start=0, step=1, limit=4
  $region2: #{gpt2_forward.8} parent=0 // loop_pre_header
    _
  $region3: #{gpt2_forward.8} parent=0 // loop_header
    %s9 = sphi 0, %s13
    %p10 = scmp.ge.s32.totalorder %s9, 4
    %s16 = sphi 0, %s42
    %s17 = sphi 0, %s38
    %s18 = sphi 0, %s34
    %s19 = sphi 0, %s30
    %s20 = sphi 0, %s16
    %s21 = sphi 0, %s17
    %s22 = sphi 0, %s18
    %s23 = sphi 0, %s19
    %s24 = sphi 0, %s20
    %s25 = sphi 0, %s21
    %s26 = sphi 0, %s22
    %s27 = sphi 0, %s23
    %s49 = sphi 0, %s51
    %s52 = sphi 0, %s49
    %s53 = sphi 0, %s52
    %s69 = sphi 0, %s53
    %s79 = sphi 0, %s81
    %s82 = sphi 0, %s79
    %s83 = sphi 0, %s82
    %s99 = sphi 0, %s83
    %s109 = sphi 0, %s111
    %s112 = sphi 0, %s109
    %s113 = sphi 0, %s112
    %s129 = sphi 0, %s113
    %s139 = sphi 0, %s141
    %s142 = sphi 0, %s139
    %s143 = sphi 0, %s142
    %s159 = sphi 0, %s143
  $region4: #{gpt2_forward.8} parent=0 // loop_header_branch
    %12 = sbr.rel (%p10) target = $region8
  $region5: #{gpt2_forward.8} parent=0 // loop_body
    %s14 = ssub.s32 %s9, 1
    %s15 = ssub.s32 %s9, 2
    %s28 = sadd.s32 1, %s19
    %p29 = scmp.ge.s32.totalorder %s28, 1
    %s30 = scalar_select %p29, 0, %s28
    %s31 = sadd.s32 1, %s18
    %s32 = scalar_select %p29, %s31, %s18
    %p33 = scmp.ge.s32.totalorder %s32, 1
    %s34 = scalar_select %p33, 0, %s32
    %s35 = sadd.s32 1, %s17
    %s36 = scalar_select %p33, %s35, %s17
    %p37 = scmp.ge.s32.totalorder %s36, 1
    %s38 = scalar_select %p37, 0, %s36
    %s39 = sadd.s32 1, %s16
    %s40 = scalar_select %p37, %s39, %s16
    %p41 = scmp.ge.s32.totalorder %s40, 2
    %s42 = scalar_select %p41, 0, %s40
    %s43 = ssub.s32 %s16, %s42
    %s44 = ssub.s32 %s17, %s38
    %s45 = sor.u32 %s43, %s44
    %s46 = ssub.s32 %s18, %s34
    %s47 = sor.u32 %s45, %s46
    %p48 = scmp.eq.s32.totalorder %s47, 0
    %s50 = sadd.s32 %s49, 1
    %s51 = scalar_select %p48, %s49, %s50
    %p54 = pneg %p48
    %p55 = scmp.eq.s32.totalorder %s9, 1
    %p56 = por %p54, %p55
    %p57 = scmp.ne.s32.totalorder %s49, %s52
    %p58 = scmp.eq.s32.totalorder %s9, 0
    %p59 = por %p57, %p58
    %p60 = scmp.ne.s32.totalorder %s49, %s52
    %p61 = scmp.eq.s32.totalorder %s14, 1
    %p62 = por %p60, %p61
    %p63 = scmp.ne.s32.totalorder %s52, %s53
    %p64 = scmp.eq.s32.totalorder %s14, 0
    %p65 = por %p63, %p64
    %p66 = scmp.ne.s32.totalorder %s52, %s53
    %p67 = scmp.eq.s32.totalorder %s15, 1
    %p68 = por %p66, %p67
    %p70 = scmp.ne.s32.totalorder %s53, %s69
    %p71 = scmp.eq.s32.totalorder %s15, 0
    %p72 = por %p70, %p71
    %s73 = ssub.s32 %s16, %s42
    %s74 = ssub.s32 %s17, %s38
    %s75 = sor.u32 %s73, %s74
    %s76 = ssub.s32 %s19, %s30
    %s77 = sor.u32 %s75, %s76
    %p78 = scmp.eq.s32.totalorder %s77, 0
    %s80 = sadd.s32 %s79, 1
    %s81 = scalar_select %p78, %s79, %s80
    %p84 = pneg %p78
    %p85 = scmp.eq.s32.totalorder %s9, 1
    %p86 = por %p84, %p85
    %p87 = scmp.ne.s32.totalorder %s79, %s82
    %p88 = scmp.eq.s32.totalorder %s9, 0
    %p89 = por %p87, %p88
    %p90 = scmp.ne.s32.totalorder %s79, %s82
    %p91 = scmp.eq.s32.totalorder %s14, 1
    %p92 = por %p90, %p91
    %p93 = scmp.ne.s32.totalorder %s82, %s83
    %p94 = scmp.eq.s32.totalorder %s14, 0
    %p95 = por %p93, %p94
    %p96 = scmp.ne.s32.totalorder %s82, %s83
    %p97 = scmp.eq.s32.totalorder %s15, 1
    %p98 = por %p96, %p97
    %p100 = scmp.ne.s32.totalorder %s83, %s99
    %p101 = scmp.eq.s32.totalorder %s15, 0
    %p102 = por %p100, %p101
    %s103 = ssub.s32 %s16, %s42
    %s104 = ssub.s32 %s17, %s38
    %s105 = sor.u32 %s103, %s104
    %s106 = ssub.s32 %s19, %s30
    %s107 = sor.u32 %s105, %s106
    %p108 = scmp.eq.s32.totalorder %s107, 0
    %s110 = sadd.s32 %s109, 1
    %s111 = scalar_select %p108, %s109, %s110
    %p114 = pneg %p108
    %p115 = scmp.eq.s32.totalorder %s9, 1
    %p116 = por %p114, %p115
    %p117 = scmp.ne.s32.totalorder %s109, %s112
    %p118 = scmp.eq.s32.totalorder %s9, 0
    %p119 = por %p117, %p118
    %p120 = scmp.ne.s32.totalorder %s109, %s112
    %p121 = scmp.eq.s32.totalorder %s14, 1
    %p122 = por %p120, %p121
    %p123 = scmp.ne.s32.totalorder %s112, %s113
    %p124 = scmp.eq.s32.totalorder %s14, 0
    %p125 = por %p123, %p124
    %p126 = scmp.ne.s32.totalorder %s112, %s113
    %p127 = scmp.eq.s32.totalorder %s15, 1
    %p128 = por %p126, %p127
    %p130 = scmp.ne.s32.totalorder %s113, %s129
    %p131 = scmp.eq.s32.totalorder %s15, 0
    %p132 = por %p130, %p131
    %s133 = ssub.s32 %s16, %s42
    %s134 = ssub.s32 %s18, %s34
    %s135 = sor.u32 %s133, %s134
    %s136 = ssub.s32 %s17, %s38
    %s137 = sor.u32 %s135, %s136
    %p138 = scmp.eq.s32.totalorder %s137, 0
    %s140 = sadd.s32 %s139, 1
    %s141 = scalar_select %p138, %s139, %s140
    %p144 = pneg %p138
    %p145 = scmp.eq.s32.totalorder %s9, 1
    %p146 = por %p144, %p145
    %p147 = scmp.ne.s32.totalorder %s139, %s142
    %p148 = scmp.eq.s32.totalorder %s9, 0
    %p149 = por %p147, %p148
    %p150 = scmp.ne.s32.totalorder %s139, %s142
    %p151 = scmp.eq.s32.totalorder %s14, 1
    %p152 = por %p150, %p151
    %p153 = scmp.ne.s32.totalorder %s142, %s143
    %p154 = scmp.eq.s32.totalorder %s14, 0
    %p155 = por %p153, %p154
    %p156 = scmp.ne.s32.totalorder %s142, %s143
    %p157 = scmp.eq.s32.totalorder %s15, 1
    %p158 = por %p156, %p157
    %p160 = scmp.ne.s32.totalorder %s143, %s159
    %p161 = scmp.eq.s32.totalorder %s15, 0
    %p162 = por %p160, %p161
    %p163 = scmp.le.s32.totalorder 1, %s9
    %p164 = scmp.lt.s32.totalorder %s9, 3
    %p165 = pnand %p163, %p164
    %p166 = pneg %p165
    // Predicated region
    $region9: #{gpt2_forward.8} parent=5 // pred_check
      _
    $region10: #{gpt2_forward.8} parent=5 // pred_check_branch
      %168 = sbr.rel (%p165) target = $region12
    $region11: #{gpt2_forward.8} parent=5 // pred_region
      %s169 = ssub.s32 %s9, 1
    $region12: #{gpt2_forward.8} parent=5 // pred_fallthru
      _
    %p170 = scmp.lt.s32.totalorder %s9, 2
    // Predicated region
    $region13: #{gpt2_forward.8} parent=5 // pred_check
      %p171 = pneg %p170
    $region14: #{gpt2_forward.8} parent=5 // pred_check_branch
      %173 = sbr.rel (%p171) target = $region16
    $region15: #{gpt2_forward.8} parent=5 // pred_region
      // Predicated region
      $region17: #{gpt2_forward.8} parent=15 // pred_check
        %p174 = pneg %p59
      $region18: #{gpt2_forward.8} parent=15 // pred_check_branch
        %176 = sbr.rel (%p174) target = $region20
      $region19: #{gpt2_forward.8} parent=15 // pred_region
        %s177 = smul.u32 4, %s17
        %p178 = scmp.lt.s32.totalorder %s16, 1
        %s179 = scalar_select %p178, %s16, 1
        %p180 = scmp.lt.s32.totalorder %s177, 3
        %s181 = scalar_select %p180, %s177, 3
        %p182 = scmp.lt.s32.totalorder %s18, 0
        %s183 = scalar_select %p182, %s18, 0
        %s184 = sadd.s32 %s183, %s181
        %s185 = smul.addr %s179, 4
        %s186 = sadd.s32 %s184, %s185
        %s187 = smul.addr %s186, 4
        %s188 = scalar_lea.vmem %s0, %s187
        %s189 = smul.u32 4, %s17
      $region20: #{gpt2_forward.8} parent=15 // pred_fallthru
        _
      // Predicated region
      $region21: #{gpt2_forward.8} parent=15 // pred_check
        %p190 = pneg %p89
      $region22: #{gpt2_forward.8} parent=15 // pred_check_branch
        %192 = sbr.rel (%p190) target = $region24
      $region23: #{gpt2_forward.8} parent=15 // pred_region
        %s193 = smul.u32 4, %s17
        %p194 = scmp.lt.s32.totalorder %s16, 1
        %s195 = scalar_select %p194, %s16, 1
        %p196 = scmp.lt.s32.totalorder %s193, 3
        %s197 = scalar_select %p196, %s193, 3
        %p198 = scmp.lt.s32.totalorder %s19, 0
        %s199 = scalar_select %p198, %s19, 0
        %s200 = sadd.s32 %s199, %s197
        %s201 = smul.addr %s195, 4
        %s202 = sadd.s32 %s200, %s201
        %s203 = smul.addr %s202, 4
        %s204 = scalar_lea.vmem %s1, %s203
        %s205 = smul.u32 4, %s17
      $region24: #{gpt2_forward.8} parent=15 // pred_fallthru
        _
      // Predicated region
      $region25: #{gpt2_forward.8} parent=15 // pred_check
        %p206 = pneg %p119
      $region26: #{gpt2_forward.8} parent=15 // pred_check_branch
        %208 = sbr.rel (%p206) target = $region28
      $region27: #{gpt2_forward.8} parent=15 // pred_region
        %s209 = smul.u32 4, %s17
        %p210 = scmp.lt.s32.totalorder %s16, 1
        %s211 = scalar_select %p210, %s16, 1
        %p212 = scmp.lt.s32.totalorder %s209, 3
        %s213 = scalar_select %p212, %s209, 3
        %p214 = scmp.lt.s32.totalorder %s19, 0
        %s215 = scalar_select %p214, %s19, 0
        %s216 = sadd.s32 %s215, %s213
        %s217 = smul.addr %s211, 4
        %s218 = sadd.s32 %s216, %s217
        %s219 = smul.addr %s218, 4
        %s220 = scalar_lea.vmem %s2, %s219
        %s221 = smul.u32 4, %s17
      $region28: #{gpt2_forward.8} parent=15 // pred_fallthru
        _
    $region16: #{gpt2_forward.8} parent=5 // pred_fallthru
      _
    %p222 = scmp.le.s32.totalorder 1, %s9
    %p223 = scmp.lt.s32.totalorder %s9, 3
    %p224 = pnand %p222, %p223
    %p225 = pneg %p224
    // Predicated region
    $region29: #{gpt2_forward.8} parent=5 // pred_check
      _
    $region30: #{gpt2_forward.8} parent=5 // pred_check_branch
      %227 = sbr.rel (%p224) target = $region32
    $region31: #{gpt2_forward.8} parent=5 // pred_region
      %s228 = ssub.s32 %s9, 1
      %s229 = smul.u32 4, %s21
      %p230 = scmp.lt.s32.totalorder %s20, 1
      %s231 = scalar_select %p230, %s20, 1
      %p232 = scmp.lt.s32.totalorder %s229, 3
      %s233 = scalar_select %p232, %s229, 3
      %p234 = scmp.lt.s32.totalorder %s22, 0
      %s235 = scalar_select %p234, %s22, 0
      %s236 = sadd.s32 %s235, %s233
      %s237 = smul.addr %s231, 4
      %s238 = sadd.s32 %s236, %s237
      %s239 = smul.addr %s238, 4
      %s240 = scalar_lea.vmem %s0, %s239
      %p241 = pneg %p65
      %p242 = pneg %p62
      %s243 = smul.u32 4, %s21
      %p244 = scmp.lt.s32.totalorder %s20, 1
      %s245 = scalar_select %p244, %s20, 1
      %p246 = scmp.lt.s32.totalorder %s243, 3
      %s247 = scalar_select %p246, %s243, 3
      %p248 = scmp.lt.s32.totalorder %s23, 0
      %s249 = scalar_select %p248, %s23, 0
      %s250 = sadd.s32 %s249, %s247
      %s251 = smul.addr %s245, 4
      %s252 = sadd.s32 %s250, %s251
      %s253 = smul.addr %s252, 4
      %s254 = scalar_lea.vmem %s1, %s253
      %p255 = pneg %p95
      %p256 = pneg %p92
      %s257 = smul.u32 4, %s21
      %p258 = scmp.lt.s32.totalorder %s20, 1
      %s259 = scalar_select %p258, %s20, 1
      %p260 = scmp.lt.s32.totalorder %s257, 3
      %s261 = scalar_select %p260, %s257, 3
      %p262 = scmp.lt.s32.totalorder %s23, 0
      %s263 = scalar_select %p262, %s23, 0
      %s264 = sadd.s32 %s263, %s261
      %s265 = smul.addr %s259, 4
      %s266 = sadd.s32 %s264, %s265
      %s267 = smul.addr %s266, 4
      %s268 = scalar_lea.vmem %s2, %s267
      %p269 = pneg %p125
      %p270 = pneg %p122
      %p271 = pneg %p155
      %p272 = pneg %p152
      %p273 = scmp.lt.s32.totalorder %s20, 1
      %s274 = scalar_select %p273, %s20, 1
      %p275 = scmp.lt.s32.totalorder %s22, 0
      %s276 = scalar_select %p275, %s22, 0
      %p277 = scmp.lt.s32.totalorder %s21, 0
      %s278 = scalar_select %p277, %s21, 0
      %s279 = sadd.s32 %s278, %s276
      %s280 = sadd.s32 %s279, %s274
      %s281 = smul.addr %s280, 4
      %s282 = scalar_lea.vmem %s3, %s281
      %s283 = smul.u32 4, %s21
      %p284 = scmp.lt.s32.totalorder %s20, 1
      %s285 = scalar_select %p284, %s20, 1
      %p286 = scmp.lt.s32.totalorder %s283, 3
      %s287 = scalar_select %p286, %s283, 3
      %p288 = scmp.lt.s32.totalorder %s22, 0
      %s289 = scalar_select %p288, %s22, 0
      %s290 = sadd.s32 %s289, %s287
      %s291 = smul.addr %s285, 4
      %s292 = sadd.s32 %s290, %s291
      %s293 = smul.addr %s292, 4
      %s294 = scalar_lea.vmem %s0, %s293
      %s295 = smul.u32 4, %s21
      %s296 = smul.u32 4, %s21
      %p297 = scmp.lt.s32.totalorder %s20, 1
      %s298 = scalar_select %p297, %s20, 1
      %p299 = scmp.lt.s32.totalorder %s296, 3
      %s300 = scalar_select %p299, %s296, 3
      %p301 = scmp.lt.s32.totalorder %s23, 0
      %s302 = scalar_select %p301, %s23, 0
      %s303 = sadd.s32 %s302, %s300
      %s304 = smul.addr %s298, 4
      %s305 = sadd.s32 %s303, %s304
      %s306 = smul.addr %s305, 4
      %s307 = scalar_lea.vmem %s1, %s306
      %s308 = smul.u32 4, %s21
      %s309 = smul.u32 4, %s21
      %p310 = scmp.lt.s32.totalorder %s20, 1
      %s311 = scalar_select %p310, %s20, 1
      %p312 = scmp.lt.s32.totalorder %s309, 3
      %s313 = scalar_select %p312, %s309, 3
      %p314 = scmp.lt.s32.totalorder %s23, 0
      %s315 = scalar_select %p314, %s23, 0
      %s316 = sadd.s32 %s315, %s313
      %s317 = smul.addr %s311, 4
      %s318 = sadd.s32 %s316, %s317
      %s319 = smul.addr %s318, 4
      %s320 = scalar_lea.vmem %s2, %s319
      %s321 = smul.u32 4, %s21
      %p322 = scmp.lt.s32.totalorder %s20, 1
      %s323 = scalar_select %p322, %s20, 1
      %p324 = scmp.lt.s32.totalorder %s22, 0
      %s325 = scalar_select %p324, %s22, 0
      %p326 = scmp.lt.s32.totalorder %s21, 0
      %s327 = scalar_select %p326, %s21, 0
      %s328 = sadd.s32 %s327, %s325
      %s329 = sadd.s32 %s328, %s323
      %s330 = smul.addr %s329, 4
      %s331 = scalar_lea.vmem %s3, %s330
      %p333 = scmp.eq.s32.totalorder %s23, 0
      // Predicated region
      $region33: #{gpt2_forward.8} parent=31 // pred_check
        %p334 = pneg %p333
      $region34: #{gpt2_forward.8} parent=31 // pred_check_branch
        %336 = sbr.rel (%p334) target = $region36
      $region35: #{gpt2_forward.8} parent=31 // pred_region
        %vm337 = vcmask 7168
        %338 = vst.msk [vmem:[#allocation2] sm:$0xff] %vm337, -inf
        %339 = vst.msk [vmem:[#allocation2 + $0x8] sm:$0xff] %vm337, -inf
        %340 = vst.msk [vmem:[#allocation2 + $0x10] sm:$0xff] %vm337, -inf
        %341 = vst.msk [vmem:[#allocation2 + $0x18] sm:$0xff] %vm337, -inf
        %342 = vst.msk [vmem:[#allocation3] sm:$0xff] %vm337, 0.0
        %343 = vst.msk [vmem:[#allocation3 + $0x8] sm:$0xff] %vm337, 0.0
        %344 = vst.msk [vmem:[#allocation3 + $0x10] sm:$0xff] %vm337, 0.0
        %345 = vst.msk [vmem:[#allocation3 + $0x18] sm:$0xff] %vm337, 0.0
        %vm346 = vcmask 64512
        %347 = vst.msk [vmem:[#allocation4] sm:$0xff] %vm346, 0.0
        %348 = vst.msk [vmem:[#allocation4 + $0x8] sm:$0xff] %vm346, 0.0
        %349 = vst.msk [vmem:[#allocation4 + $0x10] sm:$0xff] %vm346, 0.0
        %350 = vst.msk [vmem:[#allocation4 + $0x18] sm:$0xff] %vm346, 0.0
      $region36: #{gpt2_forward.8} parent=31 // pred_fallthru
        _
      %v351 = vld [vmem:[%s294] sm:$0xf]
      %v352 = vld [vmem:[%s294 + $0x4] sm:$0xf]
      %v353 = vld [vmem:[%s294 + $0x8] sm:$0xf]
      %v354 = vld [vmem:[%s294 + $0xc] sm:$0xf]
      %v355 = vld [vmem:[%s307] sm:$0xf]
      %v356 = vld [vmem:[%s307 + $0x4] sm:$0xf]
      %v357 = vld [vmem:[%s307 + $0x8] sm:$0xf]
      %v358 = vld [vmem:[%s307 + $0xc] sm:$0xf]
      %v359 = vld [vmem:[%s320] sm:$0xf]
      %v360 = vld [vmem:[%s320 + $0x4] sm:$0xf]
      %v361 = vld [vmem:[%s320 + $0x8] sm:$0xf]
      %v362 = vld [vmem:[%s320 + $0xc] sm:$0xf]
      %vm363 = vcmask 64512
      %v365 = vsel %vm363, %v351, 0
      %v368 = vsel %vm363, %v355, 0
      %370 = vmatprep.subr.bf16.mxu0 0
      %371 = vmatpush1.bf16.xpose.msra.mxu0 %v368
      %372 = vmatprep.subr.bf16.mxu0 0
      %373 = vmatpush1.bf16.xpose.msra.mxu0 0
      %374 = vmatprep.subr.bf16.mxu0 0
      %375 = vmatpush1.bf16.xpose.msra.mxu0 0
      %376 = vmatprep.subr.bf16.mxu0 0
      %377 = vmatpush1.bf16.xpose.msra.mxu0 0
      %378 = vmatprep.subr.bf16.mxu0 0
      %379 = vmatpush1.bf16.xpose.msra.mxu0 0
      %380 = vmatprep.subr.bf16.mxu0 0
      %381 = vmatpush1.bf16.xpose.msra.mxu0 0
      %382 = vmatprep.subr.bf16.mxu0 0
      %383 = vmatpush1.bf16.xpose.msra.mxu0 0
      %384 = vmatprep.subr.bf16.mxu0 0
      %385 = vmatpush1.bf16.xpose.msra.mxu0 0
      %386 = vmatprep.subr.bf16.mxu0 0
      %387 = vmatpush1.bf16.xpose.msra.mxu0 0
      %388 = vmatprep.subr.bf16.mxu0 0
      %389 = vmatpush1.bf16.xpose.msra.mxu0 0
      %390 = vmatprep.subr.bf16.mxu0 0
      %391 = vmatpush1.bf16.xpose.msra.mxu0 0
      %392 = vmatprep.subr.bf16.mxu0 0
      %393 = vmatpush1.bf16.xpose.msra.mxu0 0
      %394 = vmatprep.subr.bf16.mxu0 0
      %395 = vmatpush1.bf16.xpose.msra.mxu0 0
      %396 = vmatprep.subr.bf16.mxu0 0
      %397 = vmatpush1.bf16.xpose.msra.mxu0 0
      %398 = vmatprep.subr.bf16.mxu0 0
      %399 = vmatpush1.bf16.xpose.msra.mxu0 0
      %400 = vmatprep.subr.bf16.mxu0 0
      %401 = vmatpush1.bf16.xpose.msra.mxu0 0
      %402 = vmatprep.mubr.bf16.mxu0 0
      %403 = vmatmul.mubr.bf16.gmra.mrb[0].mxu0 %v365
      %v404 = vpop.f32.mrb[0].mxu0
      %v405 = vadd.f32 0.0, %v404
      %v406 = vpop.f32.mrb[0].mxu0
      %v407 = vpop.f32.mrb[0].mxu0
      %v408 = vpop.f32.mrb[0].mxu0
      %409 = vdwg.mxu0
      %v411 = vsel %vm363, %v352, 0
      %v414 = vsel %vm363, %v356, 0
      %416 = vmatprep.subr.bf16.mxu0 0
      %417 = vmatpush1.bf16.xpose.msra.mxu0 %v414
      %418 = vmatprep.subr.bf16.mxu0 0
      %419 = vmatpush1.bf16.xpose.msra.mxu0 0
      %420 = vmatprep.subr.bf16.mxu0 0
      %421 = vmatpush1.bf16.xpose.msra.mxu0 0
      %422 = vmatprep.subr.bf16.mxu0 0
      %423 = vmatpush1.bf16.xpose.msra.mxu0 0
      %424 = vmatprep.subr.bf16.mxu0 0
      %425 = vmatpush1.bf16.xpose.msra.mxu0 0
      %426 = vmatprep.subr.bf16.mxu0 0
      %427 = vmatpush1.bf16.xpose.msra.mxu0 0
      %428 = vmatprep.subr.bf16.mxu0 0
      %429 = vmatpush1.bf16.xpose.msra.mxu0 0
      %430 = vmatprep.subr.bf16.mxu0 0
      %431 = vmatpush1.bf16.xpose.msra.mxu0 0
      %432 = vmatprep.subr.bf16.mxu0 0
      %433 = vmatpush1.bf16.xpose.msra.mxu0 0
      %434 = vmatprep.subr.bf16.mxu0 0
      %435 = vmatpush1.bf16.xpose.msra.mxu0 0
      %436 = vmatprep.subr.bf16.mxu0 0
      %437 = vmatpush1.bf16.xpose.msra.mxu0 0
      %438 = vmatprep.subr.bf16.mxu0 0
      %439 = vmatpush1.bf16.xpose.msra.mxu0 0
      %440 = vmatprep.subr.bf16.mxu0 0
      %441 = vmatpush1.bf16.xpose.msra.mxu0 0
      %442 = vmatprep.subr.bf16.mxu0 0
      %443 = vmatpush1.bf16.xpose.msra.mxu0 0
      %444 = vmatprep.subr.bf16.mxu0 0
      %445 = vmatpush1.bf16.xpose.msra.mxu0 0
      %446 = vmatprep.subr.bf16.mxu0 0
      %447 = vmatpush1.bf16.xpose.msra.mxu0 0
      %448 = vmatprep.mubr.bf16.mxu0 0
      %449 = vmatmul.mubr.bf16.gmra.mrb[0].mxu0 %v411
      %v450 = vpop.f32.mrb[0].mxu0
      %v451 = vadd.f32 0.0, %v450
      %v452 = vpop.f32.mrb[0].mxu0
      %v453 = vpop.f32.mrb[0].mxu0
      %v454 = vpop.f32.mrb[0].mxu0
      %455 = vdwg.mxu0
      %v457 = vsel %vm363, %v353, 0
      %v460 = vsel %vm363, %v357, 0
      %462 = vmatprep.subr.bf16.mxu0 0
      %463 = vmatpush1.bf16.xpose.msra.mxu0 %v460
      %464 = vmatprep.subr.bf16.mxu0 0
      %465 = vmatpush1.bf16.xpose.msra.mxu0 0
      %466 = vmatprep.subr.bf16.mxu0 0
      %467 = vmatpush1.bf16.xpose.msra.mxu0 0
      %468 = vmatprep.subr.bf16.mxu0 0
      %469 = vmatpush1.bf16.xpose.msra.mxu0 0
      %470 = vmatprep.subr.bf16.mxu0 0
      %471 = vmatpush1.bf16.xpose.msra.mxu0 0
      %472 = vmatprep.subr.bf16.mxu0 0
      %473 = vmatpush1.bf16.xpose.msra.mxu0 0
      %474 = vmatprep.subr.bf16.mxu0 0
      %475 = vmatpush1.bf16.xpose.msra.mxu0 0
      %476 = vmatprep.subr.bf16.mxu0 0
      %477 = vmatpush1.bf16.xpose.msra.mxu0 0
      %478 = vmatprep.subr.bf16.mxu0 0
      %479 = vmatpush1.bf16.xpose.msra.mxu0 0
      %480 = vmatprep.subr.bf16.mxu0 0
      %481 = vmatpush1.bf16.xpose.msra.mxu0 0
      %482 = vmatprep.subr.bf16.mxu0 0
      %483 = vmatpush1.bf16.xpose.msra.mxu0 0
      %484 = vmatprep.subr.bf16.mxu0 0
      %485 = vmatpush1.bf16.xpose.msra.mxu0 0
      %486 = vmatprep.subr.bf16.mxu0 0
      %487 = vmatpush1.bf16.xpose.msra.mxu0 0
      %488 = vmatprep.subr.bf16.mxu0 0
      %489 = vmatpush1.bf16.xpose.msra.mxu0 0
      %490 = vmatprep.subr.bf16.mxu0 0
      %491 = vmatpush1.bf16.xpose.msra.mxu0 0
      %492 = vmatprep.subr.bf16.mxu0 0
      %493 = vmatpush1.bf16.xpose.msra.mxu0 0
      %494 = vmatprep.mubr.bf16.mxu0 0
      %495 = vmatmul.mubr.bf16.gmra.mrb[0].mxu0 %v457
      %v496 = vpop.f32.mrb[0].mxu0
      %v497 = vadd.f32 0.0, %v496
      %v498 = vpop.f32.mrb[0].mxu0
      %v499 = vpop.f32.mrb[0].mxu0
      %v500 = vpop.f32.mrb[0].mxu0
      %501 = vdwg.mxu0
      %v503 = vsel %vm363, %v354, 0
      %v506 = vsel %vm363, %v358, 0
      %508 = vmatprep.subr.bf16.mxu0 0
      %509 = vmatpush1.bf16.xpose.msra.mxu0 %v506
      %510 = vmatprep.subr.bf16.mxu0 0
      %511 = vmatpush1.bf16.xpose.msra.mxu0 0
      %512 = vmatprep.subr.bf16.mxu0 0
      %513 = vmatpush1.bf16.xpose.msra.mxu0 0
      %514 = vmatprep.subr.bf16.mxu0 0
      %515 = vmatpush1.bf16.xpose.msra.mxu0 0
      %516 = vmatprep.subr.bf16.mxu0 0
      %517 = vmatpush1.bf16.xpose.msra.mxu0 0
      %518 = vmatprep.subr.bf16.mxu0 0
      %519 = vmatpush1.bf16.xpose.msra.mxu0 0
      %520 = vmatprep.subr.bf16.mxu0 0
      %521 = vmatpush1.bf16.xpose.msra.mxu0 0
      %522 = vmatprep.subr.bf16.mxu0 0
      %523 = vmatpush1.bf16.xpose.msra.mxu0 0
      %524 = vmatprep.subr.bf16.mxu0 0
      %525 = vmatpush1.bf16.xpose.msra.mxu0 0
      %526 = vmatprep.subr.bf16.mxu0 0
      %527 = vmatpush1.bf16.xpose.msra.mxu0 0
      %528 = vmatprep.subr.bf16.mxu0 0
      %529 = vmatpush1.bf16.xpose.msra.mxu0 0
      %530 = vmatprep.subr.bf16.mxu0 0
      %531 = vmatpush1.bf16.xpose.msra.mxu0 0
      %532 = vmatprep.subr.bf16.mxu0 0
      %533 = vmatpush1.bf16.xpose.msra.mxu0 0
      %534 = vmatprep.subr.bf16.mxu0 0
      %535 = vmatpush1.bf16.xpose.msra.mxu0 0
      %536 = vmatprep.subr.bf16.mxu0 0
      %537 = vmatpush1.bf16.xpose.msra.mxu0 0
      %538 = vmatprep.subr.bf16.mxu0 0
      %539 = vmatpush1.bf16.xpose.msra.mxu0 0
      %540 = vmatprep.mubr.bf16.mxu0 0
      %541 = vmatmul.mubr.bf16.gmra.mrb[0].mxu0 %v503
      %v542 = vpop.f32.mrb[0].mxu0
      %v543 = vadd.f32 0.0, %v542
      %v544 = vpop.f32.mrb[0].mxu0
      %v545 = vpop.f32.mrb[0].mxu0
      %v546 = vpop.f32.mrb[0].mxu0
      %547 = vdwg.mxu0
      %v548 = vld [vmem:[#allocation2] sm:$0xff]
      %v549 = vld [vmem:[#allocation2 + $0x8] sm:$0xff]
      %v550 = vld [vmem:[#allocation2 + $0x10] sm:$0xff]
      %v551 = vld [vmem:[#allocation2 + $0x18] sm:$0xff]
      %v552 = vsel %vm363, %v405, -inf
      %553 = vmax.xlane.f32.xlu0 %v552
      %v554 = vpop.xlane.xlu0 %553
      %v555 = vsel %vm363, %v451, -inf
      %556 = vmax.xlane.f32.xlu0 %v555
      %v557 = vpop.xlane.xlu0 %556
      %v558 = vsel %vm363, %v497, -inf
      %559 = vmax.xlane.f32.xlu0 %v558
      %v560 = vpop.xlane.xlu0 %559
      %v561 = vsel %vm363, %v543, -inf
      %562 = vmax.xlane.f32.xlu0 %v561
      %v563 = vpop.xlane.xlu0 %562
      %v564 = vmax.f32 %v548, %v554
      %v565 = vmax.f32 %v549, %v557
      %v566 = vmax.f32 %v550, %v560
      %v567 = vmax.f32 %v551, %v563
      %v568 = vsub.f32 %v548, %v564
      %v569 = vsub.f32 %v549, %v565
      %v570 = vsub.f32 %v550, %v566
      %v571 = vsub.f32 %v551, %v567
      %v572 = vmul.f32 %v568, 1.442695
      %v573 = vpow.pop %v572
      %v574 = vmul.f32 %v569, 1.442695
      %v575 = vpow.pop %v574
      %v576 = vmul.f32 %v570, 1.442695
      %v577 = vpow.pop %v576
      %v578 = vmul.f32 %v571, 1.442695
      %v579 = vpow.pop %v578
      %581 = vset.pattern.permute.xlu0 0
      %582 = vperm.xlu0 %581, %v564
      %v583 = vpop.permute.xlu0 %582
      %586 = vset.pattern.permute.xlu0 0
      %587 = vperm.xlu0 %586, %v565
      %v588 = vpop.permute.xlu0 %587
      %591 = vset.pattern.permute.xlu0 0
      %592 = vperm.xlu0 %591, %v566
      %v593 = vpop.permute.xlu0 %592
      %596 = vset.pattern.permute.xlu0 0
      %597 = vperm.xlu0 %596, %v567
      %v598 = vpop.permute.xlu0 %597
      %v600 = vsub.f32 %v405, %v583
      %v601 = vsub.f32 %v451, %v588
      %v602 = vsub.f32 %v497, %v593
      %v603 = vsub.f32 %v543, %v598
      %v604 = vmul.f32 %v600, 1.442695
      %v605 = vpow.pop %v604
      %v606 = vmul.f32 %v601, 1.442695
      %v607 = vpow.pop %v606
      %v608 = vmul.f32 %v602, 1.442695
      %v609 = vpow.pop %v608
      %v610 = vmul.f32 %v603, 1.442695
      %v611 = vpow.pop %v610
      %v612 = vld [vmem:[#allocation3] sm:$0xff]
      %v613 = vld [vmem:[#allocation3 + $0x8] sm:$0xff]
      %v614 = vld [vmem:[#allocation3 + $0x10] sm:$0xff]
      %v615 = vld [vmem:[#allocation3 + $0x18] sm:$0xff]
      %v616 = vmul.f32 %v573, %v612
      %v617 = vmul.f32 %v575, %v613
      %v618 = vmul.f32 %v577, %v614
      %v619 = vmul.f32 %v579, %v615
      %v620 = vsel %vm363, %v605, 0.0
      %621 = vadd.xlane.f32.xlu0 %v620
      %v622 = vpop.xlane.xlu0 %621
      %v623 = vsel %vm363, %v607, 0.0
      %624 = vadd.xlane.f32.xlu0 %v623
      %v625 = vpop.xlane.xlu0 %624
      %v626 = vsel %vm363, %v609, 0.0
      %627 = vadd.xlane.f32.xlu0 %v626
      %v628 = vpop.xlane.xlu0 %627
      %v629 = vsel %vm363, %v611, 0.0
      %630 = vadd.xlane.f32.xlu0 %v629
      %v631 = vpop.xlane.xlu0 %630
      %v632 = vadd.f32 %v616, %v622
      %v633 = vadd.f32 %v617, %v625
      %v634 = vadd.f32 %v618, %v628
      %v635 = vadd.f32 %v619, %v631
      %vm636 = vcmask 7168
      %637 = vst.msk [vmem:[#allocation3] sm:$0xff] %vm636, %v632
      %638 = vst.msk [vmem:[#allocation3 + $0x8] sm:$0xff] %vm636, %v633
      %639 = vst.msk [vmem:[#allocation3 + $0x10] sm:$0xff] %vm636, %v634
      %640 = vst.msk [vmem:[#allocation3 + $0x18] sm:$0xff] %vm636, %v635
      %v641 = vld [vmem:[#allocation4] sm:$0xff]
      %v642 = vld [vmem:[#allocation4 + $0x8] sm:$0xff]
      %v643 = vld [vmem:[#allocation4 + $0x10] sm:$0xff]
      %v644 = vld [vmem:[#allocation4 + $0x18] sm:$0xff]
      %646 = vset.pattern.permute.xlu0 0
      %647 = vperm.xlu0 %646, %v573
      %v648 = vpop.permute.xlu0 %647
      %651 = vset.pattern.permute.xlu0 0
      %652 = vperm.xlu0 %651, %v575
      %v653 = vpop.permute.xlu0 %652
      %656 = vset.pattern.permute.xlu0 0
      %657 = vperm.xlu0 %656, %v577
      %v658 = vpop.permute.xlu0 %657
      %661 = vset.pattern.permute.xlu0 0
      %662 = vperm.xlu0 %661, %v579
      %v663 = vpop.permute.xlu0 %662
      %v665 = vmul.f32 %v648, %v641
      %v666 = vmul.f32 %v653, %v642
      %v667 = vmul.f32 %v658, %v643
      %v668 = vmul.f32 %v663, %v644
      %v669 = vpack.c.bf16 %v605, %v605
      %v670 = vpack.c.bf16 %v607, %v607
      %v671 = vpack.c.bf16 %v609, %v609
      %v672 = vpack.c.bf16 %v611, %v611
      %v674 = vsel %vm363, %v669, 0
      %vm676 = vcmask 1043456
      %v678 = vsel %vm676, %v359, 0
      %680 = vmatprep.subr.bf16.mxu0 0
      %681 = vmatpush1.bf16.msra.mxu0 %v678
      %682 = vmatprep.subr.bf16.mxu0 0
      %683 = vmatpush1.bf16.msra.mxu0 0
      %684 = vmatprep.subr.bf16.mxu0 0
      %685 = vmatpush1.bf16.msra.mxu0 0
      %686 = vmatprep.subr.bf16.mxu0 0
      %687 = vmatpush1.bf16.msra.mxu0 0
      %688 = vmatprep.subr.bf16.mxu0 0
      %689 = vmatpush1.bf16.msra.mxu0 0
      %690 = vmatprep.subr.bf16.mxu0 0
      %691 = vmatpush1.bf16.msra.mxu0 0
      %692 = vmatprep.subr.bf16.mxu0 0
      %693 = vmatpush1.bf16.msra.mxu0 0
      %694 = vmatprep.subr.bf16.mxu0 0
      %695 = vmatpush1.bf16.msra.mxu0 0
      %696 = vmatprep.subr.bf16.mxu0 0
      %697 = vmatpush1.bf16.msra.mxu0 0
      %698 = vmatprep.subr.bf16.mxu0 0
      %699 = vmatpush1.bf16.msra.mxu0 0
      %700 = vmatprep.subr.bf16.mxu0 0
      %701 = vmatpush1.bf16.msra.mxu0 0
      %702 = vmatprep.subr.bf16.mxu0 0
      %703 = vmatpush1.bf16.msra.mxu0 0
      %704 = vmatprep.subr.bf16.mxu0 0
      %705 = vmatpush1.bf16.msra.mxu0 0
      %706 = vmatprep.subr.bf16.mxu0 0
      %707 = vmatpush1.bf16.msra.mxu0 0
      %708 = vmatprep.subr.bf16.mxu0 0
      %709 = vmatpush1.bf16.msra.mxu0 0
      %710 = vmatprep.subr.bf16.mxu0 0
      %711 = vmatpush1.bf16.msra.mxu0 0
      %712 = vmatprep.mubr.bf16.mxu0 0
      %713 = vmatmul.mubr.bf16.gmra.mrb[0].mxu0 %v674
      %v714 = vpop.f32.mrb[0].mxu0
      %v715 = vadd.f32 0.0, %v714
      %v716 = vpop.f32.mrb[0].mxu0
      %v717 = vpop.f32.mrb[0].mxu0
      %v718 = vpop.f32.mrb[0].mxu0
      %719 = vdwg.mxu0
      %v721 = vsel %vm363, %v670, 0
      %v724 = vsel %vm676, %v360, 0
      %726 = vmatprep.subr.bf16.mxu0 0
      %727 = vmatpush1.bf16.msra.mxu0 %v724
      %728 = vmatprep.subr.bf16.mxu0 0
      %729 = vmatpush1.bf16.msra.mxu0 0
      %730 = vmatprep.subr.bf16.mxu0 0
      %731 = vmatpush1.bf16.msra.mxu0 0
      %732 = vmatprep.subr.bf16.mxu0 0
      %733 = vmatpush1.bf16.msra.mxu0 0
      %734 = vmatprep.subr.bf16.mxu0 0
      %735 = vmatpush1.bf16.msra.mxu0 0
      %736 = vmatprep.subr.bf16.mxu0 0
      %737 = vmatpush1.bf16.msra.mxu0 0
      %738 = vmatprep.subr.bf16.mxu0 0
      %739 = vmatpush1.bf16.msra.mxu0 0
      %740 = vmatprep.subr.bf16.mxu0 0
      %741 = vmatpush1.bf16.msra.mxu0 0
      %742 = vmatprep.subr.bf16.mxu0 0
      %743 = vmatpush1.bf16.msra.mxu0 0
      %744 = vmatprep.subr.bf16.mxu0 0
      %745 = vmatpush1.bf16.msra.mxu0 0
      %746 = vmatprep.subr.bf16.mxu0 0
      %747 = vmatpush1.bf16.msra.mxu0 0
      %748 = vmatprep.subr.bf16.mxu0 0
      %749 = vmatpush1.bf16.msra.mxu0 0
      %750 = vmatprep.subr.bf16.mxu0 0
      %751 = vmatpush1.bf16.msra.mxu0 0
      %752 = vmatprep.subr.bf16.mxu0 0
      %753 = vmatpush1.bf16.msra.mxu0 0
      %754 = vmatprep.subr.bf16.mxu0 0
      %755 = vmatpush1.bf16.msra.mxu0 0
      %756 = vmatprep.subr.bf16.mxu0 0
      %757 = vmatpush1.bf16.msra.mxu0 0
      %758 = vmatprep.mubr.bf16.mxu0 0
      %759 = vmatmul.mubr.bf16.gmra.mrb[0].mxu0 %v721
      %v760 = vpop.f32.mrb[0].mxu0
      %v761 = vadd.f32 0.0, %v760
      %v762 = vpop.f32.mrb[0].mxu0
      %v763 = vpop.f32.mrb[0].mxu0
      %v764 = vpop.f32.mrb[0].mxu0
      %765 = vdwg.mxu0
      %v767 = vsel %vm363, %v671, 0
      %v770 = vsel %vm676, %v361, 0
      %772 = vmatprep.subr.bf16.mxu0 0
      %773 = vmatpush1.bf16.msra.mxu0 %v770
      %774 = vmatprep.subr.bf16.mxu0 0
      %775 = vmatpush1.bf16.msra.mxu0 0
      %776 = vmatprep.subr.bf16.mxu0 0
      %777 = vmatpush1.bf16.msra.mxu0 0
      %778 = vmatprep.subr.bf16.mxu0 0
      %779 = vmatpush1.bf16.msra.mxu0 0
      %780 = vmatprep.subr.bf16.mxu0 0
      %781 = vmatpush1.bf16.msra.mxu0 0
      %782 = vmatprep.subr.bf16.mxu0 0
      %783 = vmatpush1.bf16.msra.mxu0 0
      %784 = vmatprep.subr.bf16.mxu0 0
      %785 = vmatpush1.bf16.msra.mxu0 0
      %786 = vmatprep.subr.bf16.mxu0 0
      %787 = vmatpush1.bf16.msra.mxu0 0
      %788 = vmatprep.subr.bf16.mxu0 0
      %789 = vmatpush1.bf16.msra.mxu0 0
      %790 = vmatprep.subr.bf16.mxu0 0
      %791 = vmatpush1.bf16.msra.mxu0 0
      %792 = vmatprep.subr.bf16.mxu0 0
      %793 = vmatpush1.bf16.msra.mxu0 0
      %794 = vmatprep.subr.bf16.mxu0 0
      %795 = vmatpush1.bf16.msra.mxu0 0
      %796 = vmatprep.subr.bf16.mxu0 0
      %797 = vmatpush1.bf16.msra.mxu0 0
      %798 = vmatprep.subr.bf16.mxu0 0
      %799 = vmatpush1.bf16.msra.mxu0 0
      %800 = vmatprep.subr.bf16.mxu0 0
      %801 = vmatpush1.bf16.msra.mxu0 0
      %802 = vmatprep.subr.bf16.mxu0 0
      %803 = vmatpush1.bf16.msra.mxu0 0
      %804 = vmatprep.mubr.bf16.mxu0 0
      %805 = vmatmul.mubr.bf16.gmra.mrb[0].mxu0 %v767
      %v806 = vpop.f32.mrb[0].mxu0
      %v807 = vadd.f32 0.0, %v806
      %v808 = vpop.f32.mrb[0].mxu0
      %v809 = vpop.f32.mrb[0].mxu0
      %v810 = vpop.f32.mrb[0].mxu0
      %811 = vdwg.mxu0
      %v813 = vsel %vm363, %v672, 0
      %v816 = vsel %vm676, %v362, 0
      %818 = vmatprep.subr.bf16.mxu0 0
      %819 = vmatpush1.bf16.msra.mxu0 %v816
      %820 = vmatprep.subr.bf16.mxu0 0
      %821 = vmatpush1.bf16.msra.mxu0 0
      %822 = vmatprep.subr.bf16.mxu0 0
      %823 = vmatpush1.bf16.msra.mxu0 0
      %824 = vmatprep.subr.bf16.mxu0 0
      %825 = vmatpush1.bf16.msra.mxu0 0
      %826 = vmatprep.subr.bf16.mxu0 0
      %827 = vmatpush1.bf16.msra.mxu0 0
      %828 = vmatprep.subr.bf16.mxu0 0
      %829 = vmatpush1.bf16.msra.mxu0 0
      %830 = vmatprep.subr.bf16.mxu0 0
      %831 = vmatpush1.bf16.msra.mxu0 0
      %832 = vmatprep.subr.bf16.mxu0 0
      %833 = vmatpush1.bf16.msra.mxu0 0
      %834 = vmatprep.subr.bf16.mxu0 0
      %835 = vmatpush1.bf16.msra.mxu0 0
      %836 = vmatprep.subr.bf16.mxu0 0
      %837 = vmatpush1.bf16.msra.mxu0 0
      %838 = vmatprep.subr.bf16.mxu0 0
      %839 = vmatpush1.bf16.msra.mxu0 0
      %840 = vmatprep.subr.bf16.mxu0 0
      %841 = vmatpush1.bf16.msra.mxu0 0
      %842 = vmatprep.subr.bf16.mxu0 0
      %843 = vmatpush1.bf16.msra.mxu0 0
      %844 = vmatprep.subr.bf16.mxu0 0
      %845 = vmatpush1.bf16.msra.mxu0 0
      %846 = vmatprep.subr.bf16.mxu0 0
      %847 = vmatpush1.bf16.msra.mxu0 0
      %848 = vmatprep.subr.bf16.mxu0 0
      %849 = vmatpush1.bf16.msra.mxu0 0
      %850 = vmatprep.mubr.bf16.mxu0 0
      %851 = vmatmul.mubr.bf16.gmra.mrb[0].mxu0 %v813
      %v852 = vpop.f32.mrb[0].mxu0
      %v853 = vadd.f32 0.0, %v852
      %v854 = vpop.f32.mrb[0].mxu0
      %v855 = vpop.f32.mrb[0].mxu0
      %v856 = vpop.f32.mrb[0].mxu0
      %857 = vdwg.mxu0
      %v858 = vadd.f32 %v665, %v715
      %v859 = vadd.f32 %v666, %v761
      %v860 = vadd.f32 %v667, %v807
      %v861 = vadd.f32 %v668, %v853
      %862 = vst.msk [vmem:[#allocation4] sm:$0xff] %vm363, %v858
      %863 = vst.msk [vmem:[#allocation4 + $0x8] sm:$0xff] %vm363, %v859
      %864 = vst.msk [vmem:[#allocation4 + $0x10] sm:$0xff] %vm363, %v860
      %865 = vst.msk [vmem:[#allocation4 + $0x18] sm:$0xff] %vm363, %v861
      %866 = vst.msk [vmem:[#allocation2] sm:$0xff] %vm636, %v564
      %867 = vst.msk [vmem:[#allocation2 + $0x8] sm:$0xff] %vm636, %v565
      %868 = vst.msk [vmem:[#allocation2 + $0x10] sm:$0xff] %vm636, %v566
      %869 = vst.msk [vmem:[#allocation2 + $0x18] sm:$0xff] %vm636, %v567
      // Predicated region
      $region37: #{gpt2_forward.8} parent=31 // pred_check
        %p870 = pneg %p333
      $region38: #{gpt2_forward.8} parent=31 // pred_check_branch
        %872 = sbr.rel (%p870) target = $region40
      $region39: #{gpt2_forward.8} parent=31 // pred_region
        %v873 = vld [vmem:[#allocation4] sm:$0xff]
        %v874 = vld [vmem:[#allocation4 + $0x8] sm:$0xff]
        %v875 = vld [vmem:[#allocation4 + $0x10] sm:$0xff]
        %v876 = vld [vmem:[#allocation4 + $0x18] sm:$0xff]
        %v877 = vld [vmem:[#allocation3] sm:$0xff]
        %v878 = vld [vmem:[#allocation3 + $0x8] sm:$0xff]
        %v879 = vld [vmem:[#allocation3 + $0x10] sm:$0xff]
        %v880 = vld [vmem:[#allocation3 + $0x18] sm:$0xff]
        %882 = vset.pattern.permute.xlu0 0
        %883 = vperm.xlu0 %882, %v877
        %v884 = vpop.permute.xlu0 %883
        %887 = vset.pattern.permute.xlu0 0
        %888 = vperm.xlu0 %887, %v878
        %v889 = vpop.permute.xlu0 %888
        %892 = vset.pattern.permute.xlu0 0
        %893 = vperm.xlu0 %892, %v879
        %v894 = vpop.permute.xlu0 %893
        %897 = vset.pattern.permute.xlu0 0
        %898 = vperm.xlu0 %897, %v880
        %v899 = vpop.permute.xlu0 %898
        %v901 = vrcp.pop %v884
        %v902 = vmul.f32 %v873, %v901
        %v903 = vrcp.pop %v889
        %v904 = vmul.f32 %v874, %v903
        %v905 = vrcp.pop %v894
        %v906 = vmul.f32 %v875, %v905
        %v907 = vrcp.pop %v899
        %v908 = vmul.f32 %v876, %v907
        %910 = vrot.lane.b32.xlu0 %v904, 8
        %v911 = vpop.permute.xlu0 %910
        %914 = vrot.lane.b32.xlu0 %v906, 16
        %v915 = vpop.permute.xlu0 %914
        %918 = vrot.lane.b32.xlu0 %v908, 24
        %v919 = vpop.permute.xlu0 %918
        %v921 = vsel %vm363, %v902, %v911
        %vm922 = vcmask 130048
        %v923 = vsel %vm922, %v921, %v915
        %vm924 = vcmask 195584
        %v925 = vsel %vm924, %v923, %v919
        %v926 = vpack.c.bf16 %v925, %v925
        %vm927 = vcmask 257024
        %928 = vst.msk [vmem:[%s331] sm:$0xf] %vm927, %v926
      $region40: #{gpt2_forward.8} parent=31 // pred_fallthru
        _
      %p929 = scmp.lt.s32.totalorder %s20, 1
      %s930 = scalar_select %p929, %s20, 1
      %p931 = scmp.lt.s32.totalorder %s22, 0
      %s932 = scalar_select %p931, %s22, 0
      %p933 = scmp.lt.s32.totalorder %s21, 0
      %s934 = scalar_select %p933, %s21, 0
      %s935 = sadd.s32 %s934, %s932
      %s936 = sadd.s32 %s935, %s930
      %s937 = smul.addr %s936, 4
      %s938 = scalar_lea.vmem %s3, %s937
      // Predicated region
      $region41: #{gpt2_forward.8} parent=31 // pred_check
        %p939 = pneg %p152
      $region42: #{gpt2_forward.8} parent=31 // pred_check_branch
        %941 = sbr.rel (%p939) target = $region44
      $region43: #{gpt2_forward.8} parent=31 // pred_region
        _
      $region44: #{gpt2_forward.8} parent=31 // pred_fallthru
        _
    $region32: #{gpt2_forward.8} parent=5 // pred_fallthru
      _
    %p942 = scmp.le.s32.totalorder 2, %s9
    // Predicated region
    $region45: #{gpt2_forward.8} parent=5 // pred_check
      %p943 = pneg %p942
    $region46: #{gpt2_forward.8} parent=5 // pred_check_branch
      %945 = sbr.rel (%p943) target = $region48
    $region47: #{gpt2_forward.8} parent=5 // pred_region
      %s946 = ssub.s32 %s9, 2
      // Predicated region
      $region49: #{gpt2_forward.8} parent=47 // pred_check
        %p947 = pneg %p158
      $region50: #{gpt2_forward.8} parent=47 // pred_check_branch
        %949 = sbr.rel (%p947) target = $region52
      $region51: #{gpt2_forward.8} parent=47 // pred_region
        %p950 = scmp.lt.s32.totalorder %s24, 1
        %s951 = scalar_select %p950, %s24, 1
        %p952 = scmp.lt.s32.totalorder %s26, 0
        %s953 = scalar_select %p952, %s26, 0
        %p954 = scmp.lt.s32.totalorder %s25, 0
        %s955 = scalar_select %p954, %s25, 0
        %s956 = sadd.s32 %s955, %s953
        %s957 = sadd.s32 %s956, %s951
        %s958 = smul.addr %s957, 4
        %s959 = scalar_lea.vmem %s3, %s958
      $region52: #{gpt2_forward.8} parent=47 // pred_fallthru
        _
    $region48: #{gpt2_forward.8} parent=5 // pred_fallthru
      _
  $region6: #{gpt2_forward.8} parent=0 // loop_footer
    %s13 = sadd.s32 1, %s9
  $region7: #{gpt2_forward.8} parent=0 // loop_footer_branch
    %8 = sbr.rel target = $region3
  $region8: #{gpt2_forward.8} parent=0 // loop_exit
    _

</llo_original>
